<compile_context>
chip_gen: v6e
topology: v6e:2x2x1
jax: 0.10.0
libtpu: 0.0.40
codegen_flags: <defaults>
</compile_context>

<pallas_src>
from functools import partial

import jax
import jax.numpy as jnp
from jax.experimental import pallas as pl
from jax.experimental.pallas import tpu as pltpu


CPAD = 128  # lane-dense padded output-channel count


# ----------------------------------------------------------------------------
# Pallas kernel: 3x3 "same" conv (+ bias, optional ReLU) for one batch element
# per grid step.  im2col into VMEM scratch -> one bf16 MXU matmul, f32 acc.
# ----------------------------------------------------------------------------
def _conv3x3_kernel(x_ref, w_ref, b_ref, o_ref, xpad_ref, col_ref,
                    *, cin, apply_relu):
    # x_ref   : (1, H, W, Cfull)   input tile; only the first `cin` channels
    #                              are real (Cfull may be a padded 128).
    # w_ref   : (9*cin, CPAD)      packed bf16 weights, Cout zero-padded.
    # b_ref   : (1, CPAD)          f32 bias, zero-padded.
    # o_ref   : (1, H, W, CPAD)    lane-dense output tile.
    # xpad_ref: (H+2, W+2, cin)    bf16 scratch: zero-halo padded input.
    # col_ref : (H*W, 9*cin)       bf16 scratch: im2col patch matrix.
    _, H, W, _ = x_ref.shape
    cpad = w_ref.shape[-1]

    # --- in-kernel halo padding (no HBM round trip for jnp.pad) -------------
    xpad_ref[...] = jnp.zeros_like(xpad_ref)
    xpad_ref[1:H + 1, 1:W + 1, :] = (
        x_ref[0, :, :, :cin].astype(xpad_ref.dtype))

    # --- im2col: single pass into VMEM scratch, K = 9*cin on the lane axis --
    for t in range(9):
        kh, kw = divmod(t, 3)
        patch = xpad_ref[kh:kh + H, kw:kw + W, :].reshape(H * W, cin)
        col_ref[:, t * cin:(t + 1) * cin] = patch

    # --- one MXU matmul: (H*W, 9*cin) @ (9*cin, CPAD), bf16 in / f32 acc ----
    acc = jnp.dot(col_ref[...], w_ref[...],
                  preferred_element_type=jnp.float32)
    acc = acc + b_ref[...]                       # (1, CPAD) broadcast
    if apply_relu:
        acc = jnp.maximum(acc, 0.0)

    # lane-dense store: last dim is the full 128-lane padded channel axis
    o_ref[0] = acc.reshape(H, W, cpad).astype(o_ref.dtype)


def conv3x3_same(x_nhwc, w_hwio, b, *, cin, apply_relu, out_dtype):
    """3x3 conv, stride 1, pad 1 (+bias, optional ReLU) via Pallas.

    x_nhwc : (N, H, W, Cfull) with the real input in channels [:cin]
             (Cfull == cin for the first layer, CPAD for later layers).
    Returns (N, H, W, CPAD) with the real output in channels [:Cout].
    """
    N, H, W, Cfull = x_nhwc.shape
    kh, kw, wcin, cout = w_hwio.shape
    assert kh == 3 and kw == 3 and wcin == cin and cout <= CPAD
    K = 9 * cin

    # Pack weights (3,3,cin,cout) -> (9*cin, CPAD), row index = (kh*3+kw)*cin+c
    # matching the im2col column layout; zero-pad Cout to 128 lanes; bf16.
    w_flat = w_hwio.reshape(K, cout).astype(jnp.bfloat16)
    w_packed = jnp.zeros((K, CPAD), jnp.bfloat16).at[:, :cout].set(w_flat)
    b_packed = jnp.zeros((1, CPAD), jnp.float32).at[:, :cout].set(
        b.astype(jnp.float32))

    kernel = partial(_conv3x3_kernel, cin=cin, apply_relu=apply_relu)
    return pl.pallas_call(
        kernel,
        out_shape=jax.ShapeDtypeStruct((N, H, W, CPAD), out_dtype),
        grid_spec=pltpu.PrefetchScalarGridSpec(
            num_scalar_prefetch=0,
            grid=(N,),
            in_specs=[
                pl.BlockSpec((1, H, W, Cfull), lambda n: (n, 0, 0, 0)),
                # constant index_map -> weights/bias stay resident in VMEM
                pl.BlockSpec((K, CPAD), lambda n: (0, 0)),
                pl.BlockSpec((1, CPAD), lambda n: (0, 0)),
            ],
            out_specs=pl.BlockSpec((1, H, W, CPAD), lambda n: (n, 0, 0, 0)),
            scratch_shapes=[
                pltpu.VMEM((H + 2, W + 2, cin), jnp.bfloat16),   # padded input
                pltpu.VMEM((H * W, K), jnp.bfloat16),            # im2col
            ],
        ),
        compiler_params=pltpu.CompilerParams(
            dimension_semantics=("parallel",)),
    )(x_nhwc, w_packed, b_packed)


# ----------------------------------------------------------------------------
# VfModel: synthetic realization of
#   feature_model = Sequential(*list(pretrained.features.children())
#                              [:conv_layer[layer_name] + 1])
# The "pretrained" features here are [Conv2d(3,16,3,p=1), ReLU(),
# Conv2d(16,32,3,p=1), ReLU()] and we slice up to the layer index.
# ----------------------------------------------------------------------------
conv_layer = {"conv1_1": 0, "conv1_2": 2}


def make_pretrained_features(key):
    """Deterministic synthetic VGG-like features list: (kind, params)."""
    k1, k2, k3, k4 = jax.random.split(key, 4)
    layers = [
        ("conv", {"w": 0.1 * jax.random.normal(k1, (3, 3, 3, 16), jnp.float32),
                  "b": 0.01 * jax.random.normal(k2, (16,), jnp.float32)}),
        ("relu", None),
        ("conv", {"w": 0.1 * jax.random.normal(k3, (3, 3, 16, 32), jnp.float32),
                  "b": 0.01 * jax.random.normal(k4, (32,), jnp.float32)}),
        ("relu", None),
    ]
    return layers


class VfModel:
    def __init__(self, pretrained_features, layer_name):
        self.layers = pretrained_features[: conv_layer[layer_name] + 1]

    def __call__(self, x_nchw):
        # NCHW -> NHWC for the kernel
        x = jnp.transpose(x_nchw, (0, 2, 3, 1))
        c_actual = x.shape[-1]
        i, n_layers = 0, len(self.layers)
        while i < n_layers:
            kind, p = self.layers[i]
            if kind == "conv":
                # fuse a following ReLU (if present and still within the slice)
                fuse_relu = (i + 1 < n_layers
                             and self.layers[i + 1][0] == "relu")
                step = 2 if fuse_relu else 1
                is_last = (i + step) >= n_layers
                x = conv3x3_same(
                    x, p["w"], p["b"], cin=c_actual, apply_relu=fuse_relu,
                    out_dtype=jnp.float32 if is_last else jnp.bfloat16)
                c_actual = p["w"].shape[-1]
                i += step
            else:  # standalone relu (not preceded by a conv in this slice)
                x = jnp.maximum(x, 0.0)
                i += 1
        # drop the lane-padding channels, back to NCHW / f32 (PyTorch layout)
        x = x[..., :c_actual].astype(jnp.float32)
        return jnp.transpose(x, (0, 3, 1, 2))


# ----------------------------------------------------------------------------
if __name__ == "__main__":
    key = jax.random.PRNGKey(0)
    kx, kp = jax.random.split(key)

    # small shapes consistent with the module: batch=2, 3-channel 16x16 image
    x = jax.random.normal(kx, (2, 3, 16, 16), jnp.float32)   # NCHW

    features = make_pretrained_features(kp)
    model = VfModel(features, "conv1_2")   # Conv -> ReLU -> Conv (no final ReLU)

    out = jax.block_until_ready(model(x))

    # cross-check against XLA's native convolution (f32 reference; the Pallas
    # path uses bf16 MXU inputs with f32 accumulation, hence loose tolerance)
    def ref_forward(x_nchw):
        h = jnp.transpose(x_nchw, (0, 2, 3, 1))
        h = jax.lax.conv_general_dilated(
            h, features[0][1]["w"], (1, 1), "SAME",
            dimension_numbers=("NHWC", "HWIO", "NHWC")) + features[0][1]["b"]
        h = jnp.maximum(h, 0.0)
        h = jax.lax.conv_general_dilated(
            h, features[2][1]["w"], (1, 1), "SAME",
            dimension_numbers=("NHWC", "HWIO", "NHWC")) + features[2][1]["b"]
        return jnp.transpose(h, (0, 3, 1, 2))

    ref = jax.block_until_ready(ref_forward(x))
    assert out.shape == (2, 32, 16, 16), out.shape
    max_err = float(jnp.max(jnp.abs(out - ref)))
    assert jnp.allclose(out, ref, atol=5e-2, rtol=5e-2), f"mismatch: {max_err}"

    print("KERNEL_OK")
</pallas_src>

<mosaic_0001>
module attributes {stable_mosaic.version = 11 : i64} {
  func.func @_conv3x3_kernel(%arg0: i32, %arg1: memref<1x16x16x3xf32, #tpu.memory_space<vmem>>, %arg2: memref<27x128xbf16, #tpu.memory_space<vmem>>, %arg3: memref<1x128xf32, #tpu.memory_space<vmem>>, %arg4: memref<1x16x16x128xbf16, #tpu.memory_space<vmem>>, %arg5: memref<18x18x3xbf16, #tpu.memory_space<vmem>>, %arg6: memref<256x27xbf16, #tpu.memory_space<vmem>>) attributes {dimension_semantics = [#tpu.dimension_semantics<parallel>], iteration_bounds = array<i64: 2>, scalar_prefetch = 0 : i64, scratch_operands = 2 : i64, tpu.core_type = #tpu.core_type<tc>, window_params = [{transform_indices = @transform_0, window_bounds = array<i64: 1, 16, 16, 3>}, {pipeline_mode = #tpu.pipeline_mode<synchronous>, transform_indices = @transform_1, window_bounds = array<i64: 27, 128>}, {pipeline_mode = #tpu.pipeline_mode<synchronous>, transform_indices = @transform_2, window_bounds = array<i64: 1, 128>}, {transform_indices = @transform_3, window_bounds = array<i64: 1, 16, 16, 128>}]} {
    %cst = arith.constant 0.000000e+00 : bf16
    %0 = vector.broadcast %cst : bf16 to vector<18x18x3xbf16>
    %c0 = arith.constant 0 : index
    %c0_0 = arith.constant 0 : index
    %c0_1 = arith.constant 0 : index
    %1 = vector.load %arg5[%c0, %c0_0, %c0_1] : memref<18x18x3xbf16, #tpu.memory_space<vmem>>, vector<18x18x3xbf16>
    tpu.vector_store %arg5[%c0, %c0_0, %c0_1], %0 {strides = array<i32>} : memref<18x18x3xbf16, #tpu.memory_space<vmem>>, vector<18x18x3xbf16>,
    %c0_2 = arith.constant 0 : index
    %c0_3 = arith.constant 0 : index
    %c0_4 = arith.constant 0 : index
    %c0_5 = arith.constant 0 : index
    %2 = vector.load %arg1[%c0_2, %c0_3, %c0_4, %c0_5] : memref<1x16x16x3xf32, #tpu.memory_space<vmem>>, vector<1x16x16x3xf32>
    %3 = vector.shape_cast %2 : vector<1x16x16x3xf32> to vector<16x16x3xf32>
    %4 = arith.truncf %3 : vector<16x16x3xf32> to vector<16x16x3xbf16>
    %c1 = arith.constant 1 : index
    %c1_6 = arith.constant 1 : index
    %c0_7 = arith.constant 0 : index
    %5 = vector.load %arg5[%c1, %c1_6, %c0_7] : memref<18x18x3xbf16, #tpu.memory_space<vmem>>, vector<16x16x3xbf16>
    tpu.vector_store %arg5[%c1, %c1_6, %c0_7], %4 {strides = array<i32>} : memref<18x18x3xbf16, #tpu.memory_space<vmem>>, vector<16x16x3xbf16>,
    %c0_8 = arith.constant 0 : index
    %c0_9 = arith.constant 0 : index
    %c0_10 = arith.constant 0 : index
    %6 = vector.load %arg5[%c0_8, %c0_9, %c0_10] : memref<18x18x3xbf16, #tpu.memory_space<vmem>>, vector<16x16x3xbf16>
    %7 = vector.shape_cast %6 : vector<16x16x3xbf16> to vector<256x3xbf16>
    %c0_11 = arith.constant 0 : index
    %c0_12 = arith.constant 0 : index
    %8 = vector.load %arg6[%c0_11, %c0_12] : memref<256x27xbf16, #tpu.memory_space<vmem>>, vector<256x3xbf16>
    tpu.vector_store %arg6[%c0_11, %c0_12], %7 {strides = array<i32>} : memref<256x27xbf16, #tpu.memory_space<vmem>>, vector<256x3xbf16>,
    %c0_13 = arith.constant 0 : index
    %c1_14 = arith.constant 1 : index
    %c0_15 = arith.constant 0 : index
    %9 = vector.load %arg5[%c0_13, %c1_14, %c0_15] : memref<18x18x3xbf16, #tpu.memory_space<vmem>>, vector<16x16x3xbf16>
    %10 = vector.shape_cast %9 : vector<16x16x3xbf16> to vector<256x3xbf16>
    %c0_16 = arith.constant 0 : index
    %c3 = arith.constant 3 : index
    %11 = vector.load %arg6[%c0_16, %c3] : memref<256x27xbf16, #tpu.memory_space<vmem>>, vector<256x3xbf16>
    tpu.vector_store %arg6[%c0_16, %c3], %10 {strides = array<i32>} : memref<256x27xbf16, #tpu.memory_space<vmem>>, vector<256x3xbf16>,
    %c0_17 = arith.constant 0 : index
    %c2 = arith.constant 2 : index
    %c0_18 = arith.constant 0 : index
    %12 = vector.load %arg5[%c0_17, %c2, %c0_18] : memref<18x18x3xbf16, #tpu.memory_space<vmem>>, vector<16x16x3xbf16>
    %13 = vector.shape_cast %12 : vector<16x16x3xbf16> to vector<256x3xbf16>
    %c0_19 = arith.constant 0 : index
    %c6 = arith.constant 6 : index
    %14 = vector.load %arg6[%c0_19, %c6] : memref<256x27xbf16, #tpu.memory_space<vmem>>, vector<256x3xbf16>
    tpu.vector_store %arg6[%c0_19, %c6], %13 {strides = array<i32>} : memref<256x27xbf16, #tpu.memory_space<vmem>>, vector<256x3xbf16>,
    %c1_20 = arith.constant 1 : index
    %c0_21 = arith.constant 0 : index
    %c0_22 = arith.constant 0 : index
    %15 = vector.load %arg5[%c1_20, %c0_21, %c0_22] : memref<18x18x3xbf16, #tpu.memory_space<vmem>>, vector<16x16x3xbf16>
    %16 = vector.shape_cast %15 : vector<16x16x3xbf16> to vector<256x3xbf16>
    %c0_23 = arith.constant 0 : index
    %c9 = arith.constant 9 : index
    %17 = vector.load %arg6[%c0_23, %c9] : memref<256x27xbf16, #tpu.memory_space<vmem>>, vector<256x3xbf16>
    tpu.vector_store %arg6[%c0_23, %c9], %16 {strides = array<i32>} : memref<256x27xbf16, #tpu.memory_space<vmem>>, vector<256x3xbf16>,
    %c1_24 = arith.constant 1 : index
    %c1_25 = arith.constant 1 : index
    %c0_26 = arith.constant 0 : index
    %18 = vector.load %arg5[%c1_24, %c1_25, %c0_26] : memref<18x18x3xbf16, #tpu.memory_space<vmem>>, vector<16x16x3xbf16>
    %19 = vector.shape_cast %18 : vector<16x16x3xbf16> to vector<256x3xbf16>
    %c0_27 = arith.constant 0 : index
    %c12 = arith.constant 12 : index
    %20 = vector.load %arg6[%c0_27, %c12] : memref<256x27xbf16, #tpu.memory_space<vmem>>, vector<256x3xbf16>
    tpu.vector_store %arg6[%c0_27, %c12], %19 {strides = array<i32>} : memref<256x27xbf16, #tpu.memory_space<vmem>>, vector<256x3xbf16>,
    %c1_28 = arith.constant 1 : index
    %c2_29 = arith.constant 2 : index
    %c0_30 = arith.constant 0 : index
    %21 = vector.load %arg5[%c1_28, %c2_29, %c0_30] : memref<18x18x3xbf16, #tpu.memory_space<vmem>>, vector<16x16x3xbf16>
    %22 = vector.shape_cast %21 : vector<16x16x3xbf16> to vector<256x3xbf16>
    %c0_31 = arith.constant 0 : index
    %c15 = arith.constant 15 : index
    %23 = vector.load %arg6[%c0_31, %c15] : memref<256x27xbf16, #tpu.memory_space<vmem>>, vector<256x3xbf16>
    tpu.vector_store %arg6[%c0_31, %c15], %22 {strides = array<i32>} : memref<256x27xbf16, #tpu.memory_space<vmem>>, vector<256x3xbf16>,
    %c2_32 = arith.constant 2 : index
    %c0_33 = arith.constant 0 : index
    %c0_34 = arith.constant 0 : index
    %24 = vector.load %arg5[%c2_32, %c0_33, %c0_34] : memref<18x18x3xbf16, #tpu.memory_space<vmem>>, vector<16x16x3xbf16>
    %25 = vector.shape_cast %24 : vector<16x16x3xbf16> to vector<256x3xbf16>
    %c0_35 = arith.constant 0 : index
    %c18 = arith.constant 18 : index
    %26 = vector.load %arg6[%c0_35, %c18] : memref<256x27xbf16, #tpu.memory_space<vmem>>, vector<256x3xbf16>
    tpu.vector_store %arg6[%c0_35, %c18], %25 {strides = array<i32>} : memref<256x27xbf16, #tpu.memory_space<vmem>>, vector<256x3xbf16>,
    %c2_36 = arith.constant 2 : index
    %c1_37 = arith.constant 1 : index
    %c0_38 = arith.constant 0 : index
    %27 = vector.load %arg5[%c2_36, %c1_37, %c0_38] : memref<18x18x3xbf16, #tpu.memory_space<vmem>>, vector<16x16x3xbf16>
    %28 = vector.shape_cast %27 : vector<16x16x3xbf16> to vector<256x3xbf16>
    %c0_39 = arith.constant 0 : index
    %c21 = arith.constant 21 : index
    %29 = vector.load %arg6[%c0_39, %c21] : memref<256x27xbf16, #tpu.memory_space<vmem>>, vector<256x3xbf16>
    tpu.vector_store %arg6[%c0_39, %c21], %28 {strides = array<i32>} : memref<256x27xbf16, #tpu.memory_space<vmem>>, vector<256x3xbf16>,
    %c2_40 = arith.constant 2 : index
    %c2_41 = arith.constant 2 : index
    %c0_42 = arith.constant 0 : index
    %30 = vector.load %arg5[%c2_40, %c2_41, %c0_42] : memref<18x18x3xbf16, #tpu.memory_space<vmem>>, vector<16x16x3xbf16>
    %31 = vector.shape_cast %30 : vector<16x16x3xbf16> to vector<256x3xbf16>
    %c0_43 = arith.constant 0 : index
    %c24 = arith.constant 24 : index
    %32 = vector.load %arg6[%c0_43, %c24] : memref<256x27xbf16, #tpu.memory_space<vmem>>, vector<256x3xbf16>
    tpu.vector_store %arg6[%c0_43, %c24], %31 {strides = array<i32>} : memref<256x27xbf16, #tpu.memory_space<vmem>>, vector<256x3xbf16>,
    %c0_44 = arith.constant 0 : index
    %c0_45 = arith.constant 0 : index
    %33 = vector.load %arg6[%c0_44, %c0_45] : memref<256x27xbf16, #tpu.memory_space<vmem>>, vector<256x27xbf16>
    %c0_46 = arith.constant 0 : index
    %c0_47 = arith.constant 0 : index
    %34 = vector.load %arg2[%c0_46, %c0_47] : memref<27x128xbf16, #tpu.memory_space<vmem>>, vector<27x128xbf16>
    %cst_48 = arith.constant dense<0.000000e+00> : vector<256x128xf32>
    %35 = tpu.matmul %33, %34, %cst_48 {dimension_numbers = #tpu.dot_dimension_numbers<[1], [0], [0], [1], [0, 0, 1, 1], [], []>} : vector<256x27xbf16>, vector<27x128xbf16>, vector<256x128xf32> -> vector<256x128xf32>
    %c0_49 = arith.constant 0 : index
    %c0_50 = arith.constant 0 : index
    %36 = vector.load %arg3[%c0_49, %c0_50] : memref<1x128xf32, #tpu.memory_space<vmem>>, vector<1x128xf32>
    %37 = vector.broadcast %36 : vector<1x128xf32> to vector<256x128xf32>
    %38 = arith.addf %35, %37 : vector<256x128xf32>
    %cst_51 = arith.constant 0.000000e+00 : f32
    %39 = vector.broadcast %cst_51 : f32 to vector<256x128xf32>
    %40 = arith.maximumf %38, %39 : vector<256x128xf32>
    %41 = vector.shape_cast %40 : vector<256x128xf32> to vector<16x16x128xf32>
    %42 = arith.truncf %41 : vector<16x16x128xf32> to vector<16x16x128xbf16>
    %c0_52 = arith.constant 0 : index
    %c0_53 = arith.constant 0 : index
    %c0_54 = arith.constant 0 : index
    %c0_55 = arith.constant 0 : index
    %43 = vector.load %arg4[%c0_52, %c0_53, %c0_54, %c0_55] : memref<1x16x16x128xbf16, #tpu.memory_space<vmem>>, vector<1x16x16x128xbf16>
    %44 = vector.shape_cast %43 : vector<1x16x16x128xbf16> to vector<16x16x128xbf16>
    %45 = vector.shape_cast %42 : vector<16x16x128xbf16> to vector<1x16x16x128xbf16>
    tpu.vector_store %arg4[%c0_52, %c0_53, %c0_54, %c0_55], %45 {strides = array<i32>} : memref<1x16x16x128xbf16, #tpu.memory_space<vmem>>, vector<1x16x16x128xbf16>,
    return
  }
  func.func @transform_0(%arg0: i32) -> (i32, i32, i32, i32) {
    %c0_i32 = arith.constant 0 : i32
    %c0_i32_0 = arith.constant 0 : i32
    %c0_i32_1 = arith.constant 0 : i32
    %c0_i32_2 = arith.constant 0 : i32
    return %arg0, %c0_i32, %c0_i32_0, %c0_i32_1 : i32, i32, i32, i32
  }
  func.func @transform_1(%arg0: i32) -> (i32, i32) {
    %c0_i32 = arith.constant 0 : i32
    %c0_i32_0 = arith.constant 0 : i32
    %c0_i32_1 = arith.constant 0 : i32
    return %c0_i32, %c0_i32_0 : i32, i32
  }
  func.func @transform_2(%arg0: i32) -> (i32, i32) {
    %c0_i32 = arith.constant 0 : i32
    %c0_i32_0 = arith.constant 0 : i32
    %c0_i32_1 = arith.constant 0 : i32
    return %c0_i32, %c0_i32_0 : i32, i32
  }
  func.func @transform_3(%arg0: i32) -> (i32, i32, i32, i32) {
    %c0_i32 = arith.constant 0 : i32
    %c0_i32_0 = arith.constant 0 : i32
    %c0_i32_1 = arith.constant 0 : i32
    %c0_i32_2 = arith.constant 0 : i32
    return %arg0, %c0_i32, %c0_i32_0, %c0_i32_1 : i32, i32, i32, i32
  }
}

</mosaic_0001>

<llo_original>
// kernel: tpu_custom_call.1
$region0: #{tpu_custom_call.1}
  #allocation0 [shape = 'u32[]', space=smem, size = 0x4, offset = 0x4, fixed_abs, tag = 'smem constant byte address 0x4 - core index']
  #allocation1 [shape = 'u32[144,128]{1,0:T(1,128)}', space=vmem, size = 0x12000, scoped, tag = 'internal scratch']
  #allocation2 [shape = 'bf16[18,18,3]{2,1,0:T(8,128)(2,1)}', space=vmem, size = 0x1b000, scoped, tag = 'scratch operand']
  #allocation3 [shape = 'bf16[256,27]{1,0:T(8,128)(2,1)}', space=vmem, size = 0x10000, scoped, tag = 'scratch operand']
  %s0 = inlined_call_operand.vmem [shape: f32[2,16,16,3], index: 0, kind: input, shape index: {}]
  %s1 = inlined_call_operand.vmem [shape: bf16[27,128], index: 1, kind: input, shape index: {}]
  %s2 = inlined_call_operand.vmem [shape: f32[1,128], index: 2, kind: input, shape index: {}]
  %s3 = inlined_call_operand.hbm [shape: bf16[2,16,16,128], index: 3, kind: output, shape index: {}]
  %s4 = sld [smem:[#allocation0]]
  $region45: #{tpu_custom_call.1} parent=0
    _
  %s6 = ssub.s32 1, %s4
  %s7 = scalar_select 0, %s6, %s4
  $region1: #{tpu_custom_call.1} parent=0
    #allocation4 [shape = 'u8[131072]{0}', space=vmem, size = 0x20000, scoped, tag = 'output window, operand 0']
    #allocation5 [shape = 's32[2]{0}', space=sflag, size = 0x8, scoped, tag = 'scoped memory for tpu_custom_call.1']
    %8 = vsyncpa [#allocation5], 0
    %s9 = scalar_lea.sflag [#allocation5], 1
    %10 = vsyncpa %s9, 0
    loop: start=0, step=1, limit=4
    $region2: #{tpu_custom_call.1} parent=1 // loop_pre_header
      _
    $region3: #{tpu_custom_call.1} parent=1 // loop_header
      %s12 = sphi 0, %s16
      %p13 = scmp.ge.s32.totalorder %s12, 4
      %s22 = sphi 0, %s24
      %s25 = sphi 0, %s22
      %s26 = sphi 0, %s25
      %s42 = sphi 0, %s26
      %s46 = sphi 0, %s46
      %s48 = sphi 0, %s46
      %s49 = sphi 0, %s48
      %s63 = sphi 0, %s49
      %s67 = sphi 0, %s67
      %s69 = sphi 0, %s67
      %s70 = sphi 0, %s69
      %s84 = sphi 0, %s70
      %s90 = sphi 0, %s92
      %s93 = sphi 0, %s90
      %s94 = sphi 0, %s93
      %s110 = sphi 0, %s94
    $region4: #{tpu_custom_call.1} parent=1 // loop_header_branch
      %15 = sbr.rel (%p13) target = $region8
    $region5: #{tpu_custom_call.1} parent=1 // loop_body
      %s17 = ssub.s32 %s12, 1
      %s18 = ssub.s32 %s12, 2
      %s19 = sadd.s32 %s12, 1
      %s20 = ssub.s32 %s12, %s19
      %p21 = scmp.eq.s32.totalorder %s20, 0
      %s23 = sadd.s32 %s22, 1
      %s24 = scalar_select %p21, %s22, %s23
      %p27 = pneg %p21
      %p28 = scmp.eq.s32.totalorder %s12, 1
      %p29 = por %p27, %p28
      %p30 = scmp.ne.s32.totalorder %s22, %s25
      %p31 = scmp.eq.s32.totalorder %s12, 0
      %p32 = por %p30, %p31
      %p33 = scmp.ne.s32.totalorder %s22, %s25
      %p34 = scmp.eq.s32.totalorder %s17, 1
      %p35 = por %p33, %p34
      %p36 = scmp.ne.s32.totalorder %s25, %s26
      %p37 = scmp.eq.s32.totalorder %s17, 0
      %p38 = por %p36, %p37
      %p39 = scmp.ne.s32.totalorder %s25, %s26
      %p40 = scmp.eq.s32.totalorder %s18, 1
      %p41 = por %p39, %p40
      %p43 = scmp.ne.s32.totalorder %s26, %s42
      %p44 = scmp.eq.s32.totalorder %s18, 0
      %p45 = por %p43, %p44
      %s47 = sadd.s32 %s46, 1
      %p50 = scmp.eq.s32.totalorder %s12, 1
      %p51 = scmp.ne.s32.totalorder %s46, %s48
      %p52 = scmp.eq.s32.totalorder %s12, 0
      %p53 = por %p51, %p52
      %p54 = scmp.ne.s32.totalorder %s46, %s48
      %p55 = scmp.eq.s32.totalorder %s17, 1
      %p56 = por %p54, %p55
      %p57 = scmp.ne.s32.totalorder %s48, %s49
      %p58 = scmp.eq.s32.totalorder %s17, 0
      %p59 = por %p57, %p58
      %p60 = scmp.ne.s32.totalorder %s48, %s49
      %p61 = scmp.eq.s32.totalorder %s18, 1
      %p62 = por %p60, %p61
      %p64 = scmp.ne.s32.totalorder %s49, %s63
      %p65 = scmp.eq.s32.totalorder %s18, 0
      %p66 = por %p64, %p65
      %s68 = sadd.s32 %s67, 1
      %p71 = scmp.eq.s32.totalorder %s12, 1
      %p72 = scmp.ne.s32.totalorder %s67, %s69
      %p73 = scmp.eq.s32.totalorder %s12, 0
      %p74 = por %p72, %p73
      %p75 = scmp.ne.s32.totalorder %s67, %s69
      %p76 = scmp.eq.s32.totalorder %s17, 1
      %p77 = por %p75, %p76
      %p78 = scmp.ne.s32.totalorder %s69, %s70
      %p79 = scmp.eq.s32.totalorder %s17, 0
      %p80 = por %p78, %p79
      %p81 = scmp.ne.s32.totalorder %s69, %s70
      %p82 = scmp.eq.s32.totalorder %s18, 1
      %p83 = por %p81, %p82
      %p85 = scmp.ne.s32.totalorder %s70, %s84
      %p86 = scmp.eq.s32.totalorder %s18, 0
      %p87 = por %p85, %p86
      %s88 = ssub.s32 %s12, %s19
      %p89 = scmp.eq.s32.totalorder %s88, 0
      %s91 = sadd.s32 %s90, 1
      %s92 = scalar_select %p89, %s90, %s91
      %p95 = pneg %p89
      %p96 = scmp.eq.s32.totalorder %s12, 1
      %p97 = por %p95, %p96
      %p98 = scmp.ne.s32.totalorder %s90, %s93
      %p99 = scmp.eq.s32.totalorder %s12, 0
      %p100 = por %p98, %p99
      %p101 = scmp.ne.s32.totalorder %s90, %s93
      %p102 = scmp.eq.s32.totalorder %s17, 1
      %p103 = por %p101, %p102
      %p104 = scmp.ne.s32.totalorder %s93, %s94
      %p105 = scmp.eq.s32.totalorder %s17, 0
      %p106 = por %p104, %p105
      %p107 = scmp.ne.s32.totalorder %s93, %s94
      %p108 = scmp.eq.s32.totalorder %s18, 1
      %p109 = por %p107, %p108
      %p111 = scmp.ne.s32.totalorder %s94, %s110
      %p112 = scmp.eq.s32.totalorder %s18, 0
      %p113 = por %p111, %p112
      %p114 = scmp.le.s32.totalorder 1, %s12
      %p115 = scmp.lt.s32.totalorder %s12, 3
      %p116 = pnand %p114, %p115
      %p117 = pneg %p116
      // Predicated region
      $region9: #{tpu_custom_call.1} parent=5 // pred_check
        _
      $region10: #{tpu_custom_call.1} parent=5 // pred_check_branch
        %119 = sbr.rel (%p116) target = $region12
      $region11: #{tpu_custom_call.1} parent=5 // pred_region
        %s120 = ssub.s32 %s12, 1
        // Predicated region
        $region13: #{tpu_custom_call.1} parent=11 // pred_check
          %p121 = pneg %p59
        $region14: #{tpu_custom_call.1} parent=11 // pred_check_branch
          %123 = sbr.rel (%p121) target = $region16
        $region15: #{tpu_custom_call.1} parent=11 // pred_region
          _
        $region16: #{tpu_custom_call.1} parent=11 // pred_fallthru
          _
        // Predicated region
        $region17: #{tpu_custom_call.1} parent=11 // pred_check
          %p124 = pneg %p80
        $region18: #{tpu_custom_call.1} parent=11 // pred_check_branch
          %126 = sbr.rel (%p124) target = $region20
        $region19: #{tpu_custom_call.1} parent=11 // pred_region
          _
        $region20: #{tpu_custom_call.1} parent=11 // pred_fallthru
          _
      $region12: #{tpu_custom_call.1} parent=5 // pred_fallthru
        _
      %p127 = scmp.lt.s32.totalorder %s12, 2
      // Predicated region
      $region21: #{tpu_custom_call.1} parent=5 // pred_check
        %p128 = pneg %p127
      $region22: #{tpu_custom_call.1} parent=5 // pred_check_branch
        %130 = sbr.rel (%p128) target = $region24
      $region23: #{tpu_custom_call.1} parent=5 // pred_region
        // Predicated region
        $region25: #{tpu_custom_call.1} parent=23 // pred_check
          %p131 = pneg %p32
        $region26: #{tpu_custom_call.1} parent=23 // pred_check_branch
          %133 = sbr.rel (%p131) target = $region28
        $region27: #{tpu_custom_call.1} parent=23 // pred_region
          %p134 = scmp.lt.s32.totalorder %s12, 1
          %s135 = scalar_select %p134, %s12, 1
          %s136 = smul.addr %s135, 32
          %s137 = smul.addr %s136, 8
          %s138 = scalar_lea.vmem %s0, %s137
        $region28: #{tpu_custom_call.1} parent=23 // pred_fallthru
          _
      $region24: #{tpu_custom_call.1} parent=5 // pred_fallthru
        _
      %p139 = scmp.le.s32.totalorder 1, %s12
      %p140 = scmp.lt.s32.totalorder %s12, 3
      %p141 = pnand %p139, %p140
      %p142 = pneg %p141
      // Predicated region
      $region29: #{tpu_custom_call.1} parent=5 // pred_check
        _
      $region30: #{tpu_custom_call.1} parent=5 // pred_check_branch
        %144 = sbr.rel (%p141) target = $region32
      $region31: #{tpu_custom_call.1} parent=5 // pred_region
        %s145 = ssub.s32 %s12, 1
        %p146 = scmp.lt.s32.totalorder %s17, 1
        %s147 = scalar_select %p146, %s17, 1
        %s148 = smul.addr %s147, 32
        %s149 = smul.addr %s148, 8
        %s150 = scalar_lea.vmem %s0, %s149
        %p151 = pneg %p38
        %p152 = pneg %p35
        %p153 = pneg %p59
        %p154 = pneg %p56
        %p155 = pneg %p80
        %p156 = pneg %p77
        %p157 = pneg %p106
        %p158 = pneg %p103
        %s159 = sand.u32 %s93, 1
        %s160 = scalar_lea.sflag [#allocation5], %s159
        %s161 = sand.u32 %s93, 1
        %s162 = smul.addr %s161, 128
        %s163 = scalar_lea.vmem [#allocation4], %s162
        %p164 = scmp.lt.s32.totalorder %s17, 1
        %s165 = scalar_select %p164, %s17, 1
        %s166 = smul.addr %s165, 32
        %s167 = smul.addr %s166, 8
        %s168 = scalar_lea.vmem %s0, %s167
        %vm170 = vcmask 19456
        %171 = vst.msk [vmem:[#allocation2] sm:$0xf] %vm170, 0
        %172 = vst.msk [vmem:[#allocation2 + $0x4] sm:$0xf] %vm170, 0
        %vm173 = vcmask 16384
        %174 = vst.msk [vmem:[#allocation2 + $0x8] sm:$0x1] %vm173, 0
        %175 = vst.msk [vmem:[#allocation2 + $0xc] sm:$0xf] %vm170, 0
        %176 = vst.msk [vmem:[#allocation2 + $0x10] sm:$0xf] %vm170, 0
        %177 = vst.msk [vmem:[#allocation2 + $0x14] sm:$0x1] %vm173, 0
        %178 = vst.msk [vmem:[#allocation2 + $0x18] sm:$0xf] %vm170, 0
        %179 = vst.msk [vmem:[#allocation2 + $0x1c] sm:$0xf] %vm170, 0
        %180 = vst.msk [vmem:[#allocation2 + $0x20] sm:$0x1] %vm173, 0
        %181 = vst.msk [vmem:[#allocation2 + $0x24] sm:$0xf] %vm170, 0
        %182 = vst.msk [vmem:[#allocation2 + $0x28] sm:$0xf] %vm170, 0
        %183 = vst.msk [vmem:[#allocation2 + $0x2c] sm:$0x1] %vm173, 0
        %184 = vst.msk [vmem:[#allocation2 + $0x30] sm:$0xf] %vm170, 0
        %185 = vst.msk [vmem:[#allocation2 + $0x34] sm:$0xf] %vm170, 0
        %186 = vst.msk [vmem:[#allocation2 + $0x38] sm:$0x1] %vm173, 0
        %187 = vst.msk [vmem:[#allocation2 + $0x3c] sm:$0xf] %vm170, 0
        %188 = vst.msk [vmem:[#allocation2 + $0x40] sm:$0xf] %vm170, 0
        %189 = vst.msk [vmem:[#allocation2 + $0x44] sm:$0x1] %vm173, 0
        %190 = vst.msk [vmem:[#allocation2 + $0x48] sm:$0xf] %vm170, 0
        %191 = vst.msk [vmem:[#allocation2 + $0x4c] sm:$0xf] %vm170, 0
        %192 = vst.msk [vmem:[#allocation2 + $0x50] sm:$0x1] %vm173, 0
        %193 = vst.msk [vmem:[#allocation2 + $0x54] sm:$0xf] %vm170, 0
        %194 = vst.msk [vmem:[#allocation2 + $0x58] sm:$0xf] %vm170, 0
        %195 = vst.msk [vmem:[#allocation2 + $0x5c] sm:$0x1] %vm173, 0
        %196 = vst.msk [vmem:[#allocation2 + $0x60] sm:$0xf] %vm170, 0
        %197 = vst.msk [vmem:[#allocation2 + $0x64] sm:$0xf] %vm170, 0
        %198 = vst.msk [vmem:[#allocation2 + $0x68] sm:$0x1] %vm173, 0
        %199 = vst.msk [vmem:[#allocation2 + $0x6c] sm:$0xf] %vm170, 0
        %200 = vst.msk [vmem:[#allocation2 + $0x70] sm:$0xf] %vm170, 0
        %201 = vst.msk [vmem:[#allocation2 + $0x74] sm:$0x1] %vm173, 0
        %202 = vst.msk [vmem:[#allocation2 + $0x78] sm:$0xf] %vm170, 0
        %203 = vst.msk [vmem:[#allocation2 + $0x7c] sm:$0xf] %vm170, 0
        %204 = vst.msk [vmem:[#allocation2 + $0x80] sm:$0x1] %vm173, 0
        %205 = vst.msk [vmem:[#allocation2 + $0x84] sm:$0xf] %vm170, 0
        %206 = vst.msk [vmem:[#allocation2 + $0x88] sm:$0xf] %vm170, 0
        %207 = vst.msk [vmem:[#allocation2 + $0x8c] sm:$0x1] %vm173, 0
        %208 = vst.msk [vmem:[#allocation2 + $0x90] sm:$0xf] %vm170, 0
        %209 = vst.msk [vmem:[#allocation2 + $0x94] sm:$0xf] %vm170, 0
        %210 = vst.msk [vmem:[#allocation2 + $0x98] sm:$0x1] %vm173, 0
        %211 = vst.msk [vmem:[#allocation2 + $0x9c] sm:$0xf] %vm170, 0
        %212 = vst.msk [vmem:[#allocation2 + $0xa0] sm:$0xf] %vm170, 0
        %213 = vst.msk [vmem:[#allocation2 + $0xa4] sm:$0x1] %vm173, 0
        %214 = vst.msk [vmem:[#allocation2 + $0xa8] sm:$0xf] %vm170, 0
        %215 = vst.msk [vmem:[#allocation2 + $0xac] sm:$0xf] %vm170, 0
        %216 = vst.msk [vmem:[#allocation2 + $0xb0] sm:$0x1] %vm173, 0
        %217 = vst.msk [vmem:[#allocation2 + $0xb4] sm:$0xf] %vm170, 0
        %218 = vst.msk [vmem:[#allocation2 + $0xb8] sm:$0xf] %vm170, 0
        %219 = vst.msk [vmem:[#allocation2 + $0xbc] sm:$0x1] %vm173, 0
        %220 = vst.msk [vmem:[#allocation2 + $0xc0] sm:$0xf] %vm170, 0
        %221 = vst.msk [vmem:[#allocation2 + $0xc4] sm:$0xf] %vm170, 0
        %222 = vst.msk [vmem:[#allocation2 + $0xc8] sm:$0x1] %vm173, 0
        %223 = vst.msk [vmem:[#allocation2 + $0xcc] sm:$0xf] %vm170, 0
        %224 = vst.msk [vmem:[#allocation2 + $0xd0] sm:$0xf] %vm170, 0
        %225 = vst.msk [vmem:[#allocation2 + $0xd4] sm:$0x1] %vm173, 0
        %v226 = vld [vmem:[%s168] sm:$0xff]
        %v227 = vld [vmem:[%s168 + $0x8] sm:$0xff]
        %v228 = vld [vmem:[%s168 + $0x10] sm:$0xff]
        %v229 = vld [vmem:[%s168 + $0x18] sm:$0xff]
        %v230 = vld [vmem:[%s168 + $0x20] sm:$0xff]
        %v231 = vld [vmem:[%s168 + $0x28] sm:$0xff]
        %v232 = vld [vmem:[%s168 + $0x30] sm:$0xff]
        %v233 = vld [vmem:[%s168 + $0x38] sm:$0xff]
        %v234 = vld [vmem:[%s168 + $0x40] sm:$0xff]
        %v235 = vld [vmem:[%s168 + $0x48] sm:$0xff]
        %v236 = vld [vmem:[%s168 + $0x50] sm:$0xff]
        %v237 = vld [vmem:[%s168 + $0x58] sm:$0xff]
        %v238 = vld [vmem:[%s168 + $0x60] sm:$0xff]
        %v239 = vld [vmem:[%s168 + $0x68] sm:$0xff]
        %v240 = vld [vmem:[%s168 + $0x70] sm:$0xff]
        %v241 = vld [vmem:[%s168 + $0x78] sm:$0xff]
        %v242 = vld [vmem:[%s168 + $0x80] sm:$0xff]
        %v243 = vld [vmem:[%s168 + $0x88] sm:$0xff]
        %v244 = vld [vmem:[%s168 + $0x90] sm:$0xff]
        %v245 = vld [vmem:[%s168 + $0x98] sm:$0xff]
        %v246 = vld [vmem:[%s168 + $0xa0] sm:$0xff]
        %v247 = vld [vmem:[%s168 + $0xa8] sm:$0xff]
        %v248 = vld [vmem:[%s168 + $0xb0] sm:$0xff]
        %v249 = vld [vmem:[%s168 + $0xb8] sm:$0xff]
        %v250 = vld [vmem:[%s168 + $0xc0] sm:$0xff]
        %v251 = vld [vmem:[%s168 + $0xc8] sm:$0xff]
        %v252 = vld [vmem:[%s168 + $0xd0] sm:$0xff]
        %v253 = vld [vmem:[%s168 + $0xd8] sm:$0xff]
        %v254 = vld [vmem:[%s168 + $0xe0] sm:$0xff]
        %v255 = vld [vmem:[%s168 + $0xe8] sm:$0xff]
        %v256 = vld [vmem:[%s168 + $0xf0] sm:$0xff]
        %v257 = vld [vmem:[%s168 + $0xf8] sm:$0xff]
        %v258 = vpack.c.bf16 %v227, %v226
        %v259 = vpack.c.bf16 %v229, %v228
        %v260 = vpack.c.bf16 %v231, %v230
        %v261 = vpack.c.bf16 %v233, %v232
        %v262 = vpack.c.bf16 %v235, %v234
        %v263 = vpack.c.bf16 %v237, %v236
        %v264 = vpack.c.bf16 %v239, %v238
        %v265 = vpack.c.bf16 %v241, %v240
        %v266 = vpack.c.bf16 %v243, %v242
        %v267 = vpack.c.bf16 %v245, %v244
        %v268 = vpack.c.bf16 %v247, %v246
        %v269 = vpack.c.bf16 %v249, %v248
        %v270 = vpack.c.bf16 %v251, %v250
        %v271 = vpack.c.bf16 %v253, %v252
        %v272 = vpack.c.bf16 %v255, %v254
        %v273 = vpack.c.bf16 %v257, %v256
        %v290 = vunpack.c.l.b16 %v258
        %v291 = vunpack.c.h.b16 %v258
        %v292 = vunpack.c.l.b16 %v259
        %v293 = vunpack.c.h.b16 %v259
        %v294 = vunpack.c.l.b16 %v260
        %v295 = vunpack.c.h.b16 %v260
        %v296 = vunpack.c.l.b16 %v261
        %v297 = vunpack.c.h.b16 %v261
        %v298 = vunpack.c.l.b16 %v262
        %v299 = vunpack.c.h.b16 %v262
        %v300 = vunpack.c.l.b16 %v263
        %v301 = vunpack.c.h.b16 %v263
        %v302 = vunpack.c.l.b16 %v264
        %v303 = vunpack.c.h.b16 %v264
        %v304 = vunpack.c.l.b16 %v265
        %v305 = vunpack.c.h.b16 %v265
        %v306 = vunpack.c.l.b16 %v266
        %v307 = vunpack.c.h.b16 %v266
        %v308 = vunpack.c.l.b16 %v267
        %v309 = vunpack.c.h.b16 %v267
        %v310 = vunpack.c.l.b16 %v268
        %v311 = vunpack.c.h.b16 %v268
        %v312 = vunpack.c.l.b16 %v269
        %v313 = vunpack.c.h.b16 %v269
        %v314 = vunpack.c.l.b16 %v270
        %v315 = vunpack.c.h.b16 %v270
        %v316 = vunpack.c.l.b16 %v271
        %v317 = vunpack.c.h.b16 %v271
        %v318 = vunpack.c.l.b16 %v272
        %v319 = vunpack.c.h.b16 %v272
        %v320 = vunpack.c.l.b16 %v273
        %v321 = vunpack.c.h.b16 %v273
        %v322 = vpack.c.b16 %v290, %v290
        %v323 = vpack.c.b16 %v291, %v291
        %v324 = vpack.c.b16 %v292, %v292
        %v325 = vpack.c.b16 %v293, %v293
        %v326 = vpack.c.b16 %v294, %v294
        %v327 = vpack.c.b16 %v295, %v295
        %v328 = vpack.c.b16 %v296, %v296
        %v329 = vpack.c.b16 %v297, %v297
        %v330 = vpack.c.b16 %v298, %v298
        %v331 = vpack.c.b16 %v299, %v299
        %v332 = vpack.c.b16 %v300, %v300
        %v333 = vpack.c.b16 %v301, %v301
        %v334 = vpack.c.b16 %v302, %v302
        %v335 = vpack.c.b16 %v303, %v303
        %v336 = vpack.c.b16 %v304, %v304
        %v337 = vpack.c.b16 %v305, %v305
        %v338 = vpack.c.b16 %v306, %v306
        %v339 = vpack.c.b16 %v307, %v307
        %v340 = vpack.c.b16 %v308, %v308
        %v341 = vpack.c.b16 %v309, %v309
        %v342 = vpack.c.b16 %v310, %v310
        %v343 = vpack.c.b16 %v311, %v311
        %v344 = vpack.c.b16 %v312, %v312
        %v345 = vpack.c.b16 %v313, %v313
        %v346 = vpack.c.b16 %v314, %v314
        %v347 = vpack.c.b16 %v315, %v315
        %v348 = vpack.c.b16 %v316, %v316
        %v349 = vpack.c.b16 %v317, %v317
        %v350 = vpack.c.b16 %v318, %v318
        %v351 = vpack.c.b16 %v319, %v319
        %v352 = vpack.c.b16 %v320, %v320
        %v353 = vpack.c.b16 %v321, %v321
        %vm354 = vsmask.f32 256
        %vm355 = vsmask.f32 4368
        %vm356 = vmor %vm354, %vm355
        %v358 = vshrl.u32 %v322, 16
        %v360 = vrot.slane %v358, 7
        %v361 = vshll.u32 %v322, 16
        %v363 = vor.u32 %v360, %v361
        %v364 = vrot.slane %v360, 4
        %v366 = vshrl.u32 %v323, 16
        %v368 = vrot.slane %v366, 7
        %v369 = vshll.u32 %v323, 16
        %v371 = vor.u32 %v368, %v369
        %v372 = vsel %vm356, %v364, %v371
        %v373 = vrot.slane %v368, 4
        %v375 = vshrl.u32 %v324, 16
        %v377 = vrot.slane %v375, 7
        %v378 = vshll.u32 %v324, 16
        %v380 = vor.u32 %v377, %v378
        %v381 = vrot.slane %v377, 4
        %v383 = vshrl.u32 %v325, 16
        %v385 = vrot.slane %v383, 7
        %v386 = vshll.u32 %v325, 16
        %v388 = vor.u32 %v385, %v386
        %v389 = vsel %vm356, %v381, %v388
        %v390 = vrot.slane %v385, 4
        %v392 = vshrl.u32 %v326, 16
        %v394 = vrot.slane %v392, 7
        %v395 = vshll.u32 %v326, 16
        %v397 = vor.u32 %v394, %v395
        %v398 = vrot.slane %v394, 4
        %v400 = vshrl.u32 %v327, 16
        %v402 = vrot.slane %v400, 7
        %v403 = vshll.u32 %v327, 16
        %v405 = vor.u32 %v402, %v403
        %v406 = vsel %vm356, %v398, %v405
        %v407 = vrot.slane %v402, 4
        %v409 = vshrl.u32 %v328, 16
        %v411 = vrot.slane %v409, 7
        %v412 = vshll.u32 %v328, 16
        %v414 = vor.u32 %v411, %v412
        %v415 = vrot.slane %v411, 4
        %v417 = vshrl.u32 %v329, 16
        %v419 = vrot.slane %v417, 7
        %v420 = vshll.u32 %v329, 16
        %v422 = vor.u32 %v419, %v420
        %v423 = vsel %vm356, %v415, %v422
        %v424 = vrot.slane %v419, 4
        %v426 = vshrl.u32 %v330, 16
        %v428 = vrot.slane %v426, 7
        %v429 = vshll.u32 %v330, 16
        %v431 = vor.u32 %v428, %v429
        %v432 = vrot.slane %v428, 4
        %v434 = vshrl.u32 %v331, 16
        %v436 = vrot.slane %v434, 7
        %v437 = vshll.u32 %v331, 16
        %v439 = vor.u32 %v436, %v437
        %v440 = vsel %vm356, %v432, %v439
        %v441 = vrot.slane %v436, 4
        %v443 = vshrl.u32 %v332, 16
        %v445 = vrot.slane %v443, 7
        %v446 = vshll.u32 %v332, 16
        %v448 = vor.u32 %v445, %v446
        %v449 = vrot.slane %v445, 4
        %v451 = vshrl.u32 %v333, 16
        %v453 = vrot.slane %v451, 7
        %v454 = vshll.u32 %v333, 16
        %v456 = vor.u32 %v453, %v454
        %v457 = vsel %vm356, %v449, %v456
        %v458 = vrot.slane %v453, 4
        %v460 = vshrl.u32 %v334, 16
        %v462 = vrot.slane %v460, 7
        %v463 = vshll.u32 %v334, 16
        %v465 = vor.u32 %v462, %v463
        %v466 = vrot.slane %v462, 4
        %v468 = vshrl.u32 %v335, 16
        %v470 = vrot.slane %v468, 7
        %v471 = vshll.u32 %v335, 16
        %v473 = vor.u32 %v470, %v471
        %v474 = vsel %vm356, %v466, %v473
        %v475 = vrot.slane %v470, 4
        %v477 = vshrl.u32 %v336, 16
        %v479 = vrot.slane %v477, 7
        %v480 = vshll.u32 %v336, 16
        %v482 = vor.u32 %v479, %v480
        %v483 = vrot.slane %v479, 4
        %v485 = vshrl.u32 %v337, 16
        %v487 = vrot.slane %v485, 7
        %v488 = vshll.u32 %v337, 16
        %v490 = vor.u32 %v487, %v488
        %v491 = vsel %vm356, %v483, %v490
        %v492 = vrot.slane %v487, 4
        %v494 = vshrl.u32 %v338, 16
        %v496 = vrot.slane %v494, 7
        %v497 = vshll.u32 %v338, 16
        %v499 = vor.u32 %v496, %v497
        %v500 = vrot.slane %v496, 4
        %v502 = vshrl.u32 %v339, 16
        %v504 = vrot.slane %v502, 7
        %v505 = vshll.u32 %v339, 16
        %v507 = vor.u32 %v504, %v505
        %v508 = vsel %vm356, %v500, %v507
        %v509 = vrot.slane %v504, 4
        %v511 = vshrl.u32 %v340, 16
        %v513 = vrot.slane %v511, 7
        %v514 = vshll.u32 %v340, 16
        %v516 = vor.u32 %v513, %v514
        %v517 = vrot.slane %v513, 4
        %v519 = vshrl.u32 %v341, 16
        %v521 = vrot.slane %v519, 7
        %v522 = vshll.u32 %v341, 16
        %v524 = vor.u32 %v521, %v522
        %v525 = vsel %vm356, %v517, %v524
        %v526 = vrot.slane %v521, 4
        %v528 = vshrl.u32 %v342, 16
        %v530 = vrot.slane %v528, 7
        %v531 = vshll.u32 %v342, 16
        %v533 = vor.u32 %v530, %v531
        %v534 = vrot.slane %v530, 4
        %v536 = vshrl.u32 %v343, 16
        %v538 = vrot.slane %v536, 7
        %v539 = vshll.u32 %v343, 16
        %v541 = vor.u32 %v538, %v539
        %v542 = vsel %vm356, %v534, %v541
        %v543 = vrot.slane %v538, 4
        %v545 = vshrl.u32 %v344, 16
        %v547 = vrot.slane %v545, 7
        %v548 = vshll.u32 %v344, 16
        %v550 = vor.u32 %v547, %v548
        %v551 = vrot.slane %v547, 4
        %v553 = vshrl.u32 %v345, 16
        %v555 = vrot.slane %v553, 7
        %v556 = vshll.u32 %v345, 16
        %v558 = vor.u32 %v555, %v556
        %v559 = vsel %vm356, %v551, %v558
        %v560 = vrot.slane %v555, 4
        %v562 = vshrl.u32 %v346, 16
        %v564 = vrot.slane %v562, 7
        %v565 = vshll.u32 %v346, 16
        %v567 = vor.u32 %v564, %v565
        %v568 = vrot.slane %v564, 4
        %v570 = vshrl.u32 %v347, 16
        %v572 = vrot.slane %v570, 7
        %v573 = vshll.u32 %v347, 16
        %v575 = vor.u32 %v572, %v573
        %v576 = vsel %vm356, %v568, %v575
        %v577 = vrot.slane %v572, 4
        %v579 = vshrl.u32 %v348, 16
        %v581 = vrot.slane %v579, 7
        %v582 = vshll.u32 %v348, 16
        %v584 = vor.u32 %v581, %v582
        %v585 = vrot.slane %v581, 4
        %v587 = vshrl.u32 %v349, 16
        %v589 = vrot.slane %v587, 7
        %v590 = vshll.u32 %v349, 16
        %v592 = vor.u32 %v589, %v590
        %v593 = vsel %vm356, %v585, %v592
        %v594 = vrot.slane %v589, 4
        %v596 = vshrl.u32 %v350, 16
        %v598 = vrot.slane %v596, 7
        %v599 = vshll.u32 %v350, 16
        %v601 = vor.u32 %v598, %v599
        %v602 = vrot.slane %v598, 4
        %v604 = vshrl.u32 %v351, 16
        %v606 = vrot.slane %v604, 7
        %v607 = vshll.u32 %v351, 16
        %v609 = vor.u32 %v606, %v607
        %v610 = vsel %vm356, %v602, %v609
        %v611 = vrot.slane %v606, 4
        %v613 = vshrl.u32 %v352, 16
        %v615 = vrot.slane %v613, 7
        %v616 = vshll.u32 %v352, 16
        %v618 = vor.u32 %v615, %v616
        %v619 = vrot.slane %v615, 4
        %v621 = vshrl.u32 %v353, 16
        %v623 = vrot.slane %v621, 7
        %v624 = vshll.u32 %v353, 16
        %v626 = vor.u32 %v623, %v624
        %v627 = vsel %vm356, %v619, %v626
        %v628 = vrot.slane %v623, 4
        %s677 = scalar_lea.vmem [#allocation2], 12
        %vm678 = vcmask 19456
        %vm679 = vsmask.f32 7938
        %vm680 = vmand %vm678, %vm679
        %v681 = vld [vmem:[%s677] sm:$0xf]
        %v682 = vsel %vm680, %v363, %v681
        %683 = vst [vmem:[%s677] sm:$0xf] %v682
        %684 = vst.msk [vmem:[%s677 + $0x4] sm:$0xf] %vm170, %v372
        %vm685 = vcmask 16384
        %vm686 = vmand %vm685, %vm354
        %v687 = vld [vmem:[%s677 + $0x8] sm:$0x1]
        %v688 = vsel %vm686, %v373, %v687
        %689 = vst [vmem:[%s677 + $0x8] sm:$0x1] %v688
        %v690 = vld [vmem:[%s677 + $0xc] sm:$0xf]
        %v691 = vsel %vm680, %v380, %v690
        %692 = vst [vmem:[%s677 + $0xc] sm:$0xf] %v691
        %693 = vst.msk [vmem:[%s677 + $0x10] sm:$0xf] %vm170, %v389
        %v694 = vld [vmem:[%s677 + $0x14] sm:$0x1]
        %v695 = vsel %vm686, %v390, %v694
        %696 = vst [vmem:[%s677 + $0x14] sm:$0x1] %v695
        %v697 = vld [vmem:[%s677 + $0x18] sm:$0xf]
        %v698 = vsel %vm680, %v397, %v697
        %699 = vst [vmem:[%s677 + $0x18] sm:$0xf] %v698
        %700 = vst.msk [vmem:[%s677 + $0x1c] sm:$0xf] %vm170, %v406
        %v701 = vld [vmem:[%s677 + $0x20] sm:$0x1]
        %v702 = vsel %vm686, %v407, %v701
        %703 = vst [vmem:[%s677 + $0x20] sm:$0x1] %v702
        %v704 = vld [vmem:[%s677 + $0x24] sm:$0xf]
        %v705 = vsel %vm680, %v414, %v704
        %706 = vst [vmem:[%s677 + $0x24] sm:$0xf] %v705
        %707 = vst.msk [vmem:[%s677 + $0x28] sm:$0xf] %vm170, %v423
        %v708 = vld [vmem:[%s677 + $0x2c] sm:$0x1]
        %v709 = vsel %vm686, %v424, %v708
        %710 = vst [vmem:[%s677 + $0x2c] sm:$0x1] %v709
        %v711 = vld [vmem:[%s677 + $0x30] sm:$0xf]
        %v712 = vsel %vm680, %v431, %v711
        %713 = vst [vmem:[%s677 + $0x30] sm:$0xf] %v712
        %714 = vst.msk [vmem:[%s677 + $0x34] sm:$0xf] %vm170, %v440
        %v715 = vld [vmem:[%s677 + $0x38] sm:$0x1]
        %v716 = vsel %vm686, %v441, %v715
        %717 = vst [vmem:[%s677 + $0x38] sm:$0x1] %v716
        %v718 = vld [vmem:[%s677 + $0x3c] sm:$0xf]
        %v719 = vsel %vm680, %v448, %v718
        %720 = vst [vmem:[%s677 + $0x3c] sm:$0xf] %v719
        %721 = vst.msk [vmem:[%s677 + $0x40] sm:$0xf] %vm170, %v457
        %v722 = vld [vmem:[%s677 + $0x44] sm:$0x1]
        %v723 = vsel %vm686, %v458, %v722
        %724 = vst [vmem:[%s677 + $0x44] sm:$0x1] %v723
        %v725 = vld [vmem:[%s677 + $0x48] sm:$0xf]
        %v726 = vsel %vm680, %v465, %v725
        %727 = vst [vmem:[%s677 + $0x48] sm:$0xf] %v726
        %728 = vst.msk [vmem:[%s677 + $0x4c] sm:$0xf] %vm170, %v474
        %v729 = vld [vmem:[%s677 + $0x50] sm:$0x1]
        %v730 = vsel %vm686, %v475, %v729
        %731 = vst [vmem:[%s677 + $0x50] sm:$0x1] %v730
        %v732 = vld [vmem:[%s677 + $0x54] sm:$0xf]
        %v733 = vsel %vm680, %v482, %v732
        %734 = vst [vmem:[%s677 + $0x54] sm:$0xf] %v733
        %735 = vst.msk [vmem:[%s677 + $0x58] sm:$0xf] %vm170, %v491
        %v736 = vld [vmem:[%s677 + $0x5c] sm:$0x1]
        %v737 = vsel %vm686, %v492, %v736
        %738 = vst [vmem:[%s677 + $0x5c] sm:$0x1] %v737
        %v739 = vld [vmem:[%s677 + $0x60] sm:$0xf]
        %v740 = vsel %vm680, %v499, %v739
        %741 = vst [vmem:[%s677 + $0x60] sm:$0xf] %v740
        %742 = vst.msk [vmem:[%s677 + $0x64] sm:$0xf] %vm170, %v508
        %v743 = vld [vmem:[%s677 + $0x68] sm:$0x1]
        %v744 = vsel %vm686, %v509, %v743
        %745 = vst [vmem:[%s677 + $0x68] sm:$0x1] %v744
        %v746 = vld [vmem:[%s677 + $0x6c] sm:$0xf]
        %v747 = vsel %vm680, %v516, %v746
        %748 = vst [vmem:[%s677 + $0x6c] sm:$0xf] %v747
        %749 = vst.msk [vmem:[%s677 + $0x70] sm:$0xf] %vm170, %v525
        %v750 = vld [vmem:[%s677 + $0x74] sm:$0x1]
        %v751 = vsel %vm686, %v526, %v750
        %752 = vst [vmem:[%s677 + $0x74] sm:$0x1] %v751
        %v753 = vld [vmem:[%s677 + $0x78] sm:$0xf]
        %v754 = vsel %vm680, %v533, %v753
        %755 = vst [vmem:[%s677 + $0x78] sm:$0xf] %v754
        %756 = vst.msk [vmem:[%s677 + $0x7c] sm:$0xf] %vm170, %v542
        %v757 = vld [vmem:[%s677 + $0x80] sm:$0x1]
        %v758 = vsel %vm686, %v543, %v757
        %759 = vst [vmem:[%s677 + $0x80] sm:$0x1] %v758
        %v760 = vld [vmem:[%s677 + $0x84] sm:$0xf]
        %v761 = vsel %vm680, %v550, %v760
        %762 = vst [vmem:[%s677 + $0x84] sm:$0xf] %v761
        %763 = vst.msk [vmem:[%s677 + $0x88] sm:$0xf] %vm170, %v559
        %v764 = vld [vmem:[%s677 + $0x8c] sm:$0x1]
        %v765 = vsel %vm686, %v560, %v764
        %766 = vst [vmem:[%s677 + $0x8c] sm:$0x1] %v765
        %v767 = vld [vmem:[%s677 + $0x90] sm:$0xf]
        %v768 = vsel %vm680, %v567, %v767
        %769 = vst [vmem:[%s677 + $0x90] sm:$0xf] %v768
        %770 = vst.msk [vmem:[%s677 + $0x94] sm:$0xf] %vm170, %v576
        %v771 = vld [vmem:[%s677 + $0x98] sm:$0x1]
        %v772 = vsel %vm686, %v577, %v771
        %773 = vst [vmem:[%s677 + $0x98] sm:$0x1] %v772
        %v774 = vld [vmem:[%s677 + $0x9c] sm:$0xf]
        %v775 = vsel %vm680, %v584, %v774
        %776 = vst [vmem:[%s677 + $0x9c] sm:$0xf] %v775
        %777 = vst.msk [vmem:[%s677 + $0xa0] sm:$0xf] %vm170, %v593
        %v778 = vld [vmem:[%s677 + $0xa4] sm:$0x1]
        %v779 = vsel %vm686, %v594, %v778
        %780 = vst [vmem:[%s677 + $0xa4] sm:$0x1] %v779
        %v781 = vld [vmem:[%s677 + $0xa8] sm:$0xf]
        %v782 = vsel %vm680, %v601, %v781
        %783 = vst [vmem:[%s677 + $0xa8] sm:$0xf] %v782
        %784 = vst.msk [vmem:[%s677 + $0xac] sm:$0xf] %vm170, %v610
        %v785 = vld [vmem:[%s677 + $0xb0] sm:$0x1]
        %v786 = vsel %vm686, %v611, %v785
        %787 = vst [vmem:[%s677 + $0xb0] sm:$0x1] %v786
        %v788 = vld [vmem:[%s677 + $0xb4] sm:$0xf]
        %v789 = vsel %vm680, %v618, %v788
        %790 = vst [vmem:[%s677 + $0xb4] sm:$0xf] %v789
        %791 = vst.msk [vmem:[%s677 + $0xb8] sm:$0xf] %vm170, %v627
        %v792 = vld [vmem:[%s677 + $0xbc] sm:$0x1]
        %v793 = vsel %vm686, %v628, %v792
        %794 = vst [vmem:[%s677 + $0xbc] sm:$0x1] %v793
        %v795 = vld [vmem:[#allocation2] sm:$0xf]
        %v796 = vld [vmem:[#allocation2 + $0x4] sm:$0xf]
        %v797 = vld [vmem:[#allocation2 + $0xc] sm:$0xf]
        %v798 = vld [vmem:[#allocation2 + $0x10] sm:$0xf]
        %v799 = vld [vmem:[#allocation2 + $0x18] sm:$0xf]
        %v800 = vld [vmem:[#allocation2 + $0x1c] sm:$0xf]
        %v801 = vld [vmem:[#allocation2 + $0x24] sm:$0xf]
        %v802 = vld [vmem:[#allocation2 + $0x28] sm:$0xf]
        %v803 = vld [vmem:[#allocation2 + $0x30] sm:$0xf]
        %v804 = vld [vmem:[#allocation2 + $0x34] sm:$0xf]
        %v805 = vld [vmem:[#allocation2 + $0x3c] sm:$0xf]
        %v806 = vld [vmem:[#allocation2 + $0x40] sm:$0xf]
        %v807 = vld [vmem:[#allocation2 + $0x48] sm:$0xf]
        %v808 = vld [vmem:[#allocation2 + $0x4c] sm:$0xf]
        %v809 = vld [vmem:[#allocation2 + $0x54] sm:$0xf]
        %v810 = vld [vmem:[#allocation2 + $0x58] sm:$0xf]
        %v811 = vld [vmem:[#allocation2 + $0x60] sm:$0xf]
        %v812 = vld [vmem:[#allocation2 + $0x64] sm:$0xf]
        %v813 = vld [vmem:[#allocation2 + $0x6c] sm:$0xf]
        %v814 = vld [vmem:[#allocation2 + $0x70] sm:$0xf]
        %v815 = vld [vmem:[#allocation2 + $0x78] sm:$0xf]
        %v816 = vld [vmem:[#allocation2 + $0x7c] sm:$0xf]
        %v817 = vld [vmem:[#allocation2 + $0x84] sm:$0xf]
        %v818 = vld [vmem:[#allocation2 + $0x88] sm:$0xf]
        %v819 = vld [vmem:[#allocation2 + $0x90] sm:$0xf]
        %v820 = vld [vmem:[#allocation2 + $0x94] sm:$0xf]
        %v821 = vld [vmem:[#allocation2 + $0x9c] sm:$0xf]
        %v822 = vld [vmem:[#allocation2 + $0xa0] sm:$0xf]
        %v823 = vld [vmem:[#allocation2 + $0xa8] sm:$0xf]
        %v824 = vld [vmem:[#allocation2 + $0xac] sm:$0xf]
        %v825 = vld [vmem:[#allocation2 + $0xb4] sm:$0xf]
        %v826 = vld [vmem:[#allocation2 + $0xb8] sm:$0xf]
        %827 = vst.msk [vmem:[#allocation3] sm:$0xf] %vm170, %v795
        %828 = vst.msk [vmem:[#allocation3 + $0x4] sm:$0xf] %vm170, %v796
        %829 = vst.msk [vmem:[#allocation3 + $0x8] sm:$0xf] %vm170, %v797
        %830 = vst.msk [vmem:[#allocation3 + $0xc] sm:$0xf] %vm170, %v798
        %831 = vst.msk [vmem:[#allocation3 + $0x10] sm:$0xf] %vm170, %v799
        %832 = vst.msk [vmem:[#allocation3 + $0x14] sm:$0xf] %vm170, %v800
        %833 = vst.msk [vmem:[#allocation3 + $0x18] sm:$0xf] %vm170, %v801
        %834 = vst.msk [vmem:[#allocation3 + $0x1c] sm:$0xf] %vm170, %v802
        %835 = vst.msk [vmem:[#allocation3 + $0x20] sm:$0xf] %vm170, %v803
        %836 = vst.msk [vmem:[#allocation3 + $0x24] sm:$0xf] %vm170, %v804
        %837 = vst.msk [vmem:[#allocation3 + $0x28] sm:$0xf] %vm170, %v805
        %838 = vst.msk [vmem:[#allocation3 + $0x2c] sm:$0xf] %vm170, %v806
        %839 = vst.msk [vmem:[#allocation3 + $0x30] sm:$0xf] %vm170, %v807
        %840 = vst.msk [vmem:[#allocation3 + $0x34] sm:$0xf] %vm170, %v808
        %841 = vst.msk [vmem:[#allocation3 + $0x38] sm:$0xf] %vm170, %v809
        %842 = vst.msk [vmem:[#allocation3 + $0x3c] sm:$0xf] %vm170, %v810
        %843 = vst.msk [vmem:[#allocation3 + $0x40] sm:$0xf] %vm170, %v811
        %844 = vst.msk [vmem:[#allocation3 + $0x44] sm:$0xf] %vm170, %v812
        %845 = vst.msk [vmem:[#allocation3 + $0x48] sm:$0xf] %vm170, %v813
        %846 = vst.msk [vmem:[#allocation3 + $0x4c] sm:$0xf] %vm170, %v814
        %847 = vst.msk [vmem:[#allocation3 + $0x50] sm:$0xf] %vm170, %v815
        %848 = vst.msk [vmem:[#allocation3 + $0x54] sm:$0xf] %vm170, %v816
        %849 = vst.msk [vmem:[#allocation3 + $0x58] sm:$0xf] %vm170, %v817
        %850 = vst.msk [vmem:[#allocation3 + $0x5c] sm:$0xf] %vm170, %v818
        %851 = vst.msk [vmem:[#allocation3 + $0x60] sm:$0xf] %vm170, %v819
        %852 = vst.msk [vmem:[#allocation3 + $0x64] sm:$0xf] %vm170, %v820
        %853 = vst.msk [vmem:[#allocation3 + $0x68] sm:$0xf] %vm170, %v821
        %854 = vst.msk [vmem:[#allocation3 + $0x6c] sm:$0xf] %vm170, %v822
        %855 = vst.msk [vmem:[#allocation3 + $0x70] sm:$0xf] %vm170, %v823
        %856 = vst.msk [vmem:[#allocation3 + $0x74] sm:$0xf] %vm170, %v824
        %857 = vst.msk [vmem:[#allocation3 + $0x78] sm:$0xf] %vm170, %v825
        %858 = vst.msk [vmem:[#allocation3 + $0x7c] sm:$0xf] %vm170, %v826
        %v859 = vld [vmem:[#allocation2] sm:$0xf]
        %v860 = vld [vmem:[#allocation2 + $0x4] sm:$0xf]
        %v861 = vld [vmem:[#allocation2 + $0x8] sm:$0x1]
        %v862 = vld [vmem:[#allocation2 + $0xc] sm:$0xf]
        %v863 = vld [vmem:[#allocation2 + $0x10] sm:$0xf]
        %v864 = vld [vmem:[#allocation2 + $0x14] sm:$0x1]
        %v865 = vld [vmem:[#allocation2 + $0x18] sm:$0xf]
        %v866 = vld [vmem:[#allocation2 + $0x1c] sm:$0xf]
        %v867 = vld [vmem:[#allocation2 + $0x20] sm:$0x1]
        %v868 = vld [vmem:[#allocation2 + $0x24] sm:$0xf]
        %v869 = vld [vmem:[#allocation2 + $0x28] sm:$0xf]
        %v870 = vld [vmem:[#allocation2 + $0x2c] sm:$0x1]
        %v871 = vld [vmem:[#allocation2 + $0x30] sm:$0xf]
        %v872 = vld [vmem:[#allocation2 + $0x34] sm:$0xf]
        %v873 = vld [vmem:[#allocation2 + $0x38] sm:$0x1]
        %v874 = vld [vmem:[#allocation2 + $0x3c] sm:$0xf]
        %v875 = vld [vmem:[#allocation2 + $0x40] sm:$0xf]
        %v876 = vld [vmem:[#allocation2 + $0x44] sm:$0x1]
        %v877 = vld [vmem:[#allocation2 + $0x48] sm:$0xf]
        %v878 = vld [vmem:[#allocation2 + $0x4c] sm:$0xf]
        %v879 = vld [vmem:[#allocation2 + $0x50] sm:$0x1]
        %v880 = vld [vmem:[#allocation2 + $0x54] sm:$0xf]
        %v881 = vld [vmem:[#allocation2 + $0x58] sm:$0xf]
        %v882 = vld [vmem:[#allocation2 + $0x5c] sm:$0x1]
        %v883 = vld [vmem:[#allocation2 + $0x60] sm:$0xf]
        %v884 = vld [vmem:[#allocation2 + $0x64] sm:$0xf]
        %v885 = vld [vmem:[#allocation2 + $0x68] sm:$0x1]
        %v886 = vld [vmem:[#allocation2 + $0x6c] sm:$0xf]
        %v887 = vld [vmem:[#allocation2 + $0x70] sm:$0xf]
        %v888 = vld [vmem:[#allocation2 + $0x74] sm:$0x1]
        %v889 = vld [vmem:[#allocation2 + $0x78] sm:$0xf]
        %v890 = vld [vmem:[#allocation2 + $0x7c] sm:$0xf]
        %v891 = vld [vmem:[#allocation2 + $0x80] sm:$0x1]
        %v892 = vld [vmem:[#allocation2 + $0x84] sm:$0xf]
        %v893 = vld [vmem:[#allocation2 + $0x88] sm:$0xf]
        %v894 = vld [vmem:[#allocation2 + $0x8c] sm:$0x1]
        %v895 = vld [vmem:[#allocation2 + $0x90] sm:$0xf]
        %v896 = vld [vmem:[#allocation2 + $0x94] sm:$0xf]
        %v897 = vld [vmem:[#allocation2 + $0x98] sm:$0x1]
        %v898 = vld [vmem:[#allocation2 + $0x9c] sm:$0xf]
        %v899 = vld [vmem:[#allocation2 + $0xa0] sm:$0xf]
        %v900 = vld [vmem:[#allocation2 + $0xa4] sm:$0x1]
        %v901 = vld [vmem:[#allocation2 + $0xa8] sm:$0xf]
        %v902 = vld [vmem:[#allocation2 + $0xac] sm:$0xf]
        %v903 = vld [vmem:[#allocation2 + $0xb0] sm:$0x1]
        %v904 = vld [vmem:[#allocation2 + $0xb4] sm:$0xf]
        %v905 = vld [vmem:[#allocation2 + $0xb8] sm:$0xf]
        %v906 = vld [vmem:[#allocation2 + $0xbc] sm:$0x1]
        %vm907 = vsmask.f32 3328
        %vm908 = vsmask.f32 7440
        %vm909 = vmor %vm907, %vm908
        %v911 = vshrl.u32 %v859, 16
        %v913 = vrot.slane %v911, 4
        %v914 = vshll.u32 %v859, 16
        %v916 = vrot.slane %v914, 5
        %v917 = vor.u32 %v913, %v916
        %v918 = vrot.slane %v917, 4
        %v920 = vshll.u32 %v860, 16
        %v922 = vrot.slane %v920, 5
        %v923 = vsel %vm909, %v918, %v922
        %v924 = vshrl.u32 %v860, 16
        %v926 = vrot.slane %v924, 4
        %v927 = vor.u32 %v926, %v922
        %v928 = vrot.slane %v927, 4
        %v930 = vshll.u32 %v861, 16
        %v932 = vrot.slane %v930, 5
        %v933 = vsel %vm909, %v928, %v932
        %v935 = vshrl.u32 %v862, 16
        %v937 = vrot.slane %v935, 4
        %v938 = vshll.u32 %v862, 16
        %v940 = vrot.slane %v938, 5
        %v941 = vor.u32 %v937, %v940
        %v942 = vrot.slane %v941, 4
        %v944 = vshll.u32 %v863, 16
        %v946 = vrot.slane %v944, 5
        %v947 = vsel %vm909, %v942, %v946
        %v948 = vshrl.u32 %v863, 16
        %v950 = vrot.slane %v948, 4
        %v951 = vor.u32 %v950, %v946
        %v952 = vrot.slane %v951, 4
        %v954 = vshll.u32 %v864, 16
        %v956 = vrot.slane %v954, 5
        %v957 = vsel %vm909, %v952, %v956
        %v959 = vshrl.u32 %v865, 16
        %v961 = vrot.slane %v959, 4
        %v962 = vshll.u32 %v865, 16
        %v964 = vrot.slane %v962, 5
        %v965 = vor.u32 %v961, %v964
        %v966 = vrot.slane %v965, 4
        %v968 = vshll.u32 %v866, 16
        %v970 = vrot.slane %v968, 5
        %v971 = vsel %vm909, %v966, %v970
        %v972 = vshrl.u32 %v866, 16
        %v974 = vrot.slane %v972, 4
        %v975 = vor.u32 %v974, %v970
        %v976 = vrot.slane %v975, 4
        %v978 = vshll.u32 %v867, 16
        %v980 = vrot.slane %v978, 5
        %v981 = vsel %vm909, %v976, %v980
        %v983 = vshrl.u32 %v868, 16
        %v985 = vrot.slane %v983, 4
        %v986 = vshll.u32 %v868, 16
        %v988 = vrot.slane %v986, 5
        %v989 = vor.u32 %v985, %v988
        %v990 = vrot.slane %v989, 4
        %v992 = vshll.u32 %v869, 16
        %v994 = vrot.slane %v992, 5
        %v995 = vsel %vm909, %v990, %v994
        %v996 = vshrl.u32 %v869, 16
        %v998 = vrot.slane %v996, 4
        %v999 = vor.u32 %v998, %v994
        %v1000 = vrot.slane %v999, 4
        %v1002 = vshll.u32 %v870, 16
        %v1004 = vrot.slane %v1002, 5
        %v1005 = vsel %vm909, %v1000, %v1004
        %v1007 = vshrl.u32 %v871, 16
        %v1009 = vrot.slane %v1007, 4
        %v1010 = vshll.u32 %v871, 16
        %v1012 = vrot.slane %v1010, 5
        %v1013 = vor.u32 %v1009, %v1012
        %v1014 = vrot.slane %v1013, 4
        %v1016 = vshll.u32 %v872, 16
        %v1018 = vrot.slane %v1016, 5
        %v1019 = vsel %vm909, %v1014, %v1018
        %v1020 = vshrl.u32 %v872, 16
        %v1022 = vrot.slane %v1020, 4
        %v1023 = vor.u32 %v1022, %v1018
        %v1024 = vrot.slane %v1023, 4
        %v1026 = vshll.u32 %v873, 16
        %v1028 = vrot.slane %v1026, 5
        %v1029 = vsel %vm909, %v1024, %v1028
        %v1031 = vshrl.u32 %v874, 16
        %v1033 = vrot.slane %v1031, 4
        %v1034 = vshll.u32 %v874, 16
        %v1036 = vrot.slane %v1034, 5
        %v1037 = vor.u32 %v1033, %v1036
        %v1038 = vrot.slane %v1037, 4
        %v1040 = vshll.u32 %v875, 16
        %v1042 = vrot.slane %v1040, 5
        %v1043 = vsel %vm909, %v1038, %v1042
        %v1044 = vshrl.u32 %v875, 16
        %v1046 = vrot.slane %v1044, 4
        %v1047 = vor.u32 %v1046, %v1042
        %v1048 = vrot.slane %v1047, 4
        %v1050 = vshll.u32 %v876, 16
        %v1052 = vrot.slane %v1050, 5
        %v1053 = vsel %vm909, %v1048, %v1052
        %v1055 = vshrl.u32 %v877, 16
        %v1057 = vrot.slane %v1055, 4
        %v1058 = vshll.u32 %v877, 16
        %v1060 = vrot.slane %v1058, 5
        %v1061 = vor.u32 %v1057, %v1060
        %v1062 = vrot.slane %v1061, 4
        %v1064 = vshll.u32 %v878, 16
        %v1066 = vrot.slane %v1064, 5
        %v1067 = vsel %vm909, %v1062, %v1066
        %v1068 = vshrl.u32 %v878, 16
        %v1070 = vrot.slane %v1068, 4
        %v1071 = vor.u32 %v1070, %v1066
        %v1072 = vrot.slane %v1071, 4
        %v1074 = vshll.u32 %v879, 16
        %v1076 = vrot.slane %v1074, 5
        %v1077 = vsel %vm909, %v1072, %v1076
        %v1079 = vshrl.u32 %v880, 16
        %v1081 = vrot.slane %v1079, 4
        %v1082 = vshll.u32 %v880, 16
        %v1084 = vrot.slane %v1082, 5
        %v1085 = vor.u32 %v1081, %v1084
        %v1086 = vrot.slane %v1085, 4
        %v1088 = vshll.u32 %v881, 16
        %v1090 = vrot.slane %v1088, 5
        %v1091 = vsel %vm909, %v1086, %v1090
        %v1092 = vshrl.u32 %v881, 16
        %v1094 = vrot.slane %v1092, 4
        %v1095 = vor.u32 %v1094, %v1090
        %v1096 = vrot.slane %v1095, 4
        %v1098 = vshll.u32 %v882, 16
        %v1100 = vrot.slane %v1098, 5
        %v1101 = vsel %vm909, %v1096, %v1100
        %v1103 = vshrl.u32 %v883, 16
        %v1105 = vrot.slane %v1103, 4
        %v1106 = vshll.u32 %v883, 16
        %v1108 = vrot.slane %v1106, 5
        %v1109 = vor.u32 %v1105, %v1108
        %v1110 = vrot.slane %v1109, 4
        %v1112 = vshll.u32 %v884, 16
        %v1114 = vrot.slane %v1112, 5
        %v1115 = vsel %vm909, %v1110, %v1114
        %v1116 = vshrl.u32 %v884, 16
        %v1118 = vrot.slane %v1116, 4
        %v1119 = vor.u32 %v1118, %v1114
        %v1120 = vrot.slane %v1119, 4
        %v1122 = vshll.u32 %v885, 16
        %v1124 = vrot.slane %v1122, 5
        %v1125 = vsel %vm909, %v1120, %v1124
        %v1127 = vshrl.u32 %v886, 16
        %v1129 = vrot.slane %v1127, 4
        %v1130 = vshll.u32 %v886, 16
        %v1132 = vrot.slane %v1130, 5
        %v1133 = vor.u32 %v1129, %v1132
        %v1134 = vrot.slane %v1133, 4
        %v1136 = vshll.u32 %v887, 16
        %v1138 = vrot.slane %v1136, 5
        %v1139 = vsel %vm909, %v1134, %v1138
        %v1140 = vshrl.u32 %v887, 16
        %v1142 = vrot.slane %v1140, 4
        %v1143 = vor.u32 %v1142, %v1138
        %v1144 = vrot.slane %v1143, 4
        %v1146 = vshll.u32 %v888, 16
        %v1148 = vrot.slane %v1146, 5
        %v1149 = vsel %vm909, %v1144, %v1148
        %v1151 = vshrl.u32 %v889, 16
        %v1153 = vrot.slane %v1151, 4
        %v1154 = vshll.u32 %v889, 16
        %v1156 = vrot.slane %v1154, 5
        %v1157 = vor.u32 %v1153, %v1156
        %v1158 = vrot.slane %v1157, 4
        %v1160 = vshll.u32 %v890, 16
        %v1162 = vrot.slane %v1160, 5
        %v1163 = vsel %vm909, %v1158, %v1162
        %v1164 = vshrl.u32 %v890, 16
        %v1166 = vrot.slane %v1164, 4
        %v1167 = vor.u32 %v1166, %v1162
        %v1168 = vrot.slane %v1167, 4
        %v1170 = vshll.u32 %v891, 16
        %v1172 = vrot.slane %v1170, 5
        %v1173 = vsel %vm909, %v1168, %v1172
        %v1175 = vshrl.u32 %v892, 16
        %v1177 = vrot.slane %v1175, 4
        %v1178 = vshll.u32 %v892, 16
        %v1180 = vrot.slane %v1178, 5
        %v1181 = vor.u32 %v1177, %v1180
        %v1182 = vrot.slane %v1181, 4
        %v1184 = vshll.u32 %v893, 16
        %v1186 = vrot.slane %v1184, 5
        %v1187 = vsel %vm909, %v1182, %v1186
        %v1188 = vshrl.u32 %v893, 16
        %v1190 = vrot.slane %v1188, 4
        %v1191 = vor.u32 %v1190, %v1186
        %v1192 = vrot.slane %v1191, 4
        %v1194 = vshll.u32 %v894, 16
        %v1196 = vrot.slane %v1194, 5
        %v1197 = vsel %vm909, %v1192, %v1196
        %v1199 = vshrl.u32 %v895, 16
        %v1201 = vrot.slane %v1199, 4
        %v1202 = vshll.u32 %v895, 16
        %v1204 = vrot.slane %v1202, 5
        %v1205 = vor.u32 %v1201, %v1204
        %v1206 = vrot.slane %v1205, 4
        %v1208 = vshll.u32 %v896, 16
        %v1210 = vrot.slane %v1208, 5
        %v1211 = vsel %vm909, %v1206, %v1210
        %v1212 = vshrl.u32 %v896, 16
        %v1214 = vrot.slane %v1212, 4
        %v1215 = vor.u32 %v1214, %v1210
        %v1216 = vrot.slane %v1215, 4
        %v1218 = vshll.u32 %v897, 16
        %v1220 = vrot.slane %v1218, 5
        %v1221 = vsel %vm909, %v1216, %v1220
        %v1223 = vshrl.u32 %v898, 16
        %v1225 = vrot.slane %v1223, 4
        %v1226 = vshll.u32 %v898, 16
        %v1228 = vrot.slane %v1226, 5
        %v1229 = vor.u32 %v1225, %v1228
        %v1230 = vrot.slane %v1229, 4
        %v1232 = vshll.u32 %v899, 16
        %v1234 = vrot.slane %v1232, 5
        %v1235 = vsel %vm909, %v1230, %v1234
        %v1236 = vshrl.u32 %v899, 16
        %v1238 = vrot.slane %v1236, 4
        %v1239 = vor.u32 %v1238, %v1234
        %v1240 = vrot.slane %v1239, 4
        %v1242 = vshll.u32 %v900, 16
        %v1244 = vrot.slane %v1242, 5
        %v1245 = vsel %vm909, %v1240, %v1244
        %v1247 = vshrl.u32 %v901, 16
        %v1249 = vrot.slane %v1247, 4
        %v1250 = vshll.u32 %v901, 16
        %v1252 = vrot.slane %v1250, 5
        %v1253 = vor.u32 %v1249, %v1252
        %v1254 = vrot.slane %v1253, 4
        %v1256 = vshll.u32 %v902, 16
        %v1258 = vrot.slane %v1256, 5
        %v1259 = vsel %vm909, %v1254, %v1258
        %v1260 = vshrl.u32 %v902, 16
        %v1262 = vrot.slane %v1260, 4
        %v1263 = vor.u32 %v1262, %v1258
        %v1264 = vrot.slane %v1263, 4
        %v1266 = vshll.u32 %v903, 16
        %v1268 = vrot.slane %v1266, 5
        %v1269 = vsel %vm909, %v1264, %v1268
        %v1271 = vshrl.u32 %v904, 16
        %v1273 = vrot.slane %v1271, 4
        %v1274 = vshll.u32 %v904, 16
        %v1276 = vrot.slane %v1274, 5
        %v1277 = vor.u32 %v1273, %v1276
        %v1278 = vrot.slane %v1277, 4
        %v1280 = vshll.u32 %v905, 16
        %v1282 = vrot.slane %v1280, 5
        %v1283 = vsel %vm909, %v1278, %v1282
        %v1284 = vshrl.u32 %v905, 16
        %v1286 = vrot.slane %v1284, 4
        %v1287 = vor.u32 %v1286, %v1282
        %v1288 = vrot.slane %v1287, 4
        %v1290 = vshll.u32 %v906, 16
        %v1292 = vrot.slane %v1290, 5
        %v1293 = vsel %vm909, %v1288, %v1292
        %1294 = vrot.lane.b32.xlu0 %v923, 3
        %v1295 = vpop.permute.xlu0 %1294
        %1296 = vrot.lane.b32.xlu0 %v933, 3
        %v1297 = vpop.permute.xlu0 %1296
        %1298 = vrot.lane.b32.xlu0 %v947, 3
        %v1299 = vpop.permute.xlu0 %1298
        %1300 = vrot.lane.b32.xlu0 %v957, 3
        %v1301 = vpop.permute.xlu0 %1300
        %1302 = vrot.lane.b32.xlu0 %v971, 3
        %v1303 = vpop.permute.xlu0 %1302
        %1304 = vrot.lane.b32.xlu0 %v981, 3
        %v1305 = vpop.permute.xlu0 %1304
        %1306 = vrot.lane.b32.xlu0 %v995, 3
        %v1307 = vpop.permute.xlu0 %1306
        %1308 = vrot.lane.b32.xlu0 %v1005, 3
        %v1309 = vpop.permute.xlu0 %1308
        %1310 = vrot.lane.b32.xlu0 %v1019, 3
        %v1311 = vpop.permute.xlu0 %1310
        %1312 = vrot.lane.b32.xlu0 %v1029, 3
        %v1313 = vpop.permute.xlu0 %1312
        %1314 = vrot.lane.b32.xlu0 %v1043, 3
        %v1315 = vpop.permute.xlu0 %1314
        %1316 = vrot.lane.b32.xlu0 %v1053, 3
        %v1317 = vpop.permute.xlu0 %1316
        %1318 = vrot.lane.b32.xlu0 %v1067, 3
        %v1319 = vpop.permute.xlu0 %1318
        %1320 = vrot.lane.b32.xlu0 %v1077, 3
        %v1321 = vpop.permute.xlu0 %1320
        %1322 = vrot.lane.b32.xlu0 %v1091, 3
        %v1323 = vpop.permute.xlu0 %1322
        %1324 = vrot.lane.b32.xlu0 %v1101, 3
        %v1325 = vpop.permute.xlu0 %1324
        %1326 = vrot.lane.b32.xlu0 %v1115, 3
        %v1327 = vpop.permute.xlu0 %1326
        %1328 = vrot.lane.b32.xlu0 %v1125, 3
        %v1329 = vpop.permute.xlu0 %1328
        %1330 = vrot.lane.b32.xlu0 %v1139, 3
        %v1331 = vpop.permute.xlu0 %1330
        %1332 = vrot.lane.b32.xlu0 %v1149, 3
        %v1333 = vpop.permute.xlu0 %1332
        %1334 = vrot.lane.b32.xlu0 %v1163, 3
        %v1335 = vpop.permute.xlu0 %1334
        %1336 = vrot.lane.b32.xlu0 %v1173, 3
        %v1337 = vpop.permute.xlu0 %1336
        %1338 = vrot.lane.b32.xlu0 %v1187, 3
        %v1339 = vpop.permute.xlu0 %1338
        %1340 = vrot.lane.b32.xlu0 %v1197, 3
        %v1341 = vpop.permute.xlu0 %1340
        %1342 = vrot.lane.b32.xlu0 %v1211, 3
        %v1343 = vpop.permute.xlu0 %1342
        %1344 = vrot.lane.b32.xlu0 %v1221, 3
        %v1345 = vpop.permute.xlu0 %1344
        %1346 = vrot.lane.b32.xlu0 %v1235, 3
        %v1347 = vpop.permute.xlu0 %1346
        %1348 = vrot.lane.b32.xlu0 %v1245, 3
        %v1349 = vpop.permute.xlu0 %1348
        %1350 = vrot.lane.b32.xlu0 %v1259, 3
        %v1351 = vpop.permute.xlu0 %1350
        %1352 = vrot.lane.b32.xlu0 %v1269, 3
        %v1353 = vpop.permute.xlu0 %1352
        %1354 = vrot.lane.b32.xlu0 %v1283, 3
        %v1355 = vpop.permute.xlu0 %1354
        %1356 = vrot.lane.b32.xlu0 %v1293, 3
        %v1357 = vpop.permute.xlu0 %1356
        %vm1390 = vcmask 44056
        %1391 = vst.msk [vmem:[#allocation3] sm:$0xf] %vm1390, %v1295
        %1392 = vst.msk [vmem:[#allocation3 + $0x4] sm:$0xf] %vm1390, %v1297
        %1393 = vst.msk [vmem:[#allocation3 + $0x8] sm:$0xf] %vm1390, %v1299
        %1394 = vst.msk [vmem:[#allocation3 + $0xc] sm:$0xf] %vm1390, %v1301
        %1395 = vst.msk [vmem:[#allocation3 + $0x10] sm:$0xf] %vm1390, %v1303
        %1396 = vst.msk [vmem:[#allocation3 + $0x14] sm:$0xf] %vm1390, %v1305
        %1397 = vst.msk [vmem:[#allocation3 + $0x18] sm:$0xf] %vm1390, %v1307
        %1398 = vst.msk [vmem:[#allocation3 + $0x1c] sm:$0xf] %vm1390, %v1309
        %1399 = vst.msk [vmem:[#allocation3 + $0x20] sm:$0xf] %vm1390, %v1311
        %1400 = vst.msk [vmem:[#allocation3 + $0x24] sm:$0xf] %vm1390, %v1313
        %1401 = vst.msk [vmem:[#allocation3 + $0x28] sm:$0xf] %vm1390, %v1315
        %1402 = vst.msk [vmem:[#allocation3 + $0x2c] sm:$0xf] %vm1390, %v1317
        %1403 = vst.msk [vmem:[#allocation3 + $0x30] sm:$0xf] %vm1390, %v1319
        %1404 = vst.msk [vmem:[#allocation3 + $0x34] sm:$0xf] %vm1390, %v1321
        %1405 = vst.msk [vmem:[#allocation3 + $0x38] sm:$0xf] %vm1390, %v1323
        %1406 = vst.msk [vmem:[#allocation3 + $0x3c] sm:$0xf] %vm1390, %v1325
        %1407 = vst.msk [vmem:[#allocation3 + $0x40] sm:$0xf] %vm1390, %v1327
        %1408 = vst.msk [vmem:[#allocation3 + $0x44] sm:$0xf] %vm1390, %v1329
        %1409 = vst.msk [vmem:[#allocation3 + $0x48] sm:$0xf] %vm1390, %v1331
        %1410 = vst.msk [vmem:[#allocation3 + $0x4c] sm:$0xf] %vm1390, %v1333
        %1411 = vst.msk [vmem:[#allocation3 + $0x50] sm:$0xf] %vm1390, %v1335
        %1412 = vst.msk [vmem:[#allocation3 + $0x54] sm:$0xf] %vm1390, %v1337
        %1413 = vst.msk [vmem:[#allocation3 + $0x58] sm:$0xf] %vm1390, %v1339
        %1414 = vst.msk [vmem:[#allocation3 + $0x5c] sm:$0xf] %vm1390, %v1341
        %1415 = vst.msk [vmem:[#allocation3 + $0x60] sm:$0xf] %vm1390, %v1343
        %1416 = vst.msk [vmem:[#allocation3 + $0x64] sm:$0xf] %vm1390, %v1345
        %1417 = vst.msk [vmem:[#allocation3 + $0x68] sm:$0xf] %vm1390, %v1347
        %1418 = vst.msk [vmem:[#allocation3 + $0x6c] sm:$0xf] %vm1390, %v1349
        %1419 = vst.msk [vmem:[#allocation3 + $0x70] sm:$0xf] %vm1390, %v1351
        %1420 = vst.msk [vmem:[#allocation3 + $0x74] sm:$0xf] %vm1390, %v1353
        %1421 = vst.msk [vmem:[#allocation3 + $0x78] sm:$0xf] %vm1390, %v1355
        %1422 = vst.msk [vmem:[#allocation3 + $0x7c] sm:$0xf] %vm1390, %v1357
        %v1423 = vld [vmem:[#allocation2] sm:$0xe]
        %v1424 = vld [vmem:[#allocation2 + $0x4] sm:$0xf]
        %v1425 = vld [vmem:[#allocation2 + $0x8] sm:$0x1]
        %v1426 = vld [vmem:[#allocation2 + $0xc] sm:$0xe]
        %v1427 = vld [vmem:[#allocation2 + $0x10] sm:$0xf]
        %v1428 = vld [vmem:[#allocation2 + $0x14] sm:$0x1]
        %v1429 = vld [vmem:[#allocation2 + $0x18] sm:$0xe]
        %v1430 = vld [vmem:[#allocation2 + $0x1c] sm:$0xf]
        %v1431 = vld [vmem:[#allocation2 + $0x20] sm:$0x1]
        %v1432 = vld [vmem:[#allocation2 + $0x24] sm:$0xe]
        %v1433 = vld [vmem:[#allocation2 + $0x28] sm:$0xf]
        %v1434 = vld [vmem:[#allocation2 + $0x2c] sm:$0x1]
        %v1435 = vld [vmem:[#allocation2 + $0x30] sm:$0xe]
        %v1436 = vld [vmem:[#allocation2 + $0x34] sm:$0xf]
        %v1437 = vld [vmem:[#allocation2 + $0x38] sm:$0x1]
        %v1438 = vld [vmem:[#allocation2 + $0x3c] sm:$0xe]
        %v1439 = vld [vmem:[#allocation2 + $0x40] sm:$0xf]
        %v1440 = vld [vmem:[#allocation2 + $0x44] sm:$0x1]
        %v1441 = vld [vmem:[#allocation2 + $0x48] sm:$0xe]
        %v1442 = vld [vmem:[#allocation2 + $0x4c] sm:$0xf]
        %v1443 = vld [vmem:[#allocation2 + $0x50] sm:$0x1]
        %v1444 = vld [vmem:[#allocation2 + $0x54] sm:$0xe]
        %v1445 = vld [vmem:[#allocation2 + $0x58] sm:$0xf]
        %v1446 = vld [vmem:[#allocation2 + $0x5c] sm:$0x1]
        %v1447 = vld [vmem:[#allocation2 + $0x60] sm:$0xe]
        %v1448 = vld [vmem:[#allocation2 + $0x64] sm:$0xf]
        %v1449 = vld [vmem:[#allocation2 + $0x68] sm:$0x1]
        %v1450 = vld [vmem:[#allocation2 + $0x6c] sm:$0xe]
        %v1451 = vld [vmem:[#allocation2 + $0x70] sm:$0xf]
        %v1452 = vld [vmem:[#allocation2 + $0x74] sm:$0x1]
        %v1453 = vld [vmem:[#allocation2 + $0x78] sm:$0xe]
        %v1454 = vld [vmem:[#allocation2 + $0x7c] sm:$0xf]
        %v1455 = vld [vmem:[#allocation2 + $0x80] sm:$0x1]
        %v1456 = vld [vmem:[#allocation2 + $0x84] sm:$0xe]
        %v1457 = vld [vmem:[#allocation2 + $0x88] sm:$0xf]
        %v1458 = vld [vmem:[#allocation2 + $0x8c] sm:$0x1]
        %v1459 = vld [vmem:[#allocation2 + $0x90] sm:$0xe]
        %v1460 = vld [vmem:[#allocation2 + $0x94] sm:$0xf]
        %v1461 = vld [vmem:[#allocation2 + $0x98] sm:$0x1]
        %v1462 = vld [vmem:[#allocation2 + $0x9c] sm:$0xe]
        %v1463 = vld [vmem:[#allocation2 + $0xa0] sm:$0xf]
        %v1464 = vld [vmem:[#allocation2 + $0xa4] sm:$0x1]
        %v1465 = vld [vmem:[#allocation2 + $0xa8] sm:$0xe]
        %v1466 = vld [vmem:[#allocation2 + $0xac] sm:$0xf]
        %v1467 = vld [vmem:[#allocation2 + $0xb0] sm:$0x1]
        %v1468 = vld [vmem:[#allocation2 + $0xb4] sm:$0xe]
        %v1469 = vld [vmem:[#allocation2 + $0xb8] sm:$0xf]
        %v1470 = vld [vmem:[#allocation2 + $0xbc] sm:$0x1]
        %vm1519 = vcmask 1042432
        %vm1520 = vcmask 1046532
        %vm1521 = vmor %vm1519, %vm1520
        %v1522 = vrot.slane %v1423, 5
        %v1523 = vrot.slane %v1522, 4
        %v1524 = vrot.slane %v1424, 5
        %v1525 = vsel %vm1521, %v1523, %v1524
        %v1526 = vrot.slane %v1524, 4
        %v1527 = vrot.slane %v1425, 5
        %v1528 = vsel %vm1521, %v1526, %v1527
        %v1529 = vrot.slane %v1426, 5
        %v1530 = vrot.slane %v1529, 4
        %v1531 = vrot.slane %v1427, 5
        %v1532 = vsel %vm1521, %v1530, %v1531
        %v1533 = vrot.slane %v1531, 4
        %v1534 = vrot.slane %v1428, 5
        %v1535 = vsel %vm1521, %v1533, %v1534
        %v1536 = vrot.slane %v1429, 5
        %v1537 = vrot.slane %v1536, 4
        %v1538 = vrot.slane %v1430, 5
        %v1539 = vsel %vm1521, %v1537, %v1538
        %v1540 = vrot.slane %v1538, 4
        %v1541 = vrot.slane %v1431, 5
        %v1542 = vsel %vm1521, %v1540, %v1541
        %v1543 = vrot.slane %v1432, 5
        %v1544 = vrot.slane %v1543, 4
        %v1545 = vrot.slane %v1433, 5
        %v1546 = vsel %vm1521, %v1544, %v1545
        %v1547 = vrot.slane %v1545, 4
        %v1548 = vrot.slane %v1434, 5
        %v1549 = vsel %vm1521, %v1547, %v1548
        %v1550 = vrot.slane %v1435, 5
        %v1551 = vrot.slane %v1550, 4
        %v1552 = vrot.slane %v1436, 5
        %v1553 = vsel %vm1521, %v1551, %v1552
        %v1554 = vrot.slane %v1552, 4
        %v1555 = vrot.slane %v1437, 5
        %v1556 = vsel %vm1521, %v1554, %v1555
        %v1557 = vrot.slane %v1438, 5
        %v1558 = vrot.slane %v1557, 4
        %v1559 = vrot.slane %v1439, 5
        %v1560 = vsel %vm1521, %v1558, %v1559
        %v1561 = vrot.slane %v1559, 4
        %v1562 = vrot.slane %v1440, 5
        %v1563 = vsel %vm1521, %v1561, %v1562
        %v1564 = vrot.slane %v1441, 5
        %v1565 = vrot.slane %v1564, 4
        %v1566 = vrot.slane %v1442, 5
        %v1567 = vsel %vm1521, %v1565, %v1566
        %v1568 = vrot.slane %v1566, 4
        %v1569 = vrot.slane %v1443, 5
        %v1570 = vsel %vm1521, %v1568, %v1569
        %v1571 = vrot.slane %v1444, 5
        %v1572 = vrot.slane %v1571, 4
        %v1573 = vrot.slane %v1445, 5
        %v1574 = vsel %vm1521, %v1572, %v1573
        %v1575 = vrot.slane %v1573, 4
        %v1576 = vrot.slane %v1446, 5
        %v1577 = vsel %vm1521, %v1575, %v1576
        %v1578 = vrot.slane %v1447, 5
        %v1579 = vrot.slane %v1578, 4
        %v1580 = vrot.slane %v1448, 5
        %v1581 = vsel %vm1521, %v1579, %v1580
        %v1582 = vrot.slane %v1580, 4
        %v1583 = vrot.slane %v1449, 5
        %v1584 = vsel %vm1521, %v1582, %v1583
        %v1585 = vrot.slane %v1450, 5
        %v1586 = vrot.slane %v1585, 4
        %v1587 = vrot.slane %v1451, 5
        %v1588 = vsel %vm1521, %v1586, %v1587
        %v1589 = vrot.slane %v1587, 4
        %v1590 = vrot.slane %v1452, 5
        %v1591 = vsel %vm1521, %v1589, %v1590
        %v1592 = vrot.slane %v1453, 5
        %v1593 = vrot.slane %v1592, 4
        %v1594 = vrot.slane %v1454, 5
        %v1595 = vsel %vm1521, %v1593, %v1594
        %v1596 = vrot.slane %v1594, 4
        %v1597 = vrot.slane %v1455, 5
        %v1598 = vsel %vm1521, %v1596, %v1597
        %v1599 = vrot.slane %v1456, 5
        %v1600 = vrot.slane %v1599, 4
        %v1601 = vrot.slane %v1457, 5
        %v1602 = vsel %vm1521, %v1600, %v1601
        %v1603 = vrot.slane %v1601, 4
        %v1604 = vrot.slane %v1458, 5
        %v1605 = vsel %vm1521, %v1603, %v1604
        %v1606 = vrot.slane %v1459, 5
        %v1607 = vrot.slane %v1606, 4
        %v1608 = vrot.slane %v1460, 5
        %v1609 = vsel %vm1521, %v1607, %v1608
        %v1610 = vrot.slane %v1608, 4
        %v1611 = vrot.slane %v1461, 5
        %v1612 = vsel %vm1521, %v1610, %v1611
        %v1613 = vrot.slane %v1462, 5
        %v1614 = vrot.slane %v1613, 4
        %v1615 = vrot.slane %v1463, 5
        %v1616 = vsel %vm1521, %v1614, %v1615
        %v1617 = vrot.slane %v1615, 4
        %v1618 = vrot.slane %v1464, 5
        %v1619 = vsel %vm1521, %v1617, %v1618
        %v1620 = vrot.slane %v1465, 5
        %v1621 = vrot.slane %v1620, 4
        %v1622 = vrot.slane %v1466, 5
        %v1623 = vsel %vm1521, %v1621, %v1622
        %v1624 = vrot.slane %v1622, 4
        %v1625 = vrot.slane %v1467, 5
        %v1626 = vsel %vm1521, %v1624, %v1625
        %v1627 = vrot.slane %v1468, 5
        %v1628 = vrot.slane %v1627, 4
        %v1629 = vrot.slane %v1469, 5
        %v1630 = vsel %vm1521, %v1628, %v1629
        %v1631 = vrot.slane %v1629, 4
        %v1632 = vrot.slane %v1470, 5
        %v1633 = vsel %vm1521, %v1631, %v1632
        %1634 = vrot.lane.b32.xlu0 %v1525, 6
        %v1635 = vpop.permute.xlu0 %1634
        %1636 = vrot.lane.b32.xlu0 %v1528, 6
        %v1637 = vpop.permute.xlu0 %1636
        %1638 = vrot.lane.b32.xlu0 %v1532, 6
        %v1639 = vpop.permute.xlu0 %1638
        %1640 = vrot.lane.b32.xlu0 %v1535, 6
        %v1641 = vpop.permute.xlu0 %1640
        %1642 = vrot.lane.b32.xlu0 %v1539, 6
        %v1643 = vpop.permute.xlu0 %1642
        %1644 = vrot.lane.b32.xlu0 %v1542, 6
        %v1645 = vpop.permute.xlu0 %1644
        %1646 = vrot.lane.b32.xlu0 %v1546, 6
        %v1647 = vpop.permute.xlu0 %1646
        %1648 = vrot.lane.b32.xlu0 %v1549, 6
        %v1649 = vpop.permute.xlu0 %1648
        %1650 = vrot.lane.b32.xlu0 %v1553, 6
        %v1651 = vpop.permute.xlu0 %1650
        %1652 = vrot.lane.b32.xlu0 %v1556, 6
        %v1653 = vpop.permute.xlu0 %1652
        %1654 = vrot.lane.b32.xlu0 %v1560, 6
        %v1655 = vpop.permute.xlu0 %1654
        %1656 = vrot.lane.b32.xlu0 %v1563, 6
        %v1657 = vpop.permute.xlu0 %1656
        %1658 = vrot.lane.b32.xlu0 %v1567, 6
        %v1659 = vpop.permute.xlu0 %1658
        %1660 = vrot.lane.b32.xlu0 %v1570, 6
        %v1661 = vpop.permute.xlu0 %1660
        %1662 = vrot.lane.b32.xlu0 %v1574, 6
        %v1663 = vpop.permute.xlu0 %1662
        %1664 = vrot.lane.b32.xlu0 %v1577, 6
        %v1665 = vpop.permute.xlu0 %1664
        %1666 = vrot.lane.b32.xlu0 %v1581, 6
        %v1667 = vpop.permute.xlu0 %1666
        %1668 = vrot.lane.b32.xlu0 %v1584, 6
        %v1669 = vpop.permute.xlu0 %1668
        %1670 = vrot.lane.b32.xlu0 %v1588, 6
        %v1671 = vpop.permute.xlu0 %1670
        %1672 = vrot.lane.b32.xlu0 %v1591, 6
        %v1673 = vpop.permute.xlu0 %1672
        %1674 = vrot.lane.b32.xlu0 %v1595, 6
        %v1675 = vpop.permute.xlu0 %1674
        %1676 = vrot.lane.b32.xlu0 %v1598, 6
        %v1677 = vpop.permute.xlu0 %1676
        %1678 = vrot.lane.b32.xlu0 %v1602, 6
        %v1679 = vpop.permute.xlu0 %1678
        %1680 = vrot.lane.b32.xlu0 %v1605, 6
        %v1681 = vpop.permute.xlu0 %1680
        %1682 = vrot.lane.b32.xlu0 %v1609, 6
        %v1683 = vpop.permute.xlu0 %1682
        %1684 = vrot.lane.b32.xlu0 %v1612, 6
        %v1685 = vpop.permute.xlu0 %1684
        %1686 = vrot.lane.b32.xlu0 %v1616, 6
        %v1687 = vpop.permute.xlu0 %1686
        %1688 = vrot.lane.b32.xlu0 %v1619, 6
        %v1689 = vpop.permute.xlu0 %1688
        %1690 = vrot.lane.b32.xlu0 %v1623, 6
        %v1691 = vpop.permute.xlu0 %1690
        %1692 = vrot.lane.b32.xlu0 %v1626, 6
        %v1693 = vpop.permute.xlu0 %1692
        %1694 = vrot.lane.b32.xlu0 %v1630, 6
        %v1695 = vpop.permute.xlu0 %1694
        %1696 = vrot.lane.b32.xlu0 %v1633, 6
        %v1697 = vpop.permute.xlu0 %1696
        %vm1730 = vcmask 68656
        %1731 = vst.msk [vmem:[#allocation3] sm:$0xf] %vm1730, %v1635
        %1732 = vst.msk [vmem:[#allocation3 + $0x4] sm:$0xf] %vm1730, %v1637
        %1733 = vst.msk [vmem:[#allocation3 + $0x8] sm:$0xf] %vm1730, %v1639
        %1734 = vst.msk [vmem:[#allocation3 + $0xc] sm:$0xf] %vm1730, %v1641
        %1735 = vst.msk [vmem:[#allocation3 + $0x10] sm:$0xf] %vm1730, %v1643
        %1736 = vst.msk [vmem:[#allocation3 + $0x14] sm:$0xf] %vm1730, %v1645
        %1737 = vst.msk [vmem:[#allocation3 + $0x18] sm:$0xf] %vm1730, %v1647
        %1738 = vst.msk [vmem:[#allocation3 + $0x1c] sm:$0xf] %vm1730, %v1649
        %1739 = vst.msk [vmem:[#allocation3 + $0x20] sm:$0xf] %vm1730, %v1651
        %1740 = vst.msk [vmem:[#allocation3 + $0x24] sm:$0xf] %vm1730, %v1653
        %1741 = vst.msk [vmem:[#allocation3 + $0x28] sm:$0xf] %vm1730, %v1655
        %1742 = vst.msk [vmem:[#allocation3 + $0x2c] sm:$0xf] %vm1730, %v1657
        %1743 = vst.msk [vmem:[#allocation3 + $0x30] sm:$0xf] %vm1730, %v1659
        %1744 = vst.msk [vmem:[#allocation3 + $0x34] sm:$0xf] %vm1730, %v1661
        %1745 = vst.msk [vmem:[#allocation3 + $0x38] sm:$0xf] %vm1730, %v1663
        %1746 = vst.msk [vmem:[#allocation3 + $0x3c] sm:$0xf] %vm1730, %v1665
        %1747 = vst.msk [vmem:[#allocation3 + $0x40] sm:$0xf] %vm1730, %v1667
        %1748 = vst.msk [vmem:[#allocation3 + $0x44] sm:$0xf] %vm1730, %v1669
        %1749 = vst.msk [vmem:[#allocation3 + $0x48] sm:$0xf] %vm1730, %v1671
        %1750 = vst.msk [vmem:[#allocation3 + $0x4c] sm:$0xf] %vm1730, %v1673
        %1751 = vst.msk [vmem:[#allocation3 + $0x50] sm:$0xf] %vm1730, %v1675
        %1752 = vst.msk [vmem:[#allocation3 + $0x54] sm:$0xf] %vm1730, %v1677
        %1753 = vst.msk [vmem:[#allocation3 + $0x58] sm:$0xf] %vm1730, %v1679
        %1754 = vst.msk [vmem:[#allocation3 + $0x5c] sm:$0xf] %vm1730, %v1681
        %1755 = vst.msk [vmem:[#allocation3 + $0x60] sm:$0xf] %vm1730, %v1683
        %1756 = vst.msk [vmem:[#allocation3 + $0x64] sm:$0xf] %vm1730, %v1685
        %1757 = vst.msk [vmem:[#allocation3 + $0x68] sm:$0xf] %vm1730, %v1687
        %1758 = vst.msk [vmem:[#allocation3 + $0x6c] sm:$0xf] %vm1730, %v1689
        %1759 = vst.msk [vmem:[#allocation3 + $0x70] sm:$0xf] %vm1730, %v1691
        %1760 = vst.msk [vmem:[#allocation3 + $0x74] sm:$0xf] %vm1730, %v1693
        %1761 = vst.msk [vmem:[#allocation3 + $0x78] sm:$0xf] %vm1730, %v1695
        %1762 = vst.msk [vmem:[#allocation3 + $0x7c] sm:$0xf] %vm1730, %v1697
        %v1763 = vld [vmem:[%s677] sm:$0xf]
        %v1764 = vld [vmem:[%s677 + $0x4] sm:$0xf]
        %v1765 = vld [vmem:[%s677 + $0xc] sm:$0xf]
        %v1766 = vld [vmem:[%s677 + $0x10] sm:$0xf]
        %v1767 = vld [vmem:[%s677 + $0x18] sm:$0xf]
        %v1768 = vld [vmem:[%s677 + $0x1c] sm:$0xf]
        %v1769 = vld [vmem:[%s677 + $0x24] sm:$0xf]
        %v1770 = vld [vmem:[%s677 + $0x28] sm:$0xf]
        %v1771 = vld [vmem:[%s677 + $0x30] sm:$0xf]
        %v1772 = vld [vmem:[%s677 + $0x34] sm:$0xf]
        %v1773 = vld [vmem:[%s677 + $0x3c] sm:$0xf]
        %v1774 = vld [vmem:[%s677 + $0x40] sm:$0xf]
        %v1775 = vld [vmem:[%s677 + $0x48] sm:$0xf]
        %v1776 = vld [vmem:[%s677 + $0x4c] sm:$0xf]
        %v1777 = vld [vmem:[%s677 + $0x54] sm:$0xf]
        %v1778 = vld [vmem:[%s677 + $0x58] sm:$0xf]
        %v1779 = vld [vmem:[%s677 + $0x60] sm:$0xf]
        %v1780 = vld [vmem:[%s677 + $0x64] sm:$0xf]
        %v1781 = vld [vmem:[%s677 + $0x6c] sm:$0xf]
        %v1782 = vld [vmem:[%s677 + $0x70] sm:$0xf]
        %v1783 = vld [vmem:[%s677 + $0x78] sm:$0xf]
        %v1784 = vld [vmem:[%s677 + $0x7c] sm:$0xf]
        %v1785 = vld [vmem:[%s677 + $0x84] sm:$0xf]
        %v1786 = vld [vmem:[%s677 + $0x88] sm:$0xf]
        %v1787 = vld [vmem:[%s677 + $0x90] sm:$0xf]
        %v1788 = vld [vmem:[%s677 + $0x94] sm:$0xf]
        %v1789 = vld [vmem:[%s677 + $0x9c] sm:$0xf]
        %v1790 = vld [vmem:[%s677 + $0xa0] sm:$0xf]
        %v1791 = vld [vmem:[%s677 + $0xa8] sm:$0xf]
        %v1792 = vld [vmem:[%s677 + $0xac] sm:$0xf]
        %v1793 = vld [vmem:[%s677 + $0xb4] sm:$0xf]
        %v1794 = vld [vmem:[%s677 + $0xb8] sm:$0xf]
        %1827 = vrot.lane.b32.xlu0 %v1763, 9
        %v1828 = vpop.permute.xlu0 %1827
        %1829 = vrot.lane.b32.xlu0 %v1764, 9
        %v1830 = vpop.permute.xlu0 %1829
        %1831 = vrot.lane.b32.xlu0 %v1765, 9
        %v1832 = vpop.permute.xlu0 %1831
        %1833 = vrot.lane.b32.xlu0 %v1766, 9
        %v1834 = vpop.permute.xlu0 %1833
        %1835 = vrot.lane.b32.xlu0 %v1767, 9
        %v1836 = vpop.permute.xlu0 %1835
        %1837 = vrot.lane.b32.xlu0 %v1768, 9
        %v1838 = vpop.permute.xlu0 %1837
        %1839 = vrot.lane.b32.xlu0 %v1769, 9
        %v1840 = vpop.permute.xlu0 %1839
        %1841 = vrot.lane.b32.xlu0 %v1770, 9
        %v1842 = vpop.permute.xlu0 %1841
        %1843 = vrot.lane.b32.xlu0 %v1771, 9
        %v1844 = vpop.permute.xlu0 %1843
        %1845 = vrot.lane.b32.xlu0 %v1772, 9
        %v1846 = vpop.permute.xlu0 %1845
        %1847 = vrot.lane.b32.xlu0 %v1773, 9
        %v1848 = vpop.permute.xlu0 %1847
        %1849 = vrot.lane.b32.xlu0 %v1774, 9
        %v1850 = vpop.permute.xlu0 %1849
        %1851 = vrot.lane.b32.xlu0 %v1775, 9
        %v1852 = vpop.permute.xlu0 %1851
        %1853 = vrot.lane.b32.xlu0 %v1776, 9
        %v1854 = vpop.permute.xlu0 %1853
        %1855 = vrot.lane.b32.xlu0 %v1777, 9
        %v1856 = vpop.permute.xlu0 %1855
        %1857 = vrot.lane.b32.xlu0 %v1778, 9
        %v1858 = vpop.permute.xlu0 %1857
        %1859 = vrot.lane.b32.xlu0 %v1779, 9
        %v1860 = vpop.permute.xlu0 %1859
        %1861 = vrot.lane.b32.xlu0 %v1780, 9
        %v1862 = vpop.permute.xlu0 %1861
        %1863 = vrot.lane.b32.xlu0 %v1781, 9
        %v1864 = vpop.permute.xlu0 %1863
        %1865 = vrot.lane.b32.xlu0 %v1782, 9
        %v1866 = vpop.permute.xlu0 %1865
        %1867 = vrot.lane.b32.xlu0 %v1783, 9
        %v1868 = vpop.permute.xlu0 %1867
        %1869 = vrot.lane.b32.xlu0 %v1784, 9
        %v1870 = vpop.permute.xlu0 %1869
        %1871 = vrot.lane.b32.xlu0 %v1785, 9
        %v1872 = vpop.permute.xlu0 %1871
        %1873 = vrot.lane.b32.xlu0 %v1786, 9
        %v1874 = vpop.permute.xlu0 %1873
        %1875 = vrot.lane.b32.xlu0 %v1787, 9
        %v1876 = vpop.permute.xlu0 %1875
        %1877 = vrot.lane.b32.xlu0 %v1788, 9
        %v1878 = vpop.permute.xlu0 %1877
        %1879 = vrot.lane.b32.xlu0 %v1789, 9
        %v1880 = vpop.permute.xlu0 %1879
        %1881 = vrot.lane.b32.xlu0 %v1790, 9
        %v1882 = vpop.permute.xlu0 %1881
        %1883 = vrot.lane.b32.xlu0 %v1791, 9
        %v1884 = vpop.permute.xlu0 %1883
        %1885 = vrot.lane.b32.xlu0 %v1792, 9
        %v1886 = vpop.permute.xlu0 %1885
        %1887 = vrot.lane.b32.xlu0 %v1793, 9
        %v1888 = vpop.permute.xlu0 %1887
        %1889 = vrot.lane.b32.xlu0 %v1794, 9
        %v1890 = vpop.permute.xlu0 %1889
        %vm1923 = vcmask 93256
        %1924 = vst.msk [vmem:[#allocation3] sm:$0xf] %vm1923, %v1828
        %1925 = vst.msk [vmem:[#allocation3 + $0x4] sm:$0xf] %vm1923, %v1830
        %1926 = vst.msk [vmem:[#allocation3 + $0x8] sm:$0xf] %vm1923, %v1832
        %1927 = vst.msk [vmem:[#allocation3 + $0xc] sm:$0xf] %vm1923, %v1834
        %1928 = vst.msk [vmem:[#allocation3 + $0x10] sm:$0xf] %vm1923, %v1836
        %1929 = vst.msk [vmem:[#allocation3 + $0x14] sm:$0xf] %vm1923, %v1838
        %1930 = vst.msk [vmem:[#allocation3 + $0x18] sm:$0xf] %vm1923, %v1840
        %1931 = vst.msk [vmem:[#allocation3 + $0x1c] sm:$0xf] %vm1923, %v1842
        %1932 = vst.msk [vmem:[#allocation3 + $0x20] sm:$0xf] %vm1923, %v1844
        %1933 = vst.msk [vmem:[#allocation3 + $0x24] sm:$0xf] %vm1923, %v1846
        %1934 = vst.msk [vmem:[#allocation3 + $0x28] sm:$0xf] %vm1923, %v1848
        %1935 = vst.msk [vmem:[#allocation3 + $0x2c] sm:$0xf] %vm1923, %v1850
        %1936 = vst.msk [vmem:[#allocation3 + $0x30] sm:$0xf] %vm1923, %v1852
        %1937 = vst.msk [vmem:[#allocation3 + $0x34] sm:$0xf] %vm1923, %v1854
        %1938 = vst.msk [vmem:[#allocation3 + $0x38] sm:$0xf] %vm1923, %v1856
        %1939 = vst.msk [vmem:[#allocation3 + $0x3c] sm:$0xf] %vm1923, %v1858
        %1940 = vst.msk [vmem:[#allocation3 + $0x40] sm:$0xf] %vm1923, %v1860
        %1941 = vst.msk [vmem:[#allocation3 + $0x44] sm:$0xf] %vm1923, %v1862
        %1942 = vst.msk [vmem:[#allocation3 + $0x48] sm:$0xf] %vm1923, %v1864
        %1943 = vst.msk [vmem:[#allocation3 + $0x4c] sm:$0xf] %vm1923, %v1866
        %1944 = vst.msk [vmem:[#allocation3 + $0x50] sm:$0xf] %vm1923, %v1868
        %1945 = vst.msk [vmem:[#allocation3 + $0x54] sm:$0xf] %vm1923, %v1870
        %1946 = vst.msk [vmem:[#allocation3 + $0x58] sm:$0xf] %vm1923, %v1872
        %1947 = vst.msk [vmem:[#allocation3 + $0x5c] sm:$0xf] %vm1923, %v1874
        %1948 = vst.msk [vmem:[#allocation3 + $0x60] sm:$0xf] %vm1923, %v1876
        %1949 = vst.msk [vmem:[#allocation3 + $0x64] sm:$0xf] %vm1923, %v1878
        %1950 = vst.msk [vmem:[#allocation3 + $0x68] sm:$0xf] %vm1923, %v1880
        %1951 = vst.msk [vmem:[#allocation3 + $0x6c] sm:$0xf] %vm1923, %v1882
        %1952 = vst.msk [vmem:[#allocation3 + $0x70] sm:$0xf] %vm1923, %v1884
        %1953 = vst.msk [vmem:[#allocation3 + $0x74] sm:$0xf] %vm1923, %v1886
        %1954 = vst.msk [vmem:[#allocation3 + $0x78] sm:$0xf] %vm1923, %v1888
        %1955 = vst.msk [vmem:[#allocation3 + $0x7c] sm:$0xf] %vm1923, %v1890
        %v1956 = vld [vmem:[%s677] sm:$0xf]
        %v1957 = vld [vmem:[%s677 + $0x4] sm:$0xf]
        %v1958 = vld [vmem:[%s677 + $0x8] sm:$0x1]
        %v1959 = vld [vmem:[%s677 + $0xc] sm:$0xf]
        %v1960 = vld [vmem:[%s677 + $0x10] sm:$0xf]
        %v1961 = vld [vmem:[%s677 + $0x14] sm:$0x1]
        %v1962 = vld [vmem:[%s677 + $0x18] sm:$0xf]
        %v1963 = vld [vmem:[%s677 + $0x1c] sm:$0xf]
        %v1964 = vld [vmem:[%s677 + $0x20] sm:$0x1]
        %v1965 = vld [vmem:[%s677 + $0x24] sm:$0xf]
        %v1966 = vld [vmem:[%s677 + $0x28] sm:$0xf]
        %v1967 = vld [vmem:[%s677 + $0x2c] sm:$0x1]
        %v1968 = vld [vmem:[%s677 + $0x30] sm:$0xf]
        %v1969 = vld [vmem:[%s677 + $0x34] sm:$0xf]
        %v1970 = vld [vmem:[%s677 + $0x38] sm:$0x1]
        %v1971 = vld [vmem:[%s677 + $0x3c] sm:$0xf]
        %v1972 = vld [vmem:[%s677 + $0x40] sm:$0xf]
        %v1973 = vld [vmem:[%s677 + $0x44] sm:$0x1]
        %v1974 = vld [vmem:[%s677 + $0x48] sm:$0xf]
        %v1975 = vld [vmem:[%s677 + $0x4c] sm:$0xf]
        %v1976 = vld [vmem:[%s677 + $0x50] sm:$0x1]
        %v1977 = vld [vmem:[%s677 + $0x54] sm:$0xf]
        %v1978 = vld [vmem:[%s677 + $0x58] sm:$0xf]
        %v1979 = vld [vmem:[%s677 + $0x5c] sm:$0x1]
        %v1980 = vld [vmem:[%s677 + $0x60] sm:$0xf]
        %v1981 = vld [vmem:[%s677 + $0x64] sm:$0xf]
        %v1982 = vld [vmem:[%s677 + $0x68] sm:$0x1]
        %v1983 = vld [vmem:[%s677 + $0x6c] sm:$0xf]
        %v1984 = vld [vmem:[%s677 + $0x70] sm:$0xf]
        %v1985 = vld [vmem:[%s677 + $0x74] sm:$0x1]
        %v1986 = vld [vmem:[%s677 + $0x78] sm:$0xf]
        %v1987 = vld [vmem:[%s677 + $0x7c] sm:$0xf]
        %v1988 = vld [vmem:[%s677 + $0x80] sm:$0x1]
        %v1989 = vld [vmem:[%s677 + $0x84] sm:$0xf]
        %v1990 = vld [vmem:[%s677 + $0x88] sm:$0xf]
        %v1991 = vld [vmem:[%s677 + $0x8c] sm:$0x1]
        %v1992 = vld [vmem:[%s677 + $0x90] sm:$0xf]
        %v1993 = vld [vmem:[%s677 + $0x94] sm:$0xf]
        %v1994 = vld [vmem:[%s677 + $0x98] sm:$0x1]
        %v1995 = vld [vmem:[%s677 + $0x9c] sm:$0xf]
        %v1996 = vld [vmem:[%s677 + $0xa0] sm:$0xf]
        %v1997 = vld [vmem:[%s677 + $0xa4] sm:$0x1]
        %v1998 = vld [vmem:[%s677 + $0xa8] sm:$0xf]
        %v1999 = vld [vmem:[%s677 + $0xac] sm:$0xf]
        %v2000 = vld [vmem:[%s677 + $0xb0] sm:$0x1]
        %v2001 = vld [vmem:[%s677 + $0xb4] sm:$0xf]
        %v2002 = vld [vmem:[%s677 + $0xb8] sm:$0xf]
        %v2003 = vld [vmem:[%s677 + $0xbc] sm:$0x1]
        %v2005 = vshrl.u32 %v1956, 16
        %v2007 = vrot.slane %v2005, 4
        %v2008 = vshll.u32 %v1956, 16
        %v2010 = vrot.slane %v2008, 5
        %v2011 = vor.u32 %v2007, %v2010
        %v2012 = vrot.slane %v2011, 4
        %v2014 = vshll.u32 %v1957, 16
        %v2016 = vrot.slane %v2014, 5
        %v2017 = vsel %vm909, %v2012, %v2016
        %v2018 = vshrl.u32 %v1957, 16
        %v2020 = vrot.slane %v2018, 4
        %v2021 = vor.u32 %v2020, %v2016
        %v2022 = vrot.slane %v2021, 4
        %v2024 = vshll.u32 %v1958, 16
        %v2026 = vrot.slane %v2024, 5
        %v2027 = vsel %vm909, %v2022, %v2026
        %v2029 = vshrl.u32 %v1959, 16
        %v2031 = vrot.slane %v2029, 4
        %v2032 = vshll.u32 %v1959, 16
        %v2034 = vrot.slane %v2032, 5
        %v2035 = vor.u32 %v2031, %v2034
        %v2036 = vrot.slane %v2035, 4
        %v2038 = vshll.u32 %v1960, 16
        %v2040 = vrot.slane %v2038, 5
        %v2041 = vsel %vm909, %v2036, %v2040
        %v2042 = vshrl.u32 %v1960, 16
        %v2044 = vrot.slane %v2042, 4
        %v2045 = vor.u32 %v2044, %v2040
        %v2046 = vrot.slane %v2045, 4
        %v2048 = vshll.u32 %v1961, 16
        %v2050 = vrot.slane %v2048, 5
        %v2051 = vsel %vm909, %v2046, %v2050
        %v2053 = vshrl.u32 %v1962, 16
        %v2055 = vrot.slane %v2053, 4
        %v2056 = vshll.u32 %v1962, 16
        %v2058 = vrot.slane %v2056, 5
        %v2059 = vor.u32 %v2055, %v2058
        %v2060 = vrot.slane %v2059, 4
        %v2062 = vshll.u32 %v1963, 16
        %v2064 = vrot.slane %v2062, 5
        %v2065 = vsel %vm909, %v2060, %v2064
        %v2066 = vshrl.u32 %v1963, 16
        %v2068 = vrot.slane %v2066, 4
        %v2069 = vor.u32 %v2068, %v2064
        %v2070 = vrot.slane %v2069, 4
        %v2072 = vshll.u32 %v1964, 16
        %v2074 = vrot.slane %v2072, 5
        %v2075 = vsel %vm909, %v2070, %v2074
        %v2077 = vshrl.u32 %v1965, 16
        %v2079 = vrot.slane %v2077, 4
        %v2080 = vshll.u32 %v1965, 16
        %v2082 = vrot.slane %v2080, 5
        %v2083 = vor.u32 %v2079, %v2082
        %v2084 = vrot.slane %v2083, 4
        %v2086 = vshll.u32 %v1966, 16
        %v2088 = vrot.slane %v2086, 5
        %v2089 = vsel %vm909, %v2084, %v2088
        %v2090 = vshrl.u32 %v1966, 16
        %v2092 = vrot.slane %v2090, 4
        %v2093 = vor.u32 %v2092, %v2088
        %v2094 = vrot.slane %v2093, 4
        %v2096 = vshll.u32 %v1967, 16
        %v2098 = vrot.slane %v2096, 5
        %v2099 = vsel %vm909, %v2094, %v2098
        %v2101 = vshrl.u32 %v1968, 16
        %v2103 = vrot.slane %v2101, 4
        %v2104 = vshll.u32 %v1968, 16
        %v2106 = vrot.slane %v2104, 5
        %v2107 = vor.u32 %v2103, %v2106
        %v2108 = vrot.slane %v2107, 4
        %v2110 = vshll.u32 %v1969, 16
        %v2112 = vrot.slane %v2110, 5
        %v2113 = vsel %vm909, %v2108, %v2112
        %v2114 = vshrl.u32 %v1969, 16
        %v2116 = vrot.slane %v2114, 4
        %v2117 = vor.u32 %v2116, %v2112
        %v2118 = vrot.slane %v2117, 4
        %v2120 = vshll.u32 %v1970, 16
        %v2122 = vrot.slane %v2120, 5
        %v2123 = vsel %vm909, %v2118, %v2122
        %v2125 = vshrl.u32 %v1971, 16
        %v2127 = vrot.slane %v2125, 4
        %v2128 = vshll.u32 %v1971, 16
        %v2130 = vrot.slane %v2128, 5
        %v2131 = vor.u32 %v2127, %v2130
        %v2132 = vrot.slane %v2131, 4
        %v2134 = vshll.u32 %v1972, 16
        %v2136 = vrot.slane %v2134, 5
        %v2137 = vsel %vm909, %v2132, %v2136
        %v2138 = vshrl.u32 %v1972, 16
        %v2140 = vrot.slane %v2138, 4
        %v2141 = vor.u32 %v2140, %v2136
        %v2142 = vrot.slane %v2141, 4
        %v2144 = vshll.u32 %v1973, 16
        %v2146 = vrot.slane %v2144, 5
        %v2147 = vsel %vm909, %v2142, %v2146
        %v2149 = vshrl.u32 %v1974, 16
        %v2151 = vrot.slane %v2149, 4
        %v2152 = vshll.u32 %v1974, 16
        %v2154 = vrot.slane %v2152, 5
        %v2155 = vor.u32 %v2151, %v2154
        %v2156 = vrot.slane %v2155, 4
        %v2158 = vshll.u32 %v1975, 16
        %v2160 = vrot.slane %v2158, 5
        %v2161 = vsel %vm909, %v2156, %v2160
        %v2162 = vshrl.u32 %v1975, 16
        %v2164 = vrot.slane %v2162, 4
        %v2165 = vor.u32 %v2164, %v2160
        %v2166 = vrot.slane %v2165, 4
        %v2168 = vshll.u32 %v1976, 16
        %v2170 = vrot.slane %v2168, 5
        %v2171 = vsel %vm909, %v2166, %v2170
        %v2173 = vshrl.u32 %v1977, 16
        %v2175 = vrot.slane %v2173, 4
        %v2176 = vshll.u32 %v1977, 16
        %v2178 = vrot.slane %v2176, 5
        %v2179 = vor.u32 %v2175, %v2178
        %v2180 = vrot.slane %v2179, 4
        %v2182 = vshll.u32 %v1978, 16
        %v2184 = vrot.slane %v2182, 5
        %v2185 = vsel %vm909, %v2180, %v2184
        %v2186 = vshrl.u32 %v1978, 16
        %v2188 = vrot.slane %v2186, 4
        %v2189 = vor.u32 %v2188, %v2184
        %v2190 = vrot.slane %v2189, 4
        %v2192 = vshll.u32 %v1979, 16
        %v2194 = vrot.slane %v2192, 5
        %v2195 = vsel %vm909, %v2190, %v2194
        %v2197 = vshrl.u32 %v1980, 16
        %v2199 = vrot.slane %v2197, 4
        %v2200 = vshll.u32 %v1980, 16
        %v2202 = vrot.slane %v2200, 5
        %v2203 = vor.u32 %v2199, %v2202
        %v2204 = vrot.slane %v2203, 4
        %v2206 = vshll.u32 %v1981, 16
        %v2208 = vrot.slane %v2206, 5
        %v2209 = vsel %vm909, %v2204, %v2208
        %v2210 = vshrl.u32 %v1981, 16
        %v2212 = vrot.slane %v2210, 4
        %v2213 = vor.u32 %v2212, %v2208
        %v2214 = vrot.slane %v2213, 4
        %v2216 = vshll.u32 %v1982, 16
        %v2218 = vrot.slane %v2216, 5
        %v2219 = vsel %vm909, %v2214, %v2218
        %v2221 = vshrl.u32 %v1983, 16
        %v2223 = vrot.slane %v2221, 4
        %v2224 = vshll.u32 %v1983, 16
        %v2226 = vrot.slane %v2224, 5
        %v2227 = vor.u32 %v2223, %v2226
        %v2228 = vrot.slane %v2227, 4
        %v2230 = vshll.u32 %v1984, 16
        %v2232 = vrot.slane %v2230, 5
        %v2233 = vsel %vm909, %v2228, %v2232
        %v2234 = vshrl.u32 %v1984, 16
        %v2236 = vrot.slane %v2234, 4
        %v2237 = vor.u32 %v2236, %v2232
        %v2238 = vrot.slane %v2237, 4
        %v2240 = vshll.u32 %v1985, 16
        %v2242 = vrot.slane %v2240, 5
        %v2243 = vsel %vm909, %v2238, %v2242
        %v2245 = vshrl.u32 %v1986, 16
        %v2247 = vrot.slane %v2245, 4
        %v2248 = vshll.u32 %v1986, 16
        %v2250 = vrot.slane %v2248, 5
        %v2251 = vor.u32 %v2247, %v2250
        %v2252 = vrot.slane %v2251, 4
        %v2254 = vshll.u32 %v1987, 16
        %v2256 = vrot.slane %v2254, 5
        %v2257 = vsel %vm909, %v2252, %v2256
        %v2258 = vshrl.u32 %v1987, 16
        %v2260 = vrot.slane %v2258, 4
        %v2261 = vor.u32 %v2260, %v2256
        %v2262 = vrot.slane %v2261, 4
        %v2264 = vshll.u32 %v1988, 16
        %v2266 = vrot.slane %v2264, 5
        %v2267 = vsel %vm909, %v2262, %v2266
        %v2269 = vshrl.u32 %v1989, 16
        %v2271 = vrot.slane %v2269, 4
        %v2272 = vshll.u32 %v1989, 16
        %v2274 = vrot.slane %v2272, 5
        %v2275 = vor.u32 %v2271, %v2274
        %v2276 = vrot.slane %v2275, 4
        %v2278 = vshll.u32 %v1990, 16
        %v2280 = vrot.slane %v2278, 5
        %v2281 = vsel %vm909, %v2276, %v2280
        %v2282 = vshrl.u32 %v1990, 16
        %v2284 = vrot.slane %v2282, 4
        %v2285 = vor.u32 %v2284, %v2280
        %v2286 = vrot.slane %v2285, 4
        %v2288 = vshll.u32 %v1991, 16
        %v2290 = vrot.slane %v2288, 5
        %v2291 = vsel %vm909, %v2286, %v2290
        %v2293 = vshrl.u32 %v1992, 16
        %v2295 = vrot.slane %v2293, 4
        %v2296 = vshll.u32 %v1992, 16
        %v2298 = vrot.slane %v2296, 5
        %v2299 = vor.u32 %v2295, %v2298
        %v2300 = vrot.slane %v2299, 4
        %v2302 = vshll.u32 %v1993, 16
        %v2304 = vrot.slane %v2302, 5
        %v2305 = vsel %vm909, %v2300, %v2304
        %v2306 = vshrl.u32 %v1993, 16
        %v2308 = vrot.slane %v2306, 4
        %v2309 = vor.u32 %v2308, %v2304
        %v2310 = vrot.slane %v2309, 4
        %v2312 = vshll.u32 %v1994, 16
        %v2314 = vrot.slane %v2312, 5
        %v2315 = vsel %vm909, %v2310, %v2314
        %v2317 = vshrl.u32 %v1995, 16
        %v2319 = vrot.slane %v2317, 4
        %v2320 = vshll.u32 %v1995, 16
        %v2322 = vrot.slane %v2320, 5
        %v2323 = vor.u32 %v2319, %v2322
        %v2324 = vrot.slane %v2323, 4
        %v2326 = vshll.u32 %v1996, 16
        %v2328 = vrot.slane %v2326, 5
        %v2329 = vsel %vm909, %v2324, %v2328
        %v2330 = vshrl.u32 %v1996, 16
        %v2332 = vrot.slane %v2330, 4
        %v2333 = vor.u32 %v2332, %v2328
        %v2334 = vrot.slane %v2333, 4
        %v2336 = vshll.u32 %v1997, 16
        %v2338 = vrot.slane %v2336, 5
        %v2339 = vsel %vm909, %v2334, %v2338
        %v2341 = vshrl.u32 %v1998, 16
        %v2343 = vrot.slane %v2341, 4
        %v2344 = vshll.u32 %v1998, 16
        %v2346 = vrot.slane %v2344, 5
        %v2347 = vor.u32 %v2343, %v2346
        %v2348 = vrot.slane %v2347, 4
        %v2350 = vshll.u32 %v1999, 16
        %v2352 = vrot.slane %v2350, 5
        %v2353 = vsel %vm909, %v2348, %v2352
        %v2354 = vshrl.u32 %v1999, 16
        %v2356 = vrot.slane %v2354, 4
        %v2357 = vor.u32 %v2356, %v2352
        %v2358 = vrot.slane %v2357, 4
        %v2360 = vshll.u32 %v2000, 16
        %v2362 = vrot.slane %v2360, 5
        %v2363 = vsel %vm909, %v2358, %v2362
        %v2365 = vshrl.u32 %v2001, 16
        %v2367 = vrot.slane %v2365, 4
        %v2368 = vshll.u32 %v2001, 16
        %v2370 = vrot.slane %v2368, 5
        %v2371 = vor.u32 %v2367, %v2370
        %v2372 = vrot.slane %v2371, 4
        %v2374 = vshll.u32 %v2002, 16
        %v2376 = vrot.slane %v2374, 5
        %v2377 = vsel %vm909, %v2372, %v2376
        %v2378 = vshrl.u32 %v2002, 16
        %v2380 = vrot.slane %v2378, 4
        %v2381 = vor.u32 %v2380, %v2376
        %v2382 = vrot.slane %v2381, 4
        %v2384 = vshll.u32 %v2003, 16
        %v2386 = vrot.slane %v2384, 5
        %v2387 = vsel %vm909, %v2382, %v2386
        %2388 = vrot.lane.b32.xlu0 %v2017, 12
        %v2389 = vpop.permute.xlu0 %2388
        %2390 = vrot.lane.b32.xlu0 %v2027, 12
        %v2391 = vpop.permute.xlu0 %2390
        %2392 = vrot.lane.b32.xlu0 %v2041, 12
        %v2393 = vpop.permute.xlu0 %2392
        %2394 = vrot.lane.b32.xlu0 %v2051, 12
        %v2395 = vpop.permute.xlu0 %2394
        %2396 = vrot.lane.b32.xlu0 %v2065, 12
        %v2397 = vpop.permute.xlu0 %2396
        %2398 = vrot.lane.b32.xlu0 %v2075, 12
        %v2399 = vpop.permute.xlu0 %2398
        %2400 = vrot.lane.b32.xlu0 %v2089, 12
        %v2401 = vpop.permute.xlu0 %2400
        %2402 = vrot.lane.b32.xlu0 %v2099, 12
        %v2403 = vpop.permute.xlu0 %2402
        %2404 = vrot.lane.b32.xlu0 %v2113, 12
        %v2405 = vpop.permute.xlu0 %2404
        %2406 = vrot.lane.b32.xlu0 %v2123, 12
        %v2407 = vpop.permute.xlu0 %2406
        %2408 = vrot.lane.b32.xlu0 %v2137, 12
        %v2409 = vpop.permute.xlu0 %2408
        %2410 = vrot.lane.b32.xlu0 %v2147, 12
        %v2411 = vpop.permute.xlu0 %2410
        %2412 = vrot.lane.b32.xlu0 %v2161, 12
        %v2413 = vpop.permute.xlu0 %2412
        %2414 = vrot.lane.b32.xlu0 %v2171, 12
        %v2415 = vpop.permute.xlu0 %2414
        %2416 = vrot.lane.b32.xlu0 %v2185, 12
        %v2417 = vpop.permute.xlu0 %2416
        %2418 = vrot.lane.b32.xlu0 %v2195, 12
        %v2419 = vpop.permute.xlu0 %2418
        %2420 = vrot.lane.b32.xlu0 %v2209, 12
        %v2421 = vpop.permute.xlu0 %2420
        %2422 = vrot.lane.b32.xlu0 %v2219, 12
        %v2423 = vpop.permute.xlu0 %2422
        %2424 = vrot.lane.b32.xlu0 %v2233, 12
        %v2425 = vpop.permute.xlu0 %2424
        %2426 = vrot.lane.b32.xlu0 %v2243, 12
        %v2427 = vpop.permute.xlu0 %2426
        %2428 = vrot.lane.b32.xlu0 %v2257, 12
        %v2429 = vpop.permute.xlu0 %2428
        %2430 = vrot.lane.b32.xlu0 %v2267, 12
        %v2431 = vpop.permute.xlu0 %2430
        %2432 = vrot.lane.b32.xlu0 %v2281, 12
        %v2433 = vpop.permute.xlu0 %2432
        %2434 = vrot.lane.b32.xlu0 %v2291, 12
        %v2435 = vpop.permute.xlu0 %2434
        %2436 = vrot.lane.b32.xlu0 %v2305, 12
        %v2437 = vpop.permute.xlu0 %2436
        %2438 = vrot.lane.b32.xlu0 %v2315, 12
        %v2439 = vpop.permute.xlu0 %2438
        %2440 = vrot.lane.b32.xlu0 %v2329, 12
        %v2441 = vpop.permute.xlu0 %2440
        %2442 = vrot.lane.b32.xlu0 %v2339, 12
        %v2443 = vpop.permute.xlu0 %2442
        %2444 = vrot.lane.b32.xlu0 %v2353, 12
        %v2445 = vpop.permute.xlu0 %2444
        %2446 = vrot.lane.b32.xlu0 %v2363, 12
        %v2447 = vpop.permute.xlu0 %2446
        %2448 = vrot.lane.b32.xlu0 %v2377, 12
        %v2449 = vpop.permute.xlu0 %2448
        %2450 = vrot.lane.b32.xlu0 %v2387, 12
        %v2451 = vpop.permute.xlu0 %2450
        %vm2484 = vcmask 117856
        %2485 = vst.msk [vmem:[#allocation3] sm:$0xf] %vm2484, %v2389
        %2486 = vst.msk [vmem:[#allocation3 + $0x4] sm:$0xf] %vm2484, %v2391
        %2487 = vst.msk [vmem:[#allocation3 + $0x8] sm:$0xf] %vm2484, %v2393
        %2488 = vst.msk [vmem:[#allocation3 + $0xc] sm:$0xf] %vm2484, %v2395
        %2489 = vst.msk [vmem:[#allocation3 + $0x10] sm:$0xf] %vm2484, %v2397
        %2490 = vst.msk [vmem:[#allocation3 + $0x14] sm:$0xf] %vm2484, %v2399
        %2491 = vst.msk [vmem:[#allocation3 + $0x18] sm:$0xf] %vm2484, %v2401
        %2492 = vst.msk [vmem:[#allocation3 + $0x1c] sm:$0xf] %vm2484, %v2403
        %2493 = vst.msk [vmem:[#allocation3 + $0x20] sm:$0xf] %vm2484, %v2405
        %2494 = vst.msk [vmem:[#allocation3 + $0x24] sm:$0xf] %vm2484, %v2407
        %2495 = vst.msk [vmem:[#allocation3 + $0x28] sm:$0xf] %vm2484, %v2409
        %2496 = vst.msk [vmem:[#allocation3 + $0x2c] sm:$0xf] %vm2484, %v2411
        %2497 = vst.msk [vmem:[#allocation3 + $0x30] sm:$0xf] %vm2484, %v2413
        %2498 = vst.msk [vmem:[#allocation3 + $0x34] sm:$0xf] %vm2484, %v2415
        %2499 = vst.msk [vmem:[#allocation3 + $0x38] sm:$0xf] %vm2484, %v2417
        %2500 = vst.msk [vmem:[#allocation3 + $0x3c] sm:$0xf] %vm2484, %v2419
        %2501 = vst.msk [vmem:[#allocation3 + $0x40] sm:$0xf] %vm2484, %v2421
        %2502 = vst.msk [vmem:[#allocation3 + $0x44] sm:$0xf] %vm2484, %v2423
        %2503 = vst.msk [vmem:[#allocation3 + $0x48] sm:$0xf] %vm2484, %v2425
        %2504 = vst.msk [vmem:[#allocation3 + $0x4c] sm:$0xf] %vm2484, %v2427
        %2505 = vst.msk [vmem:[#allocation3 + $0x50] sm:$0xf] %vm2484, %v2429
        %2506 = vst.msk [vmem:[#allocation3 + $0x54] sm:$0xf] %vm2484, %v2431
        %2507 = vst.msk [vmem:[#allocation3 + $0x58] sm:$0xf] %vm2484, %v2433
        %2508 = vst.msk [vmem:[#allocation3 + $0x5c] sm:$0xf] %vm2484, %v2435
        %2509 = vst.msk [vmem:[#allocation3 + $0x60] sm:$0xf] %vm2484, %v2437
        %2510 = vst.msk [vmem:[#allocation3 + $0x64] sm:$0xf] %vm2484, %v2439
        %2511 = vst.msk [vmem:[#allocation3 + $0x68] sm:$0xf] %vm2484, %v2441
        %2512 = vst.msk [vmem:[#allocation3 + $0x6c] sm:$0xf] %vm2484, %v2443
        %2513 = vst.msk [vmem:[#allocation3 + $0x70] sm:$0xf] %vm2484, %v2445
        %2514 = vst.msk [vmem:[#allocation3 + $0x74] sm:$0xf] %vm2484, %v2447
        %2515 = vst.msk [vmem:[#allocation3 + $0x78] sm:$0xf] %vm2484, %v2449
        %2516 = vst.msk [vmem:[#allocation3 + $0x7c] sm:$0xf] %vm2484, %v2451
        %v2517 = vld [vmem:[%s677] sm:$0xe]
        %v2518 = vld [vmem:[%s677 + $0x4] sm:$0xf]
        %v2519 = vld [vmem:[%s677 + $0x8] sm:$0x1]
        %v2520 = vld [vmem:[%s677 + $0xc] sm:$0xe]
        %v2521 = vld [vmem:[%s677 + $0x10] sm:$0xf]
        %v2522 = vld [vmem:[%s677 + $0x14] sm:$0x1]
        %v2523 = vld [vmem:[%s677 + $0x18] sm:$0xe]
        %v2524 = vld [vmem:[%s677 + $0x1c] sm:$0xf]
        %v2525 = vld [vmem:[%s677 + $0x20] sm:$0x1]
        %v2526 = vld [vmem:[%s677 + $0x24] sm:$0xe]
        %v2527 = vld [vmem:[%s677 + $0x28] sm:$0xf]
        %v2528 = vld [vmem:[%s677 + $0x2c] sm:$0x1]
        %v2529 = vld [vmem:[%s677 + $0x30] sm:$0xe]
        %v2530 = vld [vmem:[%s677 + $0x34] sm:$0xf]
        %v2531 = vld [vmem:[%s677 + $0x38] sm:$0x1]
        %v2532 = vld [vmem:[%s677 + $0x3c] sm:$0xe]
        %v2533 = vld [vmem:[%s677 + $0x40] sm:$0xf]
        %v2534 = vld [vmem:[%s677 + $0x44] sm:$0x1]
        %v2535 = vld [vmem:[%s677 + $0x48] sm:$0xe]
        %v2536 = vld [vmem:[%s677 + $0x4c] sm:$0xf]
        %v2537 = vld [vmem:[%s677 + $0x50] sm:$0x1]
        %v2538 = vld [vmem:[%s677 + $0x54] sm:$0xe]
        %v2539 = vld [vmem:[%s677 + $0x58] sm:$0xf]
        %v2540 = vld [vmem:[%s677 + $0x5c] sm:$0x1]
        %v2541 = vld [vmem:[%s677 + $0x60] sm:$0xe]
        %v2542 = vld [vmem:[%s677 + $0x64] sm:$0xf]
        %v2543 = vld [vmem:[%s677 + $0x68] sm:$0x1]
        %v2544 = vld [vmem:[%s677 + $0x6c] sm:$0xe]
        %v2545 = vld [vmem:[%s677 + $0x70] sm:$0xf]
        %v2546 = vld [vmem:[%s677 + $0x74] sm:$0x1]
        %v2547 = vld [vmem:[%s677 + $0x78] sm:$0xe]
        %v2548 = vld [vmem:[%s677 + $0x7c] sm:$0xf]
        %v2549 = vld [vmem:[%s677 + $0x80] sm:$0x1]
        %v2550 = vld [vmem:[%s677 + $0x84] sm:$0xe]
        %v2551 = vld [vmem:[%s677 + $0x88] sm:$0xf]
        %v2552 = vld [vmem:[%s677 + $0x8c] sm:$0x1]
        %v2553 = vld [vmem:[%s677 + $0x90] sm:$0xe]
        %v2554 = vld [vmem:[%s677 + $0x94] sm:$0xf]
        %v2555 = vld [vmem:[%s677 + $0x98] sm:$0x1]
        %v2556 = vld [vmem:[%s677 + $0x9c] sm:$0xe]
        %v2557 = vld [vmem:[%s677 + $0xa0] sm:$0xf]
        %v2558 = vld [vmem:[%s677 + $0xa4] sm:$0x1]
        %v2559 = vld [vmem:[%s677 + $0xa8] sm:$0xe]
        %v2560 = vld [vmem:[%s677 + $0xac] sm:$0xf]
        %v2561 = vld [vmem:[%s677 + $0xb0] sm:$0x1]
        %v2562 = vld [vmem:[%s677 + $0xb4] sm:$0xe]
        %v2563 = vld [vmem:[%s677 + $0xb8] sm:$0xf]
        %v2564 = vld [vmem:[%s677 + $0xbc] sm:$0x1]
        %v2613 = vrot.slane %v2517, 5
        %v2614 = vrot.slane %v2613, 4
        %v2615 = vrot.slane %v2518, 5
        %v2616 = vsel %vm1521, %v2614, %v2615
        %v2617 = vrot.slane %v2615, 4
        %v2618 = vrot.slane %v2519, 5
        %v2619 = vsel %vm1521, %v2617, %v2618
        %v2620 = vrot.slane %v2520, 5
        %v2621 = vrot.slane %v2620, 4
        %v2622 = vrot.slane %v2521, 5
        %v2623 = vsel %vm1521, %v2621, %v2622
        %v2624 = vrot.slane %v2622, 4
        %v2625 = vrot.slane %v2522, 5
        %v2626 = vsel %vm1521, %v2624, %v2625
        %v2627 = vrot.slane %v2523, 5
        %v2628 = vrot.slane %v2627, 4
        %v2629 = vrot.slane %v2524, 5
        %v2630 = vsel %vm1521, %v2628, %v2629
        %v2631 = vrot.slane %v2629, 4
        %v2632 = vrot.slane %v2525, 5
        %v2633 = vsel %vm1521, %v2631, %v2632
        %v2634 = vrot.slane %v2526, 5
        %v2635 = vrot.slane %v2634, 4
        %v2636 = vrot.slane %v2527, 5
        %v2637 = vsel %vm1521, %v2635, %v2636
        %v2638 = vrot.slane %v2636, 4
        %v2639 = vrot.slane %v2528, 5
        %v2640 = vsel %vm1521, %v2638, %v2639
        %v2641 = vrot.slane %v2529, 5
        %v2642 = vrot.slane %v2641, 4
        %v2643 = vrot.slane %v2530, 5
        %v2644 = vsel %vm1521, %v2642, %v2643
        %v2645 = vrot.slane %v2643, 4
        %v2646 = vrot.slane %v2531, 5
        %v2647 = vsel %vm1521, %v2645, %v2646
        %v2648 = vrot.slane %v2532, 5
        %v2649 = vrot.slane %v2648, 4
        %v2650 = vrot.slane %v2533, 5
        %v2651 = vsel %vm1521, %v2649, %v2650
        %v2652 = vrot.slane %v2650, 4
        %v2653 = vrot.slane %v2534, 5
        %v2654 = vsel %vm1521, %v2652, %v2653
        %v2655 = vrot.slane %v2535, 5
        %v2656 = vrot.slane %v2655, 4
        %v2657 = vrot.slane %v2536, 5
        %v2658 = vsel %vm1521, %v2656, %v2657
        %v2659 = vrot.slane %v2657, 4
        %v2660 = vrot.slane %v2537, 5
        %v2661 = vsel %vm1521, %v2659, %v2660
        %v2662 = vrot.slane %v2538, 5
        %v2663 = vrot.slane %v2662, 4
        %v2664 = vrot.slane %v2539, 5
        %v2665 = vsel %vm1521, %v2663, %v2664
        %v2666 = vrot.slane %v2664, 4
        %v2667 = vrot.slane %v2540, 5
        %v2668 = vsel %vm1521, %v2666, %v2667
        %v2669 = vrot.slane %v2541, 5
        %v2670 = vrot.slane %v2669, 4
        %v2671 = vrot.slane %v2542, 5
        %v2672 = vsel %vm1521, %v2670, %v2671
        %v2673 = vrot.slane %v2671, 4
        %v2674 = vrot.slane %v2543, 5
        %v2675 = vsel %vm1521, %v2673, %v2674
        %v2676 = vrot.slane %v2544, 5
        %v2677 = vrot.slane %v2676, 4
        %v2678 = vrot.slane %v2545, 5
        %v2679 = vsel %vm1521, %v2677, %v2678
        %v2680 = vrot.slane %v2678, 4
        %v2681 = vrot.slane %v2546, 5
        %v2682 = vsel %vm1521, %v2680, %v2681
        %v2683 = vrot.slane %v2547, 5
        %v2684 = vrot.slane %v2683, 4
        %v2685 = vrot.slane %v2548, 5
        %v2686 = vsel %vm1521, %v2684, %v2685
        %v2687 = vrot.slane %v2685, 4
        %v2688 = vrot.slane %v2549, 5
        %v2689 = vsel %vm1521, %v2687, %v2688
        %v2690 = vrot.slane %v2550, 5
        %v2691 = vrot.slane %v2690, 4
        %v2692 = vrot.slane %v2551, 5
        %v2693 = vsel %vm1521, %v2691, %v2692
        %v2694 = vrot.slane %v2692, 4
        %v2695 = vrot.slane %v2552, 5
        %v2696 = vsel %vm1521, %v2694, %v2695
        %v2697 = vrot.slane %v2553, 5
        %v2698 = vrot.slane %v2697, 4
        %v2699 = vrot.slane %v2554, 5
        %v2700 = vsel %vm1521, %v2698, %v2699
        %v2701 = vrot.slane %v2699, 4
        %v2702 = vrot.slane %v2555, 5
        %v2703 = vsel %vm1521, %v2701, %v2702
        %v2704 = vrot.slane %v2556, 5
        %v2705 = vrot.slane %v2704, 4
        %v2706 = vrot.slane %v2557, 5
        %v2707 = vsel %vm1521, %v2705, %v2706
        %v2708 = vrot.slane %v2706, 4
        %v2709 = vrot.slane %v2558, 5
        %v2710 = vsel %vm1521, %v2708, %v2709
        %v2711 = vrot.slane %v2559, 5
        %v2712 = vrot.slane %v2711, 4
        %v2713 = vrot.slane %v2560, 5
        %v2714 = vsel %vm1521, %v2712, %v2713
        %v2715 = vrot.slane %v2713, 4
        %v2716 = vrot.slane %v2561, 5
        %v2717 = vsel %vm1521, %v2715, %v2716
        %v2718 = vrot.slane %v2562, 5
        %v2719 = vrot.slane %v2718, 4
        %v2720 = vrot.slane %v2563, 5
        %v2721 = vsel %vm1521, %v2719, %v2720
        %v2722 = vrot.slane %v2720, 4
        %v2723 = vrot.slane %v2564, 5
        %v2724 = vsel %vm1521, %v2722, %v2723
        %2725 = vrot.lane.b32.xlu0 %v2616, 15
        %v2726 = vpop.permute.xlu0 %2725
        %2727 = vrot.lane.b32.xlu0 %v2619, 15
        %v2728 = vpop.permute.xlu0 %2727
        %2729 = vrot.lane.b32.xlu0 %v2623, 15
        %v2730 = vpop.permute.xlu0 %2729
        %2731 = vrot.lane.b32.xlu0 %v2626, 15
        %v2732 = vpop.permute.xlu0 %2731
        %2733 = vrot.lane.b32.xlu0 %v2630, 15
        %v2734 = vpop.permute.xlu0 %2733
        %2735 = vrot.lane.b32.xlu0 %v2633, 15
        %v2736 = vpop.permute.xlu0 %2735
        %2737 = vrot.lane.b32.xlu0 %v2637, 15
        %v2738 = vpop.permute.xlu0 %2737
        %2739 = vrot.lane.b32.xlu0 %v2640, 15
        %v2740 = vpop.permute.xlu0 %2739
        %2741 = vrot.lane.b32.xlu0 %v2644, 15
        %v2742 = vpop.permute.xlu0 %2741
        %2743 = vrot.lane.b32.xlu0 %v2647, 15
        %v2744 = vpop.permute.xlu0 %2743
        %2745 = vrot.lane.b32.xlu0 %v2651, 15
        %v2746 = vpop.permute.xlu0 %2745
        %2747 = vrot.lane.b32.xlu0 %v2654, 15
        %v2748 = vpop.permute.xlu0 %2747
        %2749 = vrot.lane.b32.xlu0 %v2658, 15
        %v2750 = vpop.permute.xlu0 %2749
        %2751 = vrot.lane.b32.xlu0 %v2661, 15
        %v2752 = vpop.permute.xlu0 %2751
        %2753 = vrot.lane.b32.xlu0 %v2665, 15
        %v2754 = vpop.permute.xlu0 %2753
        %2755 = vrot.lane.b32.xlu0 %v2668, 15
        %v2756 = vpop.permute.xlu0 %2755
        %2757 = vrot.lane.b32.xlu0 %v2672, 15
        %v2758 = vpop.permute.xlu0 %2757
        %2759 = vrot.lane.b32.xlu0 %v2675, 15
        %v2760 = vpop.permute.xlu0 %2759
        %2761 = vrot.lane.b32.xlu0 %v2679, 15
        %v2762 = vpop.permute.xlu0 %2761
        %2763 = vrot.lane.b32.xlu0 %v2682, 15
        %v2764 = vpop.permute.xlu0 %2763
        %2765 = vrot.lane.b32.xlu0 %v2686, 15
        %v2766 = vpop.permute.xlu0 %2765
        %2767 = vrot.lane.b32.xlu0 %v2689, 15
        %v2768 = vpop.permute.xlu0 %2767
        %2769 = vrot.lane.b32.xlu0 %v2693, 15
        %v2770 = vpop.permute.xlu0 %2769
        %2771 = vrot.lane.b32.xlu0 %v2696, 15
        %v2772 = vpop.permute.xlu0 %2771
        %2773 = vrot.lane.b32.xlu0 %v2700, 15
        %v2774 = vpop.permute.xlu0 %2773
        %2775 = vrot.lane.b32.xlu0 %v2703, 15
        %v2776 = vpop.permute.xlu0 %2775
        %2777 = vrot.lane.b32.xlu0 %v2707, 15
        %v2778 = vpop.permute.xlu0 %2777
        %2779 = vrot.lane.b32.xlu0 %v2710, 15
        %v2780 = vpop.permute.xlu0 %2779
        %2781 = vrot.lane.b32.xlu0 %v2714, 15
        %v2782 = vpop.permute.xlu0 %2781
        %2783 = vrot.lane.b32.xlu0 %v2717, 15
        %v2784 = vpop.permute.xlu0 %2783
        %2785 = vrot.lane.b32.xlu0 %v2721, 15
        %v2786 = vpop.permute.xlu0 %2785
        %2787 = vrot.lane.b32.xlu0 %v2724, 15
        %v2788 = vpop.permute.xlu0 %2787
        %vm2821 = vcmask 142456
        %2822 = vst.msk [vmem:[#allocation3] sm:$0xf] %vm2821, %v2726
        %2823 = vst.msk [vmem:[#allocation3 + $0x4] sm:$0xf] %vm2821, %v2728
        %2824 = vst.msk [vmem:[#allocation3 + $0x8] sm:$0xf] %vm2821, %v2730
        %2825 = vst.msk [vmem:[#allocation3 + $0xc] sm:$0xf] %vm2821, %v2732
        %2826 = vst.msk [vmem:[#allocation3 + $0x10] sm:$0xf] %vm2821, %v2734
        %2827 = vst.msk [vmem:[#allocation3 + $0x14] sm:$0xf] %vm2821, %v2736
        %2828 = vst.msk [vmem:[#allocation3 + $0x18] sm:$0xf] %vm2821, %v2738
        %2829 = vst.msk [vmem:[#allocation3 + $0x1c] sm:$0xf] %vm2821, %v2740
        %2830 = vst.msk [vmem:[#allocation3 + $0x20] sm:$0xf] %vm2821, %v2742
        %2831 = vst.msk [vmem:[#allocation3 + $0x24] sm:$0xf] %vm2821, %v2744
        %2832 = vst.msk [vmem:[#allocation3 + $0x28] sm:$0xf] %vm2821, %v2746
        %2833 = vst.msk [vmem:[#allocation3 + $0x2c] sm:$0xf] %vm2821, %v2748
        %2834 = vst.msk [vmem:[#allocation3 + $0x30] sm:$0xf] %vm2821, %v2750
        %2835 = vst.msk [vmem:[#allocation3 + $0x34] sm:$0xf] %vm2821, %v2752
        %2836 = vst.msk [vmem:[#allocation3 + $0x38] sm:$0xf] %vm2821, %v2754
        %2837 = vst.msk [vmem:[#allocation3 + $0x3c] sm:$0xf] %vm2821, %v2756
        %2838 = vst.msk [vmem:[#allocation3 + $0x40] sm:$0xf] %vm2821, %v2758
        %2839 = vst.msk [vmem:[#allocation3 + $0x44] sm:$0xf] %vm2821, %v2760
        %2840 = vst.msk [vmem:[#allocation3 + $0x48] sm:$0xf] %vm2821, %v2762
        %2841 = vst.msk [vmem:[#allocation3 + $0x4c] sm:$0xf] %vm2821, %v2764
        %2842 = vst.msk [vmem:[#allocation3 + $0x50] sm:$0xf] %vm2821, %v2766
        %2843 = vst.msk [vmem:[#allocation3 + $0x54] sm:$0xf] %vm2821, %v2768
        %2844 = vst.msk [vmem:[#allocation3 + $0x58] sm:$0xf] %vm2821, %v2770
        %2845 = vst.msk [vmem:[#allocation3 + $0x5c] sm:$0xf] %vm2821, %v2772
        %2846 = vst.msk [vmem:[#allocation3 + $0x60] sm:$0xf] %vm2821, %v2774
        %2847 = vst.msk [vmem:[#allocation3 + $0x64] sm:$0xf] %vm2821, %v2776
        %2848 = vst.msk [vmem:[#allocation3 + $0x68] sm:$0xf] %vm2821, %v2778
        %2849 = vst.msk [vmem:[#allocation3 + $0x6c] sm:$0xf] %vm2821, %v2780
        %2850 = vst.msk [vmem:[#allocation3 + $0x70] sm:$0xf] %vm2821, %v2782
        %2851 = vst.msk [vmem:[#allocation3 + $0x74] sm:$0xf] %vm2821, %v2784
        %2852 = vst.msk [vmem:[#allocation3 + $0x78] sm:$0xf] %vm2821, %v2786
        %2853 = vst.msk [vmem:[#allocation3 + $0x7c] sm:$0xf] %vm2821, %v2788
        %s2854 = scalar_lea.vmem [#allocation2], 24
        %v2855 = vld [vmem:[%s2854] sm:$0xf]
        %v2856 = vld [vmem:[%s2854 + $0x4] sm:$0xf]
        %v2857 = vld [vmem:[%s2854 + $0xc] sm:$0xf]
        %v2858 = vld [vmem:[%s2854 + $0x10] sm:$0xf]
        %v2859 = vld [vmem:[%s2854 + $0x18] sm:$0xf]
        %v2860 = vld [vmem:[%s2854 + $0x1c] sm:$0xf]
        %v2861 = vld [vmem:[%s2854 + $0x24] sm:$0xf]
        %v2862 = vld [vmem:[%s2854 + $0x28] sm:$0xf]
        %v2863 = vld [vmem:[%s2854 + $0x30] sm:$0xf]
        %v2864 = vld [vmem:[%s2854 + $0x34] sm:$0xf]
        %v2865 = vld [vmem:[%s2854 + $0x3c] sm:$0xf]
        %v2866 = vld [vmem:[%s2854 + $0x40] sm:$0xf]
        %v2867 = vld [vmem:[%s2854 + $0x48] sm:$0xf]
        %v2868 = vld [vmem:[%s2854 + $0x4c] sm:$0xf]
        %v2869 = vld [vmem:[%s2854 + $0x54] sm:$0xf]
        %v2870 = vld [vmem:[%s2854 + $0x58] sm:$0xf]
        %v2871 = vld [vmem:[%s2854 + $0x60] sm:$0xf]
        %v2872 = vld [vmem:[%s2854 + $0x64] sm:$0xf]
        %v2873 = vld [vmem:[%s2854 + $0x6c] sm:$0xf]
        %v2874 = vld [vmem:[%s2854 + $0x70] sm:$0xf]
        %v2875 = vld [vmem:[%s2854 + $0x78] sm:$0xf]
        %v2876 = vld [vmem:[%s2854 + $0x7c] sm:$0xf]
        %v2877 = vld [vmem:[%s2854 + $0x84] sm:$0xf]
        %v2878 = vld [vmem:[%s2854 + $0x88] sm:$0xf]
        %v2879 = vld [vmem:[%s2854 + $0x90] sm:$0xf]
        %v2880 = vld [vmem:[%s2854 + $0x94] sm:$0xf]
        %v2881 = vld [vmem:[%s2854 + $0x9c] sm:$0xf]
        %v2882 = vld [vmem:[%s2854 + $0xa0] sm:$0xf]
        %v2883 = vld [vmem:[%s2854 + $0xa8] sm:$0xf]
        %v2884 = vld [vmem:[%s2854 + $0xac] sm:$0xf]
        %v2885 = vld [vmem:[%s2854 + $0xb4] sm:$0xf]
        %v2886 = vld [vmem:[%s2854 + $0xb8] sm:$0xf]
        %2919 = vrot.lane.b32.xlu0 %v2855, 18
        %v2920 = vpop.permute.xlu0 %2919
        %2921 = vrot.lane.b32.xlu0 %v2856, 18
        %v2922 = vpop.permute.xlu0 %2921
        %2923 = vrot.lane.b32.xlu0 %v2857, 18
        %v2924 = vpop.permute.xlu0 %2923
        %2925 = vrot.lane.b32.xlu0 %v2858, 18
        %v2926 = vpop.permute.xlu0 %2925
        %2927 = vrot.lane.b32.xlu0 %v2859, 18
        %v2928 = vpop.permute.xlu0 %2927
        %2929 = vrot.lane.b32.xlu0 %v2860, 18
        %v2930 = vpop.permute.xlu0 %2929
        %2931 = vrot.lane.b32.xlu0 %v2861, 18
        %v2932 = vpop.permute.xlu0 %2931
        %2933 = vrot.lane.b32.xlu0 %v2862, 18
        %v2934 = vpop.permute.xlu0 %2933
        %2935 = vrot.lane.b32.xlu0 %v2863, 18
        %v2936 = vpop.permute.xlu0 %2935
        %2937 = vrot.lane.b32.xlu0 %v2864, 18
        %v2938 = vpop.permute.xlu0 %2937
        %2939 = vrot.lane.b32.xlu0 %v2865, 18
        %v2940 = vpop.permute.xlu0 %2939
        %2941 = vrot.lane.b32.xlu0 %v2866, 18
        %v2942 = vpop.permute.xlu0 %2941
        %2943 = vrot.lane.b32.xlu0 %v2867, 18
        %v2944 = vpop.permute.xlu0 %2943
        %2945 = vrot.lane.b32.xlu0 %v2868, 18
        %v2946 = vpop.permute.xlu0 %2945
        %2947 = vrot.lane.b32.xlu0 %v2869, 18
        %v2948 = vpop.permute.xlu0 %2947
        %2949 = vrot.lane.b32.xlu0 %v2870, 18
        %v2950 = vpop.permute.xlu0 %2949
        %2951 = vrot.lane.b32.xlu0 %v2871, 18
        %v2952 = vpop.permute.xlu0 %2951
        %2953 = vrot.lane.b32.xlu0 %v2872, 18
        %v2954 = vpop.permute.xlu0 %2953
        %2955 = vrot.lane.b32.xlu0 %v2873, 18
        %v2956 = vpop.permute.xlu0 %2955
        %2957 = vrot.lane.b32.xlu0 %v2874, 18
        %v2958 = vpop.permute.xlu0 %2957
        %2959 = vrot.lane.b32.xlu0 %v2875, 18
        %v2960 = vpop.permute.xlu0 %2959
        %2961 = vrot.lane.b32.xlu0 %v2876, 18
        %v2962 = vpop.permute.xlu0 %2961
        %2963 = vrot.lane.b32.xlu0 %v2877, 18
        %v2964 = vpop.permute.xlu0 %2963
        %2965 = vrot.lane.b32.xlu0 %v2878, 18
        %v2966 = vpop.permute.xlu0 %2965
        %2967 = vrot.lane.b32.xlu0 %v2879, 18
        %v2968 = vpop.permute.xlu0 %2967
        %2969 = vrot.lane.b32.xlu0 %v2880, 18
        %v2970 = vpop.permute.xlu0 %2969
        %2971 = vrot.lane.b32.xlu0 %v2881, 18
        %v2972 = vpop.permute.xlu0 %2971
        %2973 = vrot.lane.b32.xlu0 %v2882, 18
        %v2974 = vpop.permute.xlu0 %2973
        %2975 = vrot.lane.b32.xlu0 %v2883, 18
        %v2976 = vpop.permute.xlu0 %2975
        %2977 = vrot.lane.b32.xlu0 %v2884, 18
        %v2978 = vpop.permute.xlu0 %2977
        %2979 = vrot.lane.b32.xlu0 %v2885, 18
        %v2980 = vpop.permute.xlu0 %2979
        %2981 = vrot.lane.b32.xlu0 %v2886, 18
        %v2982 = vpop.permute.xlu0 %2981
        %vm3015 = vcmask 167056
        %3016 = vst.msk [vmem:[#allocation3] sm:$0xf] %vm3015, %v2920
        %3017 = vst.msk [vmem:[#allocation3 + $0x4] sm:$0xf] %vm3015, %v2922
        %3018 = vst.msk [vmem:[#allocation3 + $0x8] sm:$0xf] %vm3015, %v2924
        %3019 = vst.msk [vmem:[#allocation3 + $0xc] sm:$0xf] %vm3015, %v2926
        %3020 = vst.msk [vmem:[#allocation3 + $0x10] sm:$0xf] %vm3015, %v2928
        %3021 = vst.msk [vmem:[#allocation3 + $0x14] sm:$0xf] %vm3015, %v2930
        %3022 = vst.msk [vmem:[#allocation3 + $0x18] sm:$0xf] %vm3015, %v2932
        %3023 = vst.msk [vmem:[#allocation3 + $0x1c] sm:$0xf] %vm3015, %v2934
        %3024 = vst.msk [vmem:[#allocation3 + $0x20] sm:$0xf] %vm3015, %v2936
        %3025 = vst.msk [vmem:[#allocation3 + $0x24] sm:$0xf] %vm3015, %v2938
        %3026 = vst.msk [vmem:[#allocation3 + $0x28] sm:$0xf] %vm3015, %v2940
        %3027 = vst.msk [vmem:[#allocation3 + $0x2c] sm:$0xf] %vm3015, %v2942
        %3028 = vst.msk [vmem:[#allocation3 + $0x30] sm:$0xf] %vm3015, %v2944
        %3029 = vst.msk [vmem:[#allocation3 + $0x34] sm:$0xf] %vm3015, %v2946
        %3030 = vst.msk [vmem:[#allocation3 + $0x38] sm:$0xf] %vm3015, %v2948
        %3031 = vst.msk [vmem:[#allocation3 + $0x3c] sm:$0xf] %vm3015, %v2950
        %3032 = vst.msk [vmem:[#allocation3 + $0x40] sm:$0xf] %vm3015, %v2952
        %3033 = vst.msk [vmem:[#allocation3 + $0x44] sm:$0xf] %vm3015, %v2954
        %3034 = vst.msk [vmem:[#allocation3 + $0x48] sm:$0xf] %vm3015, %v2956
        %3035 = vst.msk [vmem:[#allocation3 + $0x4c] sm:$0xf] %vm3015, %v2958
        %3036 = vst.msk [vmem:[#allocation3 + $0x50] sm:$0xf] %vm3015, %v2960
        %3037 = vst.msk [vmem:[#allocation3 + $0x54] sm:$0xf] %vm3015, %v2962
        %3038 = vst.msk [vmem:[#allocation3 + $0x58] sm:$0xf] %vm3015, %v2964
        %3039 = vst.msk [vmem:[#allocation3 + $0x5c] sm:$0xf] %vm3015, %v2966
        %3040 = vst.msk [vmem:[#allocation3 + $0x60] sm:$0xf] %vm3015, %v2968
        %3041 = vst.msk [vmem:[#allocation3 + $0x64] sm:$0xf] %vm3015, %v2970
        %3042 = vst.msk [vmem:[#allocation3 + $0x68] sm:$0xf] %vm3015, %v2972
        %3043 = vst.msk [vmem:[#allocation3 + $0x6c] sm:$0xf] %vm3015, %v2974
        %3044 = vst.msk [vmem:[#allocation3 + $0x70] sm:$0xf] %vm3015, %v2976
        %3045 = vst.msk [vmem:[#allocation3 + $0x74] sm:$0xf] %vm3015, %v2978
        %3046 = vst.msk [vmem:[#allocation3 + $0x78] sm:$0xf] %vm3015, %v2980
        %3047 = vst.msk [vmem:[#allocation3 + $0x7c] sm:$0xf] %vm3015, %v2982
        %v3048 = vld [vmem:[%s2854] sm:$0xf]
        %v3049 = vld [vmem:[%s2854 + $0x4] sm:$0xf]
        %v3050 = vld [vmem:[%s2854 + $0x8] sm:$0x1]
        %v3051 = vld [vmem:[%s2854 + $0xc] sm:$0xf]
        %v3052 = vld [vmem:[%s2854 + $0x10] sm:$0xf]
        %v3053 = vld [vmem:[%s2854 + $0x14] sm:$0x1]
        %v3054 = vld [vmem:[%s2854 + $0x18] sm:$0xf]
        %v3055 = vld [vmem:[%s2854 + $0x1c] sm:$0xf]
        %v3056 = vld [vmem:[%s2854 + $0x20] sm:$0x1]
        %v3057 = vld [vmem:[%s2854 + $0x24] sm:$0xf]
        %v3058 = vld [vmem:[%s2854 + $0x28] sm:$0xf]
        %v3059 = vld [vmem:[%s2854 + $0x2c] sm:$0x1]
        %v3060 = vld [vmem:[%s2854 + $0x30] sm:$0xf]
        %v3061 = vld [vmem:[%s2854 + $0x34] sm:$0xf]
        %v3062 = vld [vmem:[%s2854 + $0x38] sm:$0x1]
        %v3063 = vld [vmem:[%s2854 + $0x3c] sm:$0xf]
        %v3064 = vld [vmem:[%s2854 + $0x40] sm:$0xf]
        %v3065 = vld [vmem:[%s2854 + $0x44] sm:$0x1]
        %v3066 = vld [vmem:[%s2854 + $0x48] sm:$0xf]
        %v3067 = vld [vmem:[%s2854 + $0x4c] sm:$0xf]
        %v3068 = vld [vmem:[%s2854 + $0x50] sm:$0x1]
        %v3069 = vld [vmem:[%s2854 + $0x54] sm:$0xf]
        %v3070 = vld [vmem:[%s2854 + $0x58] sm:$0xf]
        %v3071 = vld [vmem:[%s2854 + $0x5c] sm:$0x1]
        %v3072 = vld [vmem:[%s2854 + $0x60] sm:$0xf]
        %v3073 = vld [vmem:[%s2854 + $0x64] sm:$0xf]
        %v3074 = vld [vmem:[%s2854 + $0x68] sm:$0x1]
        %v3075 = vld [vmem:[%s2854 + $0x6c] sm:$0xf]
        %v3076 = vld [vmem:[%s2854 + $0x70] sm:$0xf]
        %v3077 = vld [vmem:[%s2854 + $0x74] sm:$0x1]
        %v3078 = vld [vmem:[%s2854 + $0x78] sm:$0xf]
        %v3079 = vld [vmem:[%s2854 + $0x7c] sm:$0xf]
        %v3080 = vld [vmem:[%s2854 + $0x80] sm:$0x1]
        %v3081 = vld [vmem:[%s2854 + $0x84] sm:$0xf]
        %v3082 = vld [vmem:[%s2854 + $0x88] sm:$0xf]
        %v3083 = vld [vmem:[%s2854 + $0x8c] sm:$0x1]
        %v3084 = vld [vmem:[%s2854 + $0x90] sm:$0xf]
        %v3085 = vld [vmem:[%s2854 + $0x94] sm:$0xf]
        %v3086 = vld [vmem:[%s2854 + $0x98] sm:$0x1]
        %v3087 = vld [vmem:[%s2854 + $0x9c] sm:$0xf]
        %v3088 = vld [vmem:[%s2854 + $0xa0] sm:$0xf]
        %v3089 = vld [vmem:[%s2854 + $0xa4] sm:$0x1]
        %v3090 = vld [vmem:[%s2854 + $0xa8] sm:$0xf]
        %v3091 = vld [vmem:[%s2854 + $0xac] sm:$0xf]
        %v3092 = vld [vmem:[%s2854 + $0xb0] sm:$0x1]
        %v3093 = vld [vmem:[%s2854 + $0xb4] sm:$0xf]
        %v3094 = vld [vmem:[%s2854 + $0xb8] sm:$0xf]
        %v3095 = vld [vmem:[%s2854 + $0xbc] sm:$0x1]
        %v3097 = vshrl.u32 %v3048, 16
        %v3099 = vrot.slane %v3097, 4
        %v3100 = vshll.u32 %v3048, 16
        %v3102 = vrot.slane %v3100, 5
        %v3103 = vor.u32 %v3099, %v3102
        %v3104 = vrot.slane %v3103, 4
        %v3106 = vshll.u32 %v3049, 16
        %v3108 = vrot.slane %v3106, 5
        %v3109 = vsel %vm909, %v3104, %v3108
        %v3110 = vshrl.u32 %v3049, 16
        %v3112 = vrot.slane %v3110, 4
        %v3113 = vor.u32 %v3112, %v3108
        %v3114 = vrot.slane %v3113, 4
        %v3116 = vshll.u32 %v3050, 16
        %v3118 = vrot.slane %v3116, 5
        %v3119 = vsel %vm909, %v3114, %v3118
        %v3121 = vshrl.u32 %v3051, 16
        %v3123 = vrot.slane %v3121, 4
        %v3124 = vshll.u32 %v3051, 16
        %v3126 = vrot.slane %v3124, 5
        %v3127 = vor.u32 %v3123, %v3126
        %v3128 = vrot.slane %v3127, 4
        %v3130 = vshll.u32 %v3052, 16
        %v3132 = vrot.slane %v3130, 5
        %v3133 = vsel %vm909, %v3128, %v3132
        %v3134 = vshrl.u32 %v3052, 16
        %v3136 = vrot.slane %v3134, 4
        %v3137 = vor.u32 %v3136, %v3132
        %v3138 = vrot.slane %v3137, 4
        %v3140 = vshll.u32 %v3053, 16
        %v3142 = vrot.slane %v3140, 5
        %v3143 = vsel %vm909, %v3138, %v3142
        %v3145 = vshrl.u32 %v3054, 16
        %v3147 = vrot.slane %v3145, 4
        %v3148 = vshll.u32 %v3054, 16
        %v3150 = vrot.slane %v3148, 5
        %v3151 = vor.u32 %v3147, %v3150
        %v3152 = vrot.slane %v3151, 4
        %v3154 = vshll.u32 %v3055, 16
        %v3156 = vrot.slane %v3154, 5
        %v3157 = vsel %vm909, %v3152, %v3156
        %v3158 = vshrl.u32 %v3055, 16
        %v3160 = vrot.slane %v3158, 4
        %v3161 = vor.u32 %v3160, %v3156
        %v3162 = vrot.slane %v3161, 4
        %v3164 = vshll.u32 %v3056, 16
        %v3166 = vrot.slane %v3164, 5
        %v3167 = vsel %vm909, %v3162, %v3166
        %v3169 = vshrl.u32 %v3057, 16
        %v3171 = vrot.slane %v3169, 4
        %v3172 = vshll.u32 %v3057, 16
        %v3174 = vrot.slane %v3172, 5
        %v3175 = vor.u32 %v3171, %v3174
        %v3176 = vrot.slane %v3175, 4
        %v3178 = vshll.u32 %v3058, 16
        %v3180 = vrot.slane %v3178, 5
        %v3181 = vsel %vm909, %v3176, %v3180
        %v3182 = vshrl.u32 %v3058, 16
        %v3184 = vrot.slane %v3182, 4
        %v3185 = vor.u32 %v3184, %v3180
        %v3186 = vrot.slane %v3185, 4
        %v3188 = vshll.u32 %v3059, 16
        %v3190 = vrot.slane %v3188, 5
        %v3191 = vsel %vm909, %v3186, %v3190
        %v3193 = vshrl.u32 %v3060, 16
        %v3195 = vrot.slane %v3193, 4
        %v3196 = vshll.u32 %v3060, 16
        %v3198 = vrot.slane %v3196, 5
        %v3199 = vor.u32 %v3195, %v3198
        %v3200 = vrot.slane %v3199, 4
        %v3202 = vshll.u32 %v3061, 16
        %v3204 = vrot.slane %v3202, 5
        %v3205 = vsel %vm909, %v3200, %v3204
        %v3206 = vshrl.u32 %v3061, 16
        %v3208 = vrot.slane %v3206, 4
        %v3209 = vor.u32 %v3208, %v3204
        %v3210 = vrot.slane %v3209, 4
        %v3212 = vshll.u32 %v3062, 16
        %v3214 = vrot.slane %v3212, 5
        %v3215 = vsel %vm909, %v3210, %v3214
        %v3217 = vshrl.u32 %v3063, 16
        %v3219 = vrot.slane %v3217, 4
        %v3220 = vshll.u32 %v3063, 16
        %v3222 = vrot.slane %v3220, 5
        %v3223 = vor.u32 %v3219, %v3222
        %v3224 = vrot.slane %v3223, 4
        %v3226 = vshll.u32 %v3064, 16
        %v3228 = vrot.slane %v3226, 5
        %v3229 = vsel %vm909, %v3224, %v3228
        %v3230 = vshrl.u32 %v3064, 16
        %v3232 = vrot.slane %v3230, 4
        %v3233 = vor.u32 %v3232, %v3228
        %v3234 = vrot.slane %v3233, 4
        %v3236 = vshll.u32 %v3065, 16
        %v3238 = vrot.slane %v3236, 5
        %v3239 = vsel %vm909, %v3234, %v3238
        %v3241 = vshrl.u32 %v3066, 16
        %v3243 = vrot.slane %v3241, 4
        %v3244 = vshll.u32 %v3066, 16
        %v3246 = vrot.slane %v3244, 5
        %v3247 = vor.u32 %v3243, %v3246
        %v3248 = vrot.slane %v3247, 4
        %v3250 = vshll.u32 %v3067, 16
        %v3252 = vrot.slane %v3250, 5
        %v3253 = vsel %vm909, %v3248, %v3252
        %v3254 = vshrl.u32 %v3067, 16
        %v3256 = vrot.slane %v3254, 4
        %v3257 = vor.u32 %v3256, %v3252
        %v3258 = vrot.slane %v3257, 4
        %v3260 = vshll.u32 %v3068, 16
        %v3262 = vrot.slane %v3260, 5
        %v3263 = vsel %vm909, %v3258, %v3262
        %v3265 = vshrl.u32 %v3069, 16
        %v3267 = vrot.slane %v3265, 4
        %v3268 = vshll.u32 %v3069, 16
        %v3270 = vrot.slane %v3268, 5
        %v3271 = vor.u32 %v3267, %v3270
        %v3272 = vrot.slane %v3271, 4
        %v3274 = vshll.u32 %v3070, 16
        %v3276 = vrot.slane %v3274, 5
        %v3277 = vsel %vm909, %v3272, %v3276
        %v3278 = vshrl.u32 %v3070, 16
        %v3280 = vrot.slane %v3278, 4
        %v3281 = vor.u32 %v3280, %v3276
        %v3282 = vrot.slane %v3281, 4
        %v3284 = vshll.u32 %v3071, 16
        %v3286 = vrot.slane %v3284, 5
        %v3287 = vsel %vm909, %v3282, %v3286
        %v3289 = vshrl.u32 %v3072, 16
        %v3291 = vrot.slane %v3289, 4
        %v3292 = vshll.u32 %v3072, 16
        %v3294 = vrot.slane %v3292, 5
        %v3295 = vor.u32 %v3291, %v3294
        %v3296 = vrot.slane %v3295, 4
        %v3298 = vshll.u32 %v3073, 16
        %v3300 = vrot.slane %v3298, 5
        %v3301 = vsel %vm909, %v3296, %v3300
        %v3302 = vshrl.u32 %v3073, 16
        %v3304 = vrot.slane %v3302, 4
        %v3305 = vor.u32 %v3304, %v3300
        %v3306 = vrot.slane %v3305, 4
        %v3308 = vshll.u32 %v3074, 16
        %v3310 = vrot.slane %v3308, 5
        %v3311 = vsel %vm909, %v3306, %v3310
        %v3313 = vshrl.u32 %v3075, 16
        %v3315 = vrot.slane %v3313, 4
        %v3316 = vshll.u32 %v3075, 16
        %v3318 = vrot.slane %v3316, 5
        %v3319 = vor.u32 %v3315, %v3318
        %v3320 = vrot.slane %v3319, 4
        %v3322 = vshll.u32 %v3076, 16
        %v3324 = vrot.slane %v3322, 5
        %v3325 = vsel %vm909, %v3320, %v3324
        %v3326 = vshrl.u32 %v3076, 16
        %v3328 = vrot.slane %v3326, 4
        %v3329 = vor.u32 %v3328, %v3324
        %v3330 = vrot.slane %v3329, 4
        %v3332 = vshll.u32 %v3077, 16
        %v3334 = vrot.slane %v3332, 5
        %v3335 = vsel %vm909, %v3330, %v3334
        %v3337 = vshrl.u32 %v3078, 16
        %v3339 = vrot.slane %v3337, 4
        %v3340 = vshll.u32 %v3078, 16
        %v3342 = vrot.slane %v3340, 5
        %v3343 = vor.u32 %v3339, %v3342
        %v3344 = vrot.slane %v3343, 4
        %v3346 = vshll.u32 %v3079, 16
        %v3348 = vrot.slane %v3346, 5
        %v3349 = vsel %vm909, %v3344, %v3348
        %v3350 = vshrl.u32 %v3079, 16
        %v3352 = vrot.slane %v3350, 4
        %v3353 = vor.u32 %v3352, %v3348
        %v3354 = vrot.slane %v3353, 4
        %v3356 = vshll.u32 %v3080, 16
        %v3358 = vrot.slane %v3356, 5
        %v3359 = vsel %vm909, %v3354, %v3358
        %v3361 = vshrl.u32 %v3081, 16
        %v3363 = vrot.slane %v3361, 4
        %v3364 = vshll.u32 %v3081, 16
        %v3366 = vrot.slane %v3364, 5
        %v3367 = vor.u32 %v3363, %v3366
        %v3368 = vrot.slane %v3367, 4
        %v3370 = vshll.u32 %v3082, 16
        %v3372 = vrot.slane %v3370, 5
        %v3373 = vsel %vm909, %v3368, %v3372
        %v3374 = vshrl.u32 %v3082, 16
        %v3376 = vrot.slane %v3374, 4
        %v3377 = vor.u32 %v3376, %v3372
        %v3378 = vrot.slane %v3377, 4
        %v3380 = vshll.u32 %v3083, 16
        %v3382 = vrot.slane %v3380, 5
        %v3383 = vsel %vm909, %v3378, %v3382
        %v3385 = vshrl.u32 %v3084, 16
        %v3387 = vrot.slane %v3385, 4
        %v3388 = vshll.u32 %v3084, 16
        %v3390 = vrot.slane %v3388, 5
        %v3391 = vor.u32 %v3387, %v3390
        %v3392 = vrot.slane %v3391, 4
        %v3394 = vshll.u32 %v3085, 16
        %v3396 = vrot.slane %v3394, 5
        %v3397 = vsel %vm909, %v3392, %v3396
        %v3398 = vshrl.u32 %v3085, 16
        %v3400 = vrot.slane %v3398, 4
        %v3401 = vor.u32 %v3400, %v3396
        %v3402 = vrot.slane %v3401, 4
        %v3404 = vshll.u32 %v3086, 16
        %v3406 = vrot.slane %v3404, 5
        %v3407 = vsel %vm909, %v3402, %v3406
        %v3409 = vshrl.u32 %v3087, 16
        %v3411 = vrot.slane %v3409, 4
        %v3412 = vshll.u32 %v3087, 16
        %v3414 = vrot.slane %v3412, 5
        %v3415 = vor.u32 %v3411, %v3414
        %v3416 = vrot.slane %v3415, 4
        %v3418 = vshll.u32 %v3088, 16
        %v3420 = vrot.slane %v3418, 5
        %v3421 = vsel %vm909, %v3416, %v3420
        %v3422 = vshrl.u32 %v3088, 16
        %v3424 = vrot.slane %v3422, 4
        %v3425 = vor.u32 %v3424, %v3420
        %v3426 = vrot.slane %v3425, 4
        %v3428 = vshll.u32 %v3089, 16
        %v3430 = vrot.slane %v3428, 5
        %v3431 = vsel %vm909, %v3426, %v3430
        %v3433 = vshrl.u32 %v3090, 16
        %v3435 = vrot.slane %v3433, 4
        %v3436 = vshll.u32 %v3090, 16
        %v3438 = vrot.slane %v3436, 5
        %v3439 = vor.u32 %v3435, %v3438
        %v3440 = vrot.slane %v3439, 4
        %v3442 = vshll.u32 %v3091, 16
        %v3444 = vrot.slane %v3442, 5
        %v3445 = vsel %vm909, %v3440, %v3444
        %v3446 = vshrl.u32 %v3091, 16
        %v3448 = vrot.slane %v3446, 4
        %v3449 = vor.u32 %v3448, %v3444
        %v3450 = vrot.slane %v3449, 4
        %v3452 = vshll.u32 %v3092, 16
        %v3454 = vrot.slane %v3452, 5
        %v3455 = vsel %vm909, %v3450, %v3454
        %v3457 = vshrl.u32 %v3093, 16
        %v3459 = vrot.slane %v3457, 4
        %v3460 = vshll.u32 %v3093, 16
        %v3462 = vrot.slane %v3460, 5
        %v3463 = vor.u32 %v3459, %v3462
        %v3464 = vrot.slane %v3463, 4
        %v3466 = vshll.u32 %v3094, 16
        %v3468 = vrot.slane %v3466, 5
        %v3469 = vsel %vm909, %v3464, %v3468
        %v3470 = vshrl.u32 %v3094, 16
        %v3472 = vrot.slane %v3470, 4
        %v3473 = vor.u32 %v3472, %v3468
        %v3474 = vrot.slane %v3473, 4
        %v3476 = vshll.u32 %v3095, 16
        %v3478 = vrot.slane %v3476, 5
        %v3479 = vsel %vm909, %v3474, %v3478
        %3480 = vrot.lane.b32.xlu0 %v3109, 21
        %v3481 = vpop.permute.xlu0 %3480
        %3482 = vrot.lane.b32.xlu0 %v3119, 21
        %v3483 = vpop.permute.xlu0 %3482
        %3484 = vrot.lane.b32.xlu0 %v3133, 21
        %v3485 = vpop.permute.xlu0 %3484
        %3486 = vrot.lane.b32.xlu0 %v3143, 21
        %v3487 = vpop.permute.xlu0 %3486
        %3488 = vrot.lane.b32.xlu0 %v3157, 21
        %v3489 = vpop.permute.xlu0 %3488
        %3490 = vrot.lane.b32.xlu0 %v3167, 21
        %v3491 = vpop.permute.xlu0 %3490
        %3492 = vrot.lane.b32.xlu0 %v3181, 21
        %v3493 = vpop.permute.xlu0 %3492
        %3494 = vrot.lane.b32.xlu0 %v3191, 21
        %v3495 = vpop.permute.xlu0 %3494
        %3496 = vrot.lane.b32.xlu0 %v3205, 21
        %v3497 = vpop.permute.xlu0 %3496
        %3498 = vrot.lane.b32.xlu0 %v3215, 21
        %v3499 = vpop.permute.xlu0 %3498
        %3500 = vrot.lane.b32.xlu0 %v3229, 21
        %v3501 = vpop.permute.xlu0 %3500
        %3502 = vrot.lane.b32.xlu0 %v3239, 21
        %v3503 = vpop.permute.xlu0 %3502
        %3504 = vrot.lane.b32.xlu0 %v3253, 21
        %v3505 = vpop.permute.xlu0 %3504
        %3506 = vrot.lane.b32.xlu0 %v3263, 21
        %v3507 = vpop.permute.xlu0 %3506
        %3508 = vrot.lane.b32.xlu0 %v3277, 21
        %v3509 = vpop.permute.xlu0 %3508
        %3510 = vrot.lane.b32.xlu0 %v3287, 21
        %v3511 = vpop.permute.xlu0 %3510
        %3512 = vrot.lane.b32.xlu0 %v3301, 21
        %v3513 = vpop.permute.xlu0 %3512
        %3514 = vrot.lane.b32.xlu0 %v3311, 21
        %v3515 = vpop.permute.xlu0 %3514
        %3516 = vrot.lane.b32.xlu0 %v3325, 21
        %v3517 = vpop.permute.xlu0 %3516
        %3518 = vrot.lane.b32.xlu0 %v3335, 21
        %v3519 = vpop.permute.xlu0 %3518
        %3520 = vrot.lane.b32.xlu0 %v3349, 21
        %v3521 = vpop.permute.xlu0 %3520
        %3522 = vrot.lane.b32.xlu0 %v3359, 21
        %v3523 = vpop.permute.xlu0 %3522
        %3524 = vrot.lane.b32.xlu0 %v3373, 21
        %v3525 = vpop.permute.xlu0 %3524
        %3526 = vrot.lane.b32.xlu0 %v3383, 21
        %v3527 = vpop.permute.xlu0 %3526
        %3528 = vrot.lane.b32.xlu0 %v3397, 21
        %v3529 = vpop.permute.xlu0 %3528
        %3530 = vrot.lane.b32.xlu0 %v3407, 21
        %v3531 = vpop.permute.xlu0 %3530
        %3532 = vrot.lane.b32.xlu0 %v3421, 21
        %v3533 = vpop.permute.xlu0 %3532
        %3534 = vrot.lane.b32.xlu0 %v3431, 21
        %v3535 = vpop.permute.xlu0 %3534
        %3536 = vrot.lane.b32.xlu0 %v3445, 21
        %v3537 = vpop.permute.xlu0 %3536
        %3538 = vrot.lane.b32.xlu0 %v3455, 21
        %v3539 = vpop.permute.xlu0 %3538
        %3540 = vrot.lane.b32.xlu0 %v3469, 21
        %v3541 = vpop.permute.xlu0 %3540
        %3542 = vrot.lane.b32.xlu0 %v3479, 21
        %v3543 = vpop.permute.xlu0 %3542
        %vm3576 = vcmask 191656
        %3577 = vst.msk [vmem:[#allocation3] sm:$0xf] %vm3576, %v3481
        %3578 = vst.msk [vmem:[#allocation3 + $0x4] sm:$0xf] %vm3576, %v3483
        %3579 = vst.msk [vmem:[#allocation3 + $0x8] sm:$0xf] %vm3576, %v3485
        %3580 = vst.msk [vmem:[#allocation3 + $0xc] sm:$0xf] %vm3576, %v3487
        %3581 = vst.msk [vmem:[#allocation3 + $0x10] sm:$0xf] %vm3576, %v3489
        %3582 = vst.msk [vmem:[#allocation3 + $0x14] sm:$0xf] %vm3576, %v3491
        %3583 = vst.msk [vmem:[#allocation3 + $0x18] sm:$0xf] %vm3576, %v3493
        %3584 = vst.msk [vmem:[#allocation3 + $0x1c] sm:$0xf] %vm3576, %v3495
        %3585 = vst.msk [vmem:[#allocation3 + $0x20] sm:$0xf] %vm3576, %v3497
        %3586 = vst.msk [vmem:[#allocation3 + $0x24] sm:$0xf] %vm3576, %v3499
        %3587 = vst.msk [vmem:[#allocation3 + $0x28] sm:$0xf] %vm3576, %v3501
        %3588 = vst.msk [vmem:[#allocation3 + $0x2c] sm:$0xf] %vm3576, %v3503
        %3589 = vst.msk [vmem:[#allocation3 + $0x30] sm:$0xf] %vm3576, %v3505
        %3590 = vst.msk [vmem:[#allocation3 + $0x34] sm:$0xf] %vm3576, %v3507
        %3591 = vst.msk [vmem:[#allocation3 + $0x38] sm:$0xf] %vm3576, %v3509
        %3592 = vst.msk [vmem:[#allocation3 + $0x3c] sm:$0xf] %vm3576, %v3511
        %3593 = vst.msk [vmem:[#allocation3 + $0x40] sm:$0xf] %vm3576, %v3513
        %3594 = vst.msk [vmem:[#allocation3 + $0x44] sm:$0xf] %vm3576, %v3515
        %3595 = vst.msk [vmem:[#allocation3 + $0x48] sm:$0xf] %vm3576, %v3517
        %3596 = vst.msk [vmem:[#allocation3 + $0x4c] sm:$0xf] %vm3576, %v3519
        %3597 = vst.msk [vmem:[#allocation3 + $0x50] sm:$0xf] %vm3576, %v3521
        %3598 = vst.msk [vmem:[#allocation3 + $0x54] sm:$0xf] %vm3576, %v3523
        %3599 = vst.msk [vmem:[#allocation3 + $0x58] sm:$0xf] %vm3576, %v3525
        %3600 = vst.msk [vmem:[#allocation3 + $0x5c] sm:$0xf] %vm3576, %v3527
        %3601 = vst.msk [vmem:[#allocation3 + $0x60] sm:$0xf] %vm3576, %v3529
        %3602 = vst.msk [vmem:[#allocation3 + $0x64] sm:$0xf] %vm3576, %v3531
        %3603 = vst.msk [vmem:[#allocation3 + $0x68] sm:$0xf] %vm3576, %v3533
        %3604 = vst.msk [vmem:[#allocation3 + $0x6c] sm:$0xf] %vm3576, %v3535
        %3605 = vst.msk [vmem:[#allocation3 + $0x70] sm:$0xf] %vm3576, %v3537
        %3606 = vst.msk [vmem:[#allocation3 + $0x74] sm:$0xf] %vm3576, %v3539
        %3607 = vst.msk [vmem:[#allocation3 + $0x78] sm:$0xf] %vm3576, %v3541
        %3608 = vst.msk [vmem:[#allocation3 + $0x7c] sm:$0xf] %vm3576, %v3543
        %v3609 = vld [vmem:[%s2854] sm:$0xe]
        %v3610 = vld [vmem:[%s2854 + $0x4] sm:$0xf]
        %v3611 = vld [vmem:[%s2854 + $0x8] sm:$0x1]
        %v3612 = vld [vmem:[%s2854 + $0xc] sm:$0xe]
        %v3613 = vld [vmem:[%s2854 + $0x10] sm:$0xf]
        %v3614 = vld [vmem:[%s2854 + $0x14] sm:$0x1]
        %v3615 = vld [vmem:[%s2854 + $0x18] sm:$0xe]
        %v3616 = vld [vmem:[%s2854 + $0x1c] sm:$0xf]
        %v3617 = vld [vmem:[%s2854 + $0x20] sm:$0x1]
        %v3618 = vld [vmem:[%s2854 + $0x24] sm:$0xe]
        %v3619 = vld [vmem:[%s2854 + $0x28] sm:$0xf]
        %v3620 = vld [vmem:[%s2854 + $0x2c] sm:$0x1]
        %v3621 = vld [vmem:[%s2854 + $0x30] sm:$0xe]
        %v3622 = vld [vmem:[%s2854 + $0x34] sm:$0xf]
        %v3623 = vld [vmem:[%s2854 + $0x38] sm:$0x1]
        %v3624 = vld [vmem:[%s2854 + $0x3c] sm:$0xe]
        %v3625 = vld [vmem:[%s2854 + $0x40] sm:$0xf]
        %v3626 = vld [vmem:[%s2854 + $0x44] sm:$0x1]
        %v3627 = vld [vmem:[%s2854 + $0x48] sm:$0xe]
        %v3628 = vld [vmem:[%s2854 + $0x4c] sm:$0xf]
        %v3629 = vld [vmem:[%s2854 + $0x50] sm:$0x1]
        %v3630 = vld [vmem:[%s2854 + $0x54] sm:$0xe]
        %v3631 = vld [vmem:[%s2854 + $0x58] sm:$0xf]
        %v3632 = vld [vmem:[%s2854 + $0x5c] sm:$0x1]
        %v3633 = vld [vmem:[%s2854 + $0x60] sm:$0xe]
        %v3634 = vld [vmem:[%s2854 + $0x64] sm:$0xf]
        %v3635 = vld [vmem:[%s2854 + $0x68] sm:$0x1]
        %v3636 = vld [vmem:[%s2854 + $0x6c] sm:$0xe]
        %v3637 = vld [vmem:[%s2854 + $0x70] sm:$0xf]
        %v3638 = vld [vmem:[%s2854 + $0x74] sm:$0x1]
        %v3639 = vld [vmem:[%s2854 + $0x78] sm:$0xe]
        %v3640 = vld [vmem:[%s2854 + $0x7c] sm:$0xf]
        %v3641 = vld [vmem:[%s2854 + $0x80] sm:$0x1]
        %v3642 = vld [vmem:[%s2854 + $0x84] sm:$0xe]
        %v3643 = vld [vmem:[%s2854 + $0x88] sm:$0xf]
        %v3644 = vld [vmem:[%s2854 + $0x8c] sm:$0x1]
        %v3645 = vld [vmem:[%s2854 + $0x90] sm:$0xe]
        %v3646 = vld [vmem:[%s2854 + $0x94] sm:$0xf]
        %v3647 = vld [vmem:[%s2854 + $0x98] sm:$0x1]
        %v3648 = vld [vmem:[%s2854 + $0x9c] sm:$0xe]
        %v3649 = vld [vmem:[%s2854 + $0xa0] sm:$0xf]
        %v3650 = vld [vmem:[%s2854 + $0xa4] sm:$0x1]
        %v3651 = vld [vmem:[%s2854 + $0xa8] sm:$0xe]
        %v3652 = vld [vmem:[%s2854 + $0xac] sm:$0xf]
        %v3653 = vld [vmem:[%s2854 + $0xb0] sm:$0x1]
        %v3654 = vld [vmem:[%s2854 + $0xb4] sm:$0xe]
        %v3655 = vld [vmem:[%s2854 + $0xb8] sm:$0xf]
        %v3656 = vld [vmem:[%s2854 + $0xbc] sm:$0x1]
        %v3705 = vrot.slane %v3609, 5
        %v3706 = vrot.slane %v3705, 4
        %v3707 = vrot.slane %v3610, 5
        %v3708 = vsel %vm1521, %v3706, %v3707
        %v3709 = vrot.slane %v3707, 4
        %v3710 = vrot.slane %v3611, 5
        %v3711 = vsel %vm1521, %v3709, %v3710
        %v3712 = vrot.slane %v3612, 5
        %v3713 = vrot.slane %v3712, 4
        %v3714 = vrot.slane %v3613, 5
        %v3715 = vsel %vm1521, %v3713, %v3714
        %v3716 = vrot.slane %v3714, 4
        %v3717 = vrot.slane %v3614, 5
        %v3718 = vsel %vm1521, %v3716, %v3717
        %v3719 = vrot.slane %v3615, 5
        %v3720 = vrot.slane %v3719, 4
        %v3721 = vrot.slane %v3616, 5
        %v3722 = vsel %vm1521, %v3720, %v3721
        %v3723 = vrot.slane %v3721, 4
        %v3724 = vrot.slane %v3617, 5
        %v3725 = vsel %vm1521, %v3723, %v3724
        %v3726 = vrot.slane %v3618, 5
        %v3727 = vrot.slane %v3726, 4
        %v3728 = vrot.slane %v3619, 5
        %v3729 = vsel %vm1521, %v3727, %v3728
        %v3730 = vrot.slane %v3728, 4
        %v3731 = vrot.slane %v3620, 5
        %v3732 = vsel %vm1521, %v3730, %v3731
        %v3733 = vrot.slane %v3621, 5
        %v3734 = vrot.slane %v3733, 4
        %v3735 = vrot.slane %v3622, 5
        %v3736 = vsel %vm1521, %v3734, %v3735
        %v3737 = vrot.slane %v3735, 4
        %v3738 = vrot.slane %v3623, 5
        %v3739 = vsel %vm1521, %v3737, %v3738
        %v3740 = vrot.slane %v3624, 5
        %v3741 = vrot.slane %v3740, 4
        %v3742 = vrot.slane %v3625, 5
        %v3743 = vsel %vm1521, %v3741, %v3742
        %v3744 = vrot.slane %v3742, 4
        %v3745 = vrot.slane %v3626, 5
        %v3746 = vsel %vm1521, %v3744, %v3745
        %v3747 = vrot.slane %v3627, 5
        %v3748 = vrot.slane %v3747, 4
        %v3749 = vrot.slane %v3628, 5
        %v3750 = vsel %vm1521, %v3748, %v3749
        %v3751 = vrot.slane %v3749, 4
        %v3752 = vrot.slane %v3629, 5
        %v3753 = vsel %vm1521, %v3751, %v3752
        %v3754 = vrot.slane %v3630, 5
        %v3755 = vrot.slane %v3754, 4
        %v3756 = vrot.slane %v3631, 5
        %v3757 = vsel %vm1521, %v3755, %v3756
        %v3758 = vrot.slane %v3756, 4
        %v3759 = vrot.slane %v3632, 5
        %v3760 = vsel %vm1521, %v3758, %v3759
        %v3761 = vrot.slane %v3633, 5
        %v3762 = vrot.slane %v3761, 4
        %v3763 = vrot.slane %v3634, 5
        %v3764 = vsel %vm1521, %v3762, %v3763
        %v3765 = vrot.slane %v3763, 4
        %v3766 = vrot.slane %v3635, 5
        %v3767 = vsel %vm1521, %v3765, %v3766
        %v3768 = vrot.slane %v3636, 5
        %v3769 = vrot.slane %v3768, 4
        %v3770 = vrot.slane %v3637, 5
        %v3771 = vsel %vm1521, %v3769, %v3770
        %v3772 = vrot.slane %v3770, 4
        %v3773 = vrot.slane %v3638, 5
        %v3774 = vsel %vm1521, %v3772, %v3773
        %v3775 = vrot.slane %v3639, 5
        %v3776 = vrot.slane %v3775, 4
        %v3777 = vrot.slane %v3640, 5
        %v3778 = vsel %vm1521, %v3776, %v3777
        %v3779 = vrot.slane %v3777, 4
        %v3780 = vrot.slane %v3641, 5
        %v3781 = vsel %vm1521, %v3779, %v3780
        %v3782 = vrot.slane %v3642, 5
        %v3783 = vrot.slane %v3782, 4
        %v3784 = vrot.slane %v3643, 5
        %v3785 = vsel %vm1521, %v3783, %v3784
        %v3786 = vrot.slane %v3784, 4
        %v3787 = vrot.slane %v3644, 5
        %v3788 = vsel %vm1521, %v3786, %v3787
        %v3789 = vrot.slane %v3645, 5
        %v3790 = vrot.slane %v3789, 4
        %v3791 = vrot.slane %v3646, 5
        %v3792 = vsel %vm1521, %v3790, %v3791
        %v3793 = vrot.slane %v3791, 4
        %v3794 = vrot.slane %v3647, 5
        %v3795 = vsel %vm1521, %v3793, %v3794
        %v3796 = vrot.slane %v3648, 5
        %v3797 = vrot.slane %v3796, 4
        %v3798 = vrot.slane %v3649, 5
        %v3799 = vsel %vm1521, %v3797, %v3798
        %v3800 = vrot.slane %v3798, 4
        %v3801 = vrot.slane %v3650, 5
        %v3802 = vsel %vm1521, %v3800, %v3801
        %v3803 = vrot.slane %v3651, 5
        %v3804 = vrot.slane %v3803, 4
        %v3805 = vrot.slane %v3652, 5
        %v3806 = vsel %vm1521, %v3804, %v3805
        %v3807 = vrot.slane %v3805, 4
        %v3808 = vrot.slane %v3653, 5
        %v3809 = vsel %vm1521, %v3807, %v3808
        %v3810 = vrot.slane %v3654, 5
        %v3811 = vrot.slane %v3810, 4
        %v3812 = vrot.slane %v3655, 5
        %v3813 = vsel %vm1521, %v3811, %v3812
        %v3814 = vrot.slane %v3812, 4
        %v3815 = vrot.slane %v3656, 5
        %v3816 = vsel %vm1521, %v3814, %v3815
        %3817 = vrot.lane.b32.xlu0 %v3708, 24
        %v3818 = vpop.permute.xlu0 %3817
        %3819 = vrot.lane.b32.xlu0 %v3711, 24
        %v3820 = vpop.permute.xlu0 %3819
        %3821 = vrot.lane.b32.xlu0 %v3715, 24
        %v3822 = vpop.permute.xlu0 %3821
        %3823 = vrot.lane.b32.xlu0 %v3718, 24
        %v3824 = vpop.permute.xlu0 %3823
        %3825 = vrot.lane.b32.xlu0 %v3722, 24
        %v3826 = vpop.permute.xlu0 %3825
        %3827 = vrot.lane.b32.xlu0 %v3725, 24
        %v3828 = vpop.permute.xlu0 %3827
        %3829 = vrot.lane.b32.xlu0 %v3729, 24
        %v3830 = vpop.permute.xlu0 %3829
        %3831 = vrot.lane.b32.xlu0 %v3732, 24
        %v3832 = vpop.permute.xlu0 %3831
        %3833 = vrot.lane.b32.xlu0 %v3736, 24
        %v3834 = vpop.permute.xlu0 %3833
        %3835 = vrot.lane.b32.xlu0 %v3739, 24
        %v3836 = vpop.permute.xlu0 %3835
        %3837 = vrot.lane.b32.xlu0 %v3743, 24
        %v3838 = vpop.permute.xlu0 %3837
        %3839 = vrot.lane.b32.xlu0 %v3746, 24
        %v3840 = vpop.permute.xlu0 %3839
        %3841 = vrot.lane.b32.xlu0 %v3750, 24
        %v3842 = vpop.permute.xlu0 %3841
        %3843 = vrot.lane.b32.xlu0 %v3753, 24
        %v3844 = vpop.permute.xlu0 %3843
        %3845 = vrot.lane.b32.xlu0 %v3757, 24
        %v3846 = vpop.permute.xlu0 %3845
        %3847 = vrot.lane.b32.xlu0 %v3760, 24
        %v3848 = vpop.permute.xlu0 %3847
        %3849 = vrot.lane.b32.xlu0 %v3764, 24
        %v3850 = vpop.permute.xlu0 %3849
        %3851 = vrot.lane.b32.xlu0 %v3767, 24
        %v3852 = vpop.permute.xlu0 %3851
        %3853 = vrot.lane.b32.xlu0 %v3771, 24
        %v3854 = vpop.permute.xlu0 %3853
        %3855 = vrot.lane.b32.xlu0 %v3774, 24
        %v3856 = vpop.permute.xlu0 %3855
        %3857 = vrot.lane.b32.xlu0 %v3778, 24
        %v3858 = vpop.permute.xlu0 %3857
        %3859 = vrot.lane.b32.xlu0 %v3781, 24
        %v3860 = vpop.permute.xlu0 %3859
        %3861 = vrot.lane.b32.xlu0 %v3785, 24
        %v3862 = vpop.permute.xlu0 %3861
        %3863 = vrot.lane.b32.xlu0 %v3788, 24
        %v3864 = vpop.permute.xlu0 %3863
        %3865 = vrot.lane.b32.xlu0 %v3792, 24
        %v3866 = vpop.permute.xlu0 %3865
        %3867 = vrot.lane.b32.xlu0 %v3795, 24
        %v3868 = vpop.permute.xlu0 %3867
        %3869 = vrot.lane.b32.xlu0 %v3799, 24
        %v3870 = vpop.permute.xlu0 %3869
        %3871 = vrot.lane.b32.xlu0 %v3802, 24
        %v3872 = vpop.permute.xlu0 %3871
        %3873 = vrot.lane.b32.xlu0 %v3806, 24
        %v3874 = vpop.permute.xlu0 %3873
        %3875 = vrot.lane.b32.xlu0 %v3809, 24
        %v3876 = vpop.permute.xlu0 %3875
        %3877 = vrot.lane.b32.xlu0 %v3813, 24
        %v3878 = vpop.permute.xlu0 %3877
        %3879 = vrot.lane.b32.xlu0 %v3816, 24
        %v3880 = vpop.permute.xlu0 %3879
        %vm3913 = vcmask 216256
        %3914 = vst.msk [vmem:[#allocation3] sm:$0xf] %vm3913, %v3818
        %3915 = vst.msk [vmem:[#allocation3 + $0x4] sm:$0xf] %vm3913, %v3820
        %3916 = vst.msk [vmem:[#allocation3 + $0x8] sm:$0xf] %vm3913, %v3822
        %3917 = vst.msk [vmem:[#allocation3 + $0xc] sm:$0xf] %vm3913, %v3824
        %3918 = vst.msk [vmem:[#allocation3 + $0x10] sm:$0xf] %vm3913, %v3826
        %3919 = vst.msk [vmem:[#allocation3 + $0x14] sm:$0xf] %vm3913, %v3828
        %3920 = vst.msk [vmem:[#allocation3 + $0x18] sm:$0xf] %vm3913, %v3830
        %3921 = vst.msk [vmem:[#allocation3 + $0x1c] sm:$0xf] %vm3913, %v3832
        %3922 = vst.msk [vmem:[#allocation3 + $0x20] sm:$0xf] %vm3913, %v3834
        %3923 = vst.msk [vmem:[#allocation3 + $0x24] sm:$0xf] %vm3913, %v3836
        %3924 = vst.msk [vmem:[#allocation3 + $0x28] sm:$0xf] %vm3913, %v3838
        %3925 = vst.msk [vmem:[#allocation3 + $0x2c] sm:$0xf] %vm3913, %v3840
        %3926 = vst.msk [vmem:[#allocation3 + $0x30] sm:$0xf] %vm3913, %v3842
        %3927 = vst.msk [vmem:[#allocation3 + $0x34] sm:$0xf] %vm3913, %v3844
        %3928 = vst.msk [vmem:[#allocation3 + $0x38] sm:$0xf] %vm3913, %v3846
        %3929 = vst.msk [vmem:[#allocation3 + $0x3c] sm:$0xf] %vm3913, %v3848
        %3930 = vst.msk [vmem:[#allocation3 + $0x40] sm:$0xf] %vm3913, %v3850
        %3931 = vst.msk [vmem:[#allocation3 + $0x44] sm:$0xf] %vm3913, %v3852
        %3932 = vst.msk [vmem:[#allocation3 + $0x48] sm:$0xf] %vm3913, %v3854
        %3933 = vst.msk [vmem:[#allocation3 + $0x4c] sm:$0xf] %vm3913, %v3856
        %3934 = vst.msk [vmem:[#allocation3 + $0x50] sm:$0xf] %vm3913, %v3858
        %3935 = vst.msk [vmem:[#allocation3 + $0x54] sm:$0xf] %vm3913, %v3860
        %3936 = vst.msk [vmem:[#allocation3 + $0x58] sm:$0xf] %vm3913, %v3862
        %3937 = vst.msk [vmem:[#allocation3 + $0x5c] sm:$0xf] %vm3913, %v3864
        %3938 = vst.msk [vmem:[#allocation3 + $0x60] sm:$0xf] %vm3913, %v3866
        %3939 = vst.msk [vmem:[#allocation3 + $0x64] sm:$0xf] %vm3913, %v3868
        %3940 = vst.msk [vmem:[#allocation3 + $0x68] sm:$0xf] %vm3913, %v3870
        %3941 = vst.msk [vmem:[#allocation3 + $0x6c] sm:$0xf] %vm3913, %v3872
        %3942 = vst.msk [vmem:[#allocation3 + $0x70] sm:$0xf] %vm3913, %v3874
        %3943 = vst.msk [vmem:[#allocation3 + $0x74] sm:$0xf] %vm3913, %v3876
        %3944 = vst.msk [vmem:[#allocation3 + $0x78] sm:$0xf] %vm3913, %v3878
        %3945 = vst.msk [vmem:[#allocation3 + $0x7c] sm:$0xf] %vm3913, %v3880
        %v3946 = vld [vmem:[#allocation3] sm:$0xf]
        %v3947 = vld [vmem:[#allocation3 + $0x4] sm:$0xf]
        %v3948 = vld [vmem:[#allocation3 + $0x8] sm:$0xf]
        %v3949 = vld [vmem:[#allocation3 + $0xc] sm:$0xf]
        %v3950 = vld [vmem:[#allocation3 + $0x10] sm:$0xf]
        %v3951 = vld [vmem:[#allocation3 + $0x14] sm:$0xf]
        %v3952 = vld [vmem:[#allocation3 + $0x18] sm:$0xf]
        %v3953 = vld [vmem:[#allocation3 + $0x1c] sm:$0xf]
        %v3954 = vld [vmem:[#allocation3 + $0x20] sm:$0xf]
        %v3955 = vld [vmem:[#allocation3 + $0x24] sm:$0xf]
        %v3956 = vld [vmem:[#allocation3 + $0x28] sm:$0xf]
        %v3957 = vld [vmem:[#allocation3 + $0x2c] sm:$0xf]
        %v3958 = vld [vmem:[#allocation3 + $0x30] sm:$0xf]
        %v3959 = vld [vmem:[#allocation3 + $0x34] sm:$0xf]
        %v3960 = vld [vmem:[#allocation3 + $0x38] sm:$0xf]
        %v3961 = vld [vmem:[#allocation3 + $0x3c] sm:$0xf]
        %v3962 = vld [vmem:[#allocation3 + $0x40] sm:$0xf]
        %v3963 = vld [vmem:[#allocation3 + $0x44] sm:$0xf]
        %v3964 = vld [vmem:[#allocation3 + $0x48] sm:$0xf]
        %v3965 = vld [vmem:[#allocation3 + $0x4c] sm:$0xf]
        %v3966 = vld [vmem:[#allocation3 + $0x50] sm:$0xf]
        %v3967 = vld [vmem:[#allocation3 + $0x54] sm:$0xf]
        %v3968 = vld [vmem:[#allocation3 + $0x58] sm:$0xf]
        %v3969 = vld [vmem:[#allocation3 + $0x5c] sm:$0xf]
        %v3970 = vld [vmem:[#allocation3 + $0x60] sm:$0xf]
        %v3971 = vld [vmem:[#allocation3 + $0x64] sm:$0xf]
        %v3972 = vld [vmem:[#allocation3 + $0x68] sm:$0xf]
        %v3973 = vld [vmem:[#allocation3 + $0x6c] sm:$0xf]
        %v3974 = vld [vmem:[#allocation3 + $0x70] sm:$0xf]
        %v3975 = vld [vmem:[#allocation3 + $0x74] sm:$0xf]
        %v3976 = vld [vmem:[#allocation3 + $0x78] sm:$0xf]
        %v3977 = vld [vmem:[#allocation3 + $0x7c] sm:$0xf]
        %v3978 = vld [vmem:[%s1] sm:$0xf]
        %v3979 = vld [vmem:[%s1 + $0x4] sm:$0xf]
        %v3980 = vld [vmem:[%s1 + $0x8] sm:$0xf]
        %v3981 = vld [vmem:[%s1 + $0xc] sm:$0x3]
        %v3982 = vld [vmem:[%s2] sm:$0x1]
        %v3984 = vlaneseq
        %v3985 = vshrl.u32 %v3984, 7
        %v3986 = vsub.s32 0, %v3985
        %v3987 = vrot.slane %v3982, %v3986
        %v4021 = vunpack.c.l.b16 %v3946
        %v4022 = vunpack.c.l.b16 %v3947
        %v4023 = vunpack.c.l.b16 %v3948
        %v4024 = vunpack.c.l.b16 %v3949
        %v4025 = vunpack.c.l.b16 %v3950
        %v4026 = vunpack.c.l.b16 %v3951
        %v4027 = vunpack.c.l.b16 %v3952
        %v4028 = vunpack.c.l.b16 %v3953
        %v4029 = vunpack.c.l.b16 %v3954
        %v4030 = vunpack.c.l.b16 %v3955
        %v4031 = vunpack.c.l.b16 %v3956
        %v4032 = vunpack.c.l.b16 %v3957
        %v4033 = vunpack.c.l.b16 %v3958
        %v4034 = vunpack.c.l.b16 %v3959
        %v4035 = vunpack.c.l.b16 %v3960
        %v4036 = vunpack.c.l.b16 %v3961
        %v4037 = vunpack.c.l.b16 %v3962
        %v4038 = vunpack.c.l.b16 %v3963
        %v4039 = vunpack.c.l.b16 %v3964
        %v4040 = vunpack.c.l.b16 %v3965
        %v4041 = vunpack.c.l.b16 %v3966
        %v4042 = vunpack.c.l.b16 %v3967
        %v4043 = vunpack.c.l.b16 %v3968
        %v4044 = vunpack.c.l.b16 %v3969
        %v4045 = vunpack.c.l.b16 %v3970
        %v4046 = vunpack.c.l.b16 %v3971
        %v4047 = vunpack.c.l.b16 %v3972
        %v4048 = vunpack.c.l.b16 %v3973
        %v4049 = vunpack.c.l.b16 %v3974
        %v4050 = vunpack.c.l.b16 %v3975
        %v4051 = vunpack.c.l.b16 %v3976
        %v4052 = vunpack.c.l.b16 %v3977
        %v4053 = vpack.c.b16 %v4022, %v4021
        %v4054 = vpack.c.b16 %v4024, %v4023
        %v4055 = vpack.c.b16 %v4026, %v4025
        %v4056 = vpack.c.b16 %v4028, %v4027
        %v4057 = vpack.c.b16 %v4030, %v4029
        %v4058 = vpack.c.b16 %v4032, %v4031
        %v4059 = vpack.c.b16 %v4034, %v4033
        %v4060 = vpack.c.b16 %v4036, %v4035
        %v4061 = vpack.c.b16 %v4038, %v4037
        %v4062 = vpack.c.b16 %v4040, %v4039
        %v4063 = vpack.c.b16 %v4042, %v4041
        %v4064 = vpack.c.b16 %v4044, %v4043
        %v4065 = vpack.c.b16 %v4046, %v4045
        %v4066 = vpack.c.b16 %v4048, %v4047
        %v4067 = vpack.c.b16 %v4050, %v4049
        %v4068 = vpack.c.b16 %v4052, %v4051
        %v4073 = vunpack.c.l.b16 %v3978
        %v4074 = vunpack.c.l.b16 %v3979
        %v4075 = vunpack.c.l.b16 %v3980
        %v4076 = vunpack.c.l.b16 %v3981
        %v4077 = vpack.c.b16 %v4074, %v4073
        %v4078 = vpack.c.b16 %v4076, %v4075
        %vm4080 = vcmask 220160
        %v4082 = vsel %vm4080, %v4053, 0
        %v4085 = vsel %vm4080, %v4054, 0
        %v4088 = vsel %vm4080, %v4055, 0
        %v4091 = vsel %vm4080, %v4056, 0
        %v4094 = vsel %vm4080, %v4057, 0
        %v4097 = vsel %vm4080, %v4058, 0
        %v4100 = vsel %vm4080, %v4059, 0
        %v4103 = vsel %vm4080, %v4060, 0
        %v4106 = vsel %vm4080, %v4061, 0
        %v4109 = vsel %vm4080, %v4062, 0
        %v4112 = vsel %vm4080, %v4063, 0
        %v4115 = vsel %vm4080, %v4064, 0
        %v4118 = vsel %vm4080, %v4065, 0
        %v4121 = vsel %vm4080, %v4066, 0
        %v4124 = vsel %vm4080, %v4067, 0
        %v4127 = vsel %vm4080, %v4068, 0
        %vm4129 = vcmask 1044480
        %vm4130 = vcmask 1045504
        %v4131 = vsel %vm4129, 4294967295, 65535
        %v4132 = vsel %vm4130, %v4131, 0
        %v4134 = vand.u32 %v4078, %v4132
        %4136 = vmatprep.subr.bf16.mxu0 0
        %4137 = vmatpush1.bf16.msra.mxu0 0
        %4138 = vmatprep.subr.bf16.mxu0 0
        %4139 = vmatpush1.bf16.msra.mxu0 0
        %4140 = vmatprep.subr.bf16.mxu0 0
        %4141 = vmatpush1.bf16.msra.mxu0 0
        %4142 = vmatprep.subr.bf16.mxu0 0
        %4143 = vmatpush1.bf16.msra.mxu0 0
        %4144 = vmatprep.subr.bf16.mxu0 0
        %4145 = vmatpush1.bf16.msra.mxu0 0
        %4146 = vmatprep.subr.bf16.mxu0 0
        %4147 = vmatpush1.bf16.msra.mxu0 0
        %4148 = vmatprep.subr.bf16.mxu0 0
        %4149 = vmatpush1.bf16.msra.mxu0 %v4134
        %4150 = vmatprep.subr.bf16.mxu0 0
        %4151 = vmatpush1.bf16.msra.mxu0 %v4077
        %4152 = vmatprep.subr.bf16.mxu0 0
        %4153 = vmatpush2.bf16.msra.mxu0 0
        %4154 = vmatprep.subr.bf16.mxu0 0
        %4155 = vmatpush2.bf16.msra.mxu0 0
        %4156 = vmatprep.subr.bf16.mxu0 0
        %4157 = vmatpush2.bf16.msra.mxu0 0
        %4158 = vmatprep.subr.bf16.mxu0 0
        %4159 = vmatpush2.bf16.msra.mxu0 0
        %4160 = vmatprep.subr.bf16.mxu0 0
        %4161 = vmatpush2.bf16.msra.mxu0 0
        %4162 = vmatprep.subr.bf16.mxu0 0
        %4163 = vmatpush2.bf16.msra.mxu0 0
        %4164 = vmatprep.subr.bf16.mxu0 0
        %4165 = vmatpush2.bf16.msra.mxu0 0
        %4166 = vmatprep.subr.bf16.mxu0 0
        %4167 = vmatpush2.bf16.msra.mxu0 0
        %4168 = vmatprep.mubr.bf16.mxu0 0
        %4169 = vmatmul.mubr.bf16.gmra.mxu0 %v4082
        %v4170 = vpop.f32.mrf.mxu0
        %v4171 = vadd.f32 %v3987, %v4170
        %v4172 = vpop.f32.mrf.mxu0
        %v4173 = vpop.f32.mrf.mxu0
        %v4174 = vadd.f32 %v3987, %v4173
        %v4175 = vpop.f32.mrf.mxu0
        %4176 = vmatprep.mubr.bf16.mxu0 0
        %4177 = vmatmul.mubr.bf16.gmra.mxu0 %v4085
        %v4178 = vpop.f32.mrf.mxu0
        %v4179 = vadd.f32 %v3987, %v4178
        %v4180 = vpop.f32.mrf.mxu0
        %v4181 = vpop.f32.mrf.mxu0
        %v4182 = vadd.f32 %v3987, %v4181
        %v4183 = vpop.f32.mrf.mxu0
        %4184 = vmatprep.mubr.bf16.mxu0 0
        %4185 = vmatmul.mubr.bf16.gmra.mxu0 %v4088
        %v4186 = vpop.f32.mrf.mxu0
        %v4187 = vadd.f32 %v3987, %v4186
        %v4188 = vpop.f32.mrf.mxu0
        %v4189 = vpop.f32.mrf.mxu0
        %v4190 = vadd.f32 %v3987, %v4189
        %v4191 = vpop.f32.mrf.mxu0
        %4192 = vmatprep.mubr.bf16.mxu0 0
        %4193 = vmatmul.mubr.bf16.gmra.mxu0 %v4091
        %v4194 = vpop.f32.mrf.mxu0
        %v4195 = vadd.f32 %v3987, %v4194
        %v4196 = vpop.f32.mrf.mxu0
        %v4197 = vpop.f32.mrf.mxu0
        %v4198 = vadd.f32 %v3987, %v4197
        %v4199 = vpop.f32.mrf.mxu0
        %4200 = vmatprep.mubr.bf16.mxu0 0
        %4201 = vmatmul.mubr.bf16.gmra.mxu0 %v4094
        %v4202 = vpop.f32.mrf.mxu0
        %v4203 = vadd.f32 %v3987, %v4202
        %v4204 = vpop.f32.mrf.mxu0
        %v4205 = vpop.f32.mrf.mxu0
        %v4206 = vadd.f32 %v3987, %v4205
        %v4207 = vpop.f32.mrf.mxu0
        %4208 = vmatprep.mubr.bf16.mxu0 0
        %4209 = vmatmul.mubr.bf16.gmra.mxu0 %v4097
        %v4210 = vpop.f32.mrf.mxu0
        %v4211 = vadd.f32 %v3987, %v4210
        %v4212 = vpop.f32.mrf.mxu0
        %v4213 = vpop.f32.mrf.mxu0
        %v4214 = vadd.f32 %v3987, %v4213
        %v4215 = vpop.f32.mrf.mxu0
        %4216 = vmatprep.mubr.bf16.mxu0 0
        %4217 = vmatmul.mubr.bf16.gmra.mxu0 %v4100
        %v4218 = vpop.f32.mrf.mxu0
        %v4219 = vadd.f32 %v3987, %v4218
        %v4220 = vpop.f32.mrf.mxu0
        %v4221 = vpop.f32.mrf.mxu0
        %v4222 = vadd.f32 %v3987, %v4221
        %v4223 = vpop.f32.mrf.mxu0
        %4224 = vmatprep.mubr.bf16.mxu0 0
        %4225 = vmatmul.mubr.bf16.gmra.mxu0 %v4103
        %v4226 = vpop.f32.mrf.mxu0
        %v4227 = vadd.f32 %v3987, %v4226
        %v4228 = vpop.f32.mrf.mxu0
        %v4229 = vpop.f32.mrf.mxu0
        %v4230 = vadd.f32 %v3987, %v4229
        %v4231 = vpop.f32.mrf.mxu0
        %4232 = vmatprep.mubr.bf16.mxu0 0
        %4233 = vmatmul.mubr.bf16.gmra.mxu0 %v4106
        %v4234 = vpop.f32.mrf.mxu0
        %v4235 = vadd.f32 %v3987, %v4234
        %v4236 = vpop.f32.mrf.mxu0
        %v4237 = vpop.f32.mrf.mxu0
        %v4238 = vadd.f32 %v3987, %v4237
        %v4239 = vpop.f32.mrf.mxu0
        %4240 = vmatprep.mubr.bf16.mxu0 0
        %4241 = vmatmul.mubr.bf16.gmra.mxu0 %v4109
        %v4242 = vpop.f32.mrf.mxu0
        %v4243 = vadd.f32 %v3987, %v4242
        %v4244 = vpop.f32.mrf.mxu0
        %v4245 = vpop.f32.mrf.mxu0
        %v4246 = vadd.f32 %v3987, %v4245
        %v4247 = vpop.f32.mrf.mxu0
        %4248 = vmatprep.mubr.bf16.mxu0 0
        %4249 = vmatmul.mubr.bf16.gmra.mxu0 %v4112
        %v4250 = vpop.f32.mrf.mxu0
        %v4251 = vadd.f32 %v3987, %v4250
        %v4252 = vpop.f32.mrf.mxu0
        %v4253 = vpop.f32.mrf.mxu0
        %v4254 = vadd.f32 %v3987, %v4253
        %v4255 = vpop.f32.mrf.mxu0
        %4256 = vmatprep.mubr.bf16.mxu0 0
        %4257 = vmatmul.mubr.bf16.gmra.mxu0 %v4115
        %v4258 = vpop.f32.mrf.mxu0
        %v4259 = vadd.f32 %v3987, %v4258
        %v4260 = vpop.f32.mrf.mxu0
        %v4261 = vpop.f32.mrf.mxu0
        %v4262 = vadd.f32 %v3987, %v4261
        %v4263 = vpop.f32.mrf.mxu0
        %4264 = vmatprep.mubr.bf16.mxu0 0
        %4265 = vmatmul.mubr.bf16.gmra.mxu0 %v4118
        %v4266 = vpop.f32.mrf.mxu0
        %v4267 = vadd.f32 %v3987, %v4266
        %v4268 = vpop.f32.mrf.mxu0
        %v4269 = vpop.f32.mrf.mxu0
        %v4270 = vadd.f32 %v3987, %v4269
        %v4271 = vpop.f32.mrf.mxu0
        %4272 = vmatprep.mubr.bf16.mxu0 0
        %4273 = vmatmul.mubr.bf16.gmra.mxu0 %v4121
        %v4274 = vpop.f32.mrf.mxu0
        %v4275 = vadd.f32 %v3987, %v4274
        %v4276 = vpop.f32.mrf.mxu0
        %v4277 = vpop.f32.mrf.mxu0
        %v4278 = vadd.f32 %v3987, %v4277
        %v4279 = vpop.f32.mrf.mxu0
        %4280 = vmatprep.mubr.bf16.mxu0 0
        %4281 = vmatmul.mubr.bf16.gmra.mxu0 %v4124
        %v4282 = vpop.f32.mrf.mxu0
        %v4283 = vadd.f32 %v3987, %v4282
        %v4284 = vpop.f32.mrf.mxu0
        %v4285 = vpop.f32.mrf.mxu0
        %v4286 = vadd.f32 %v3987, %v4285
        %v4287 = vpop.f32.mrf.mxu0
        %4288 = vmatprep.mubr.bf16.mxu0 0
        %4289 = vmatmul.mubr.bf16.gmra.mxu0 %v4127
        %v4290 = vpop.f32.mrf.mxu0
        %v4291 = vadd.f32 %v3987, %v4290
        %v4292 = vpop.f32.mrf.mxu0
        %v4293 = vpop.f32.mrf.mxu0
        %v4294 = vadd.f32 %v3987, %v4293
        %v4295 = vpop.f32.mrf.mxu0
        %4296 = vdwg.mxu0
        %v4297 = vmax.f32 %v4171, 0.0
        %v4298 = vmax.f32 %v4174, 0.0
        %v4299 = vmax.f32 %v4179, 0.0
        %v4300 = vmax.f32 %v4182, 0.0
        %v4301 = vmax.f32 %v4187, 0.0
        %v4302 = vmax.f32 %v4190, 0.0
        %v4303 = vmax.f32 %v4195, 0.0
        %v4304 = vmax.f32 %v4198, 0.0
        %v4305 = vmax.f32 %v4203, 0.0
        %v4306 = vmax.f32 %v4206, 0.0
        %v4307 = vmax.f32 %v4211, 0.0
        %v4308 = vmax.f32 %v4214, 0.0
        %v4309 = vmax.f32 %v4219, 0.0
        %v4310 = vmax.f32 %v4222, 0.0
        %v4311 = vmax.f32 %v4227, 0.0
        %v4312 = vmax.f32 %v4230, 0.0
        %v4313 = vmax.f32 %v4235, 0.0
        %v4314 = vmax.f32 %v4238, 0.0
        %v4315 = vmax.f32 %v4243, 0.0
        %v4316 = vmax.f32 %v4246, 0.0
        %v4317 = vmax.f32 %v4251, 0.0
        %v4318 = vmax.f32 %v4254, 0.0
        %v4319 = vmax.f32 %v4259, 0.0
        %v4320 = vmax.f32 %v4262, 0.0
        %v4321 = vmax.f32 %v4267, 0.0
        %v4322 = vmax.f32 %v4270, 0.0
        %v4323 = vmax.f32 %v4275, 0.0
        %v4324 = vmax.f32 %v4278, 0.0
        %v4325 = vmax.f32 %v4283, 0.0
        %v4326 = vmax.f32 %v4286, 0.0
        %v4327 = vmax.f32 %v4291, 0.0
        %v4328 = vmax.f32 %v4294, 0.0
        %v4329 = vpack.c.bf16 %v4298, %v4297
        %v4330 = vpack.c.bf16 %v4300, %v4299
        %v4331 = vpack.c.bf16 %v4302, %v4301
        %v4332 = vpack.c.bf16 %v4304, %v4303
        %v4333 = vpack.c.bf16 %v4306, %v4305
        %v4334 = vpack.c.bf16 %v4308, %v4307
        %v4335 = vpack.c.bf16 %v4310, %v4309
        %v4336 = vpack.c.bf16 %v4312, %v4311
        %v4337 = vpack.c.bf16 %v4314, %v4313
        %v4338 = vpack.c.bf16 %v4316, %v4315
        %v4339 = vpack.c.bf16 %v4318, %v4317
        %v4340 = vpack.c.bf16 %v4320, %v4319
        %v4341 = vpack.c.bf16 %v4322, %v4321
        %v4342 = vpack.c.bf16 %v4324, %v4323
        %v4343 = vpack.c.bf16 %v4326, %v4325
        %v4344 = vpack.c.bf16 %v4328, %v4327
        %v4361 = vunpack.c.l.b16 %v4329
        %v4362 = vunpack.c.h.b16 %v4329
        %v4363 = vunpack.c.l.b16 %v4330
        %v4364 = vunpack.c.h.b16 %v4330
        %v4365 = vunpack.c.l.b16 %v4331
        %v4366 = vunpack.c.h.b16 %v4331
        %v4367 = vunpack.c.l.b16 %v4332
        %v4368 = vunpack.c.h.b16 %v4332
        %v4369 = vunpack.c.l.b16 %v4333
        %v4370 = vunpack.c.h.b16 %v4333
        %v4371 = vunpack.c.l.b16 %v4334
        %v4372 = vunpack.c.h.b16 %v4334
        %v4373 = vunpack.c.l.b16 %v4335
        %v4374 = vunpack.c.h.b16 %v4335
        %v4375 = vunpack.c.l.b16 %v4336
        %v4376 = vunpack.c.h.b16 %v4336
        %v4377 = vunpack.c.l.b16 %v4337
        %v4378 = vunpack.c.h.b16 %v4337
        %v4379 = vunpack.c.l.b16 %v4338
        %v4380 = vunpack.c.h.b16 %v4338
        %v4381 = vunpack.c.l.b16 %v4339
        %v4382 = vunpack.c.h.b16 %v4339
        %v4383 = vunpack.c.l.b16 %v4340
        %v4384 = vunpack.c.h.b16 %v4340
        %v4385 = vunpack.c.l.b16 %v4341
        %v4386 = vunpack.c.h.b16 %v4341
        %v4387 = vunpack.c.l.b16 %v4342
        %v4388 = vunpack.c.h.b16 %v4342
        %v4389 = vunpack.c.l.b16 %v4343
        %v4390 = vunpack.c.h.b16 %v4343
        %v4391 = vunpack.c.l.b16 %v4344
        %v4392 = vunpack.c.h.b16 %v4344
        %v4393 = vpack.c.b16 %v4361, %v4361
        %v4394 = vpack.c.b16 %v4362, %v4362
        %v4395 = vpack.c.b16 %v4363, %v4363
        %v4396 = vpack.c.b16 %v4364, %v4364
        %v4397 = vpack.c.b16 %v4365, %v4365
        %v4398 = vpack.c.b16 %v4366, %v4366
        %v4399 = vpack.c.b16 %v4367, %v4367
        %v4400 = vpack.c.b16 %v4368, %v4368
        %v4401 = vpack.c.b16 %v4369, %v4369
        %v4402 = vpack.c.b16 %v4370, %v4370
        %v4403 = vpack.c.b16 %v4371, %v4371
        %v4404 = vpack.c.b16 %v4372, %v4372
        %v4405 = vpack.c.b16 %v4373, %v4373
        %v4406 = vpack.c.b16 %v4374, %v4374
        %v4407 = vpack.c.b16 %v4375, %v4375
        %v4408 = vpack.c.b16 %v4376, %v4376
        %v4409 = vpack.c.b16 %v4377, %v4377
        %v4410 = vpack.c.b16 %v4378, %v4378
        %v4411 = vpack.c.b16 %v4379, %v4379
        %v4412 = vpack.c.b16 %v4380, %v4380
        %v4413 = vpack.c.b16 %v4381, %v4381
        %v4414 = vpack.c.b16 %v4382, %v4382
        %v4415 = vpack.c.b16 %v4383, %v4383
        %v4416 = vpack.c.b16 %v4384, %v4384
        %v4417 = vpack.c.b16 %v4385, %v4385
        %v4418 = vpack.c.b16 %v4386, %v4386
        %v4419 = vpack.c.b16 %v4387, %v4387
        %v4420 = vpack.c.b16 %v4388, %v4388
        %v4421 = vpack.c.b16 %v4389, %v4389
        %v4422 = vpack.c.b16 %v4390, %v4390
        %v4423 = vpack.c.b16 %v4391, %v4391
        %v4424 = vpack.c.b16 %v4392, %v4392
        %4457 = vst [vmem:[%s163] sm:$0xf] %v4393
        %4458 = vst [vmem:[%s163 + $0x4] sm:$0xf] %v4394
        %4459 = vst [vmem:[%s163 + $0x8] sm:$0xf] %v4395
        %4460 = vst [vmem:[%s163 + $0xc] sm:$0xf] %v4396
        %4461 = vst [vmem:[%s163 + $0x10] sm:$0xf] %v4397
        %4462 = vst [vmem:[%s163 + $0x14] sm:$0xf] %v4398
        %4463 = vst [vmem:[%s163 + $0x18] sm:$0xf] %v4399
        %4464 = vst [vmem:[%s163 + $0x1c] sm:$0xf] %v4400
        %4465 = vst [vmem:[%s163 + $0x20] sm:$0xf] %v4401
        %4466 = vst [vmem:[%s163 + $0x24] sm:$0xf] %v4402
        %4467 = vst [vmem:[%s163 + $0x28] sm:$0xf] %v4403
        %4468 = vst [vmem:[%s163 + $0x2c] sm:$0xf] %v4404
        %4469 = vst [vmem:[%s163 + $0x30] sm:$0xf] %v4405
        %4470 = vst [vmem:[%s163 + $0x34] sm:$0xf] %v4406
        %4471 = vst [vmem:[%s163 + $0x38] sm:$0xf] %v4407
        %4472 = vst [vmem:[%s163 + $0x3c] sm:$0xf] %v4408
        %4473 = vst [vmem:[%s163 + $0x40] sm:$0xf] %v4409
        %4474 = vst [vmem:[%s163 + $0x44] sm:$0xf] %v4410
        %4475 = vst [vmem:[%s163 + $0x48] sm:$0xf] %v4411
        %4476 = vst [vmem:[%s163 + $0x4c] sm:$0xf] %v4412
        %4477 = vst [vmem:[%s163 + $0x50] sm:$0xf] %v4413
        %4478 = vst [vmem:[%s163 + $0x54] sm:$0xf] %v4414
        %4479 = vst [vmem:[%s163 + $0x58] sm:$0xf] %v4415
        %4480 = vst [vmem:[%s163 + $0x5c] sm:$0xf] %v4416
        %4481 = vst [vmem:[%s163 + $0x60] sm:$0xf] %v4417
        %4482 = vst [vmem:[%s163 + $0x64] sm:$0xf] %v4418
        %4483 = vst [vmem:[%s163 + $0x68] sm:$0xf] %v4419
        %4484 = vst [vmem:[%s163 + $0x6c] sm:$0xf] %v4420
        %4485 = vst [vmem:[%s163 + $0x70] sm:$0xf] %v4421
        %4486 = vst [vmem:[%s163 + $0x74] sm:$0xf] %v4422
        %4487 = vst [vmem:[%s163 + $0x78] sm:$0xf] %v4423
        %4488 = vst [vmem:[%s163 + $0x7c] sm:$0xf] %v4424
        %s4489 = sand.u32 %s93, 1
        %s4490 = scalar_lea.sflag [#allocation5], %s4489
        %s4491 = sand.u32 %s93, 1
        %s4492 = smul.addr %s4491, 128
        %s4493 = scalar_lea.vmem [#allocation4], %s4492
        // Predicated region
        $region33: #{tpu_custom_call.1} parent=31 // pred_check
          %p4494 = pneg %p103
        $region34: #{tpu_custom_call.1} parent=31 // pred_check_branch
          %4496 = sbr.rel (%p4494) target = $region36
        $region35: #{tpu_custom_call.1} parent=31 // pred_region
          %s4498 = ssub.s32 2048, 2048
          %4499 = vsyncadd %s4490, %s4498
          %s4500 = smul.addr %s17, 32
          %s4501 = smul.addr %s4500, 64
          %s4502 = scalar_lea.hbm %s3, %s4501
          %s4503 = sshll.u32 %s4493, 4
          %s4504 = int_to_ptr.vmem [resolvable:$true] %s4503
          %4509 = dma.vmem_to_hbm [thread:$0]  %s4504, 2048, %s4502, %s4490, 64, 64, 4
        $region36: #{tpu_custom_call.1} parent=31 // pred_fallthru
          _
      $region32: #{tpu_custom_call.1} parent=5 // pred_fallthru
        _
      %p4510 = scmp.le.s32.totalorder 2, %s12
      // Predicated region
      $region37: #{tpu_custom_call.1} parent=5 // pred_check
        %p4511 = pneg %p4510
      $region38: #{tpu_custom_call.1} parent=5 // pred_check_branch
        %4513 = sbr.rel (%p4511) target = $region40
      $region39: #{tpu_custom_call.1} parent=5 // pred_region
        %s4514 = ssub.s32 %s12, 2
        // Predicated region
        $region41: #{tpu_custom_call.1} parent=39 // pred_check
          %p4515 = pneg %p109
        $region42: #{tpu_custom_call.1} parent=39 // pred_check_branch
          %4517 = sbr.rel (%p4515) target = $region44
        $region43: #{tpu_custom_call.1} parent=39 // pred_region
          %s4518 = sand.u32 %s94, 1
          %s4519 = scalar_lea.sflag [#allocation5], %s4518
          %s4520 = sand.u32 %s94, 1
          %s4521 = smul.addr %s4520, 128
          %s4522 = scalar_lea.vmem [#allocation4], %s4521
          %4523 = dma.done %s4519, 2048
        $region44: #{tpu_custom_call.1} parent=39 // pred_fallthru
          _
      $region40: #{tpu_custom_call.1} parent=5 // pred_fallthru
        _
    $region6: #{tpu_custom_call.1} parent=1 // loop_footer
      %s16 = sadd.s32 1, %s12
    $region7: #{tpu_custom_call.1} parent=1 // loop_footer_branch
      %11 = sbr.rel target = $region3
    $region8: #{tpu_custom_call.1} parent=1 // loop_exit
      _
    %4524 = vsyncpa [#allocation5], 1
    %s4525 = scalar_lea.sflag [#allocation5], 1
    %4526 = vsyncpa %s4525, 1

</llo_original>
